<compile_context>
chip_gen: v6e
topology: v6e:2x2x1
jax: 0.10.0
libtpu: 0.0.40
codegen_flags: <defaults>
</compile_context>

<pallas_src>
import functools
import math

import jax
import jax.numpy as jnp
from jax.experimental import pallas as pl
from jax.experimental.pallas import tpu as pltpu


# ----------------------------------------------------------------------------
# Tiling helper
# ----------------------------------------------------------------------------
def _tile(dim, target, gran):
    """Largest tile <= target that is a multiple of `gran` and divides `dim`
    exactly; falls back to the full dim (always a legal block size)."""
    if dim <= target:
        return dim
    t = (target // gran) * gran
    while t >= gran:
        if dim % t == 0:
            return t
        t -= gran
    return dim


# ----------------------------------------------------------------------------
# Tiled linear (+ bias, optional ReLU):  y = act(x @ w + b)
#   x: bf16 (M, K), w: bf16 (K, N), b: f32 (N,)  ->  out_dtype (M, N), f32 MXU acc.
# ----------------------------------------------------------------------------
def _linear_kernel(x_ref, w_ref, b_ref, o_ref, acc_ref, *, activation):
    k = pl.program_id(2)

    @pl.when(k == 0)
    def _():
        acc_ref[...] = jnp.zeros_like(acc_ref)

    acc_ref[...] += jnp.dot(x_ref[...], w_ref[...],
                            preferred_element_type=jnp.float32)

    @pl.when(k == pl.num_programs(2) - 1)
    def _():
        y = acc_ref[...] + b_ref[...]
        if activation == "relu":
            y = jnp.maximum(y, 0.0)
        o_ref[...] = y.astype(o_ref.dtype)


def linear(x, w, b, activation=None, *, out_dtype=jnp.bfloat16,
           tm=256, tn=512, tk=512):
    M, K = x.shape
    N = w.shape[1]
    tm = _tile(M, tm, 8)
    tn = _tile(N, tn, 128)
    tk = _tile(K, tk, 128)
    grid = (M // tm, N // tn, K // tk)
    return pl.pallas_call(
        functools.partial(_linear_kernel, activation=activation),
        grid=grid,
        in_specs=[
            pl.BlockSpec((tm, tk), lambda i, j, k: (i, k)),
            pl.BlockSpec((tk, tn), lambda i, j, k: (k, j)),
            pl.BlockSpec((1, tn), lambda i, j, k: (0, j)),
        ],
        out_specs=pl.BlockSpec((tm, tn), lambda i, j, k: (i, j)),
        out_shape=jax.ShapeDtypeStruct((M, N), out_dtype),
        scratch_shapes=[pltpu.VMEM((tm, tn), jnp.float32)],
        compiler_params=pltpu.CompilerParams(
            dimension_semantics=("parallel", "parallel", "arbitrary")),
    )(x, w, b.reshape(1, N))


# ----------------------------------------------------------------------------
# Fused matmul + residual-add + LayerNorm:  y = LN(residual + x @ w + b)
# (N = E stays whole inside the kernel so LN statistics see the full row.)
# ----------------------------------------------------------------------------
def _linear_res_ln_kernel(x_ref, w_ref, b_ref, r_ref, g_ref, bt_ref, o_ref, acc_ref):
    k = pl.program_id(1)

    @pl.when(k == 0)
    def _():
        acc_ref[...] = jnp.zeros_like(acc_ref)

    acc_ref[...] += jnp.dot(x_ref[...], w_ref[...],
                            preferred_element_type=jnp.float32)

    @pl.when(k == pl.num_programs(1) - 1)
    def _():
        y = acc_ref[...] + b_ref[...] + r_ref[...].astype(jnp.float32)
        mu = jnp.mean(y, axis=-1, keepdims=True)
        var = jnp.mean(jnp.square(y - mu), axis=-1, keepdims=True)
        o_ref[...] = ((y - mu) * jax.lax.rsqrt(var + 1e-5) * g_ref[...]
                      + bt_ref[...]).astype(o_ref.dtype)


def linear_residual_layernorm(x, w, b, residual, gamma, beta, *, tm=256, tk=512):
    M, K = x.shape
    N = w.shape[1]
    tm = _tile(M, tm, 8)
    tk = _tile(K, tk, 128)
    grid = (M // tm, K // tk)
    return pl.pallas_call(
        _linear_res_ln_kernel,
        grid=grid,
        in_specs=[
            pl.BlockSpec((tm, tk), lambda i, k: (i, k)),
            pl.BlockSpec((tk, N), lambda i, k: (k, 0)),
            pl.BlockSpec((1, N), lambda i, k: (0, 0)),
            pl.BlockSpec((tm, N), lambda i, k: (i, 0)),
            pl.BlockSpec((1, N), lambda i, k: (0, 0)),
            pl.BlockSpec((1, N), lambda i, k: (0, 0)),
        ],
        out_specs=pl.BlockSpec((tm, N), lambda i, k: (i, 0)),
        out_shape=jax.ShapeDtypeStruct((M, N), jnp.bfloat16),
        scratch_shapes=[pltpu.VMEM((tm, N), jnp.float32)],
        compiler_params=pltpu.CompilerParams(
            dimension_semantics=("parallel", "arbitrary")),
    )(x, w, b.reshape(1, N), residual, gamma.reshape(1, N), beta.reshape(1, N))


# ----------------------------------------------------------------------------
# Fused feed-forward block:  y = LN(x + relu(x @ w1 + b1) @ w2 + b2)
# F (hidden dim) is tiled on an "arbitrary" grid axis; the (tm, F) intermediate
# never exists at once and never leaves VMEM.
# ----------------------------------------------------------------------------
def _ffn_ln_kernel(x_ref, w1_ref, b1_ref, w2_ref, b2_ref, g_ref, bt_ref, o_ref, acc_ref):
    f = pl.program_id(1)

    @pl.when(f == 0)
    def _():
        acc_ref[...] = jnp.zeros_like(acc_ref)

    h = jnp.dot(x_ref[...], w1_ref[...],
                preferred_element_type=jnp.float32) + b1_ref[...]
    h = jnp.maximum(h, 0.0)
    acc_ref[...] += jnp.dot(h.astype(jnp.bfloat16), w2_ref[...],
                            preferred_element_type=jnp.float32)

    @pl.when(f == pl.num_programs(1) - 1)
    def _():
        y = acc_ref[...] + b2_ref[...] + x_ref[...].astype(jnp.float32)
        mu = jnp.mean(y, axis=-1, keepdims=True)
        var = jnp.mean(jnp.square(y - mu), axis=-1, keepdims=True)
        o_ref[...] = ((y - mu) * jax.lax.rsqrt(var + 1e-5) * g_ref[...]
                      + bt_ref[...]).astype(o_ref.dtype)


def ffn_layernorm(x, w1, b1, w2, b2, gamma, beta, *, tm=512, tf=512):
    M, E = x.shape
    F = w1.shape[1]
    tm = _tile(M, tm, 8)
    tf = _tile(F, tf, 128)
    grid = (M // tm, F // tf)
    return pl.pallas_call(
        _ffn_ln_kernel,
        grid=grid,
        in_specs=[
            pl.BlockSpec((tm, E), lambda i, f: (i, 0)),
            pl.BlockSpec((E, tf), lambda i, f: (0, f)),
            pl.BlockSpec((1, tf), lambda i, f: (0, f)),
            pl.BlockSpec((tf, E), lambda i, f: (f, 0)),
            pl.BlockSpec((1, E), lambda i, f: (0, 0)),
            pl.BlockSpec((1, E), lambda i, f: (0, 0)),
            pl.BlockSpec((1, E), lambda i, f: (0, 0)),
        ],
        out_specs=pl.BlockSpec((tm, E), lambda i, f: (i, 0)),
        out_shape=jax.ShapeDtypeStruct((M, E), jnp.bfloat16),
        scratch_shapes=[pltpu.VMEM((tm, E), jnp.float32)],
        compiler_params=pltpu.CompilerParams(
            dimension_semantics=("parallel", "arbitrary")),
    )(x, w1, b1.reshape(1, F), w2, b2.reshape(1, E),
      gamma.reshape(1, E), beta.reshape(1, E))


# ----------------------------------------------------------------------------
# Multi-head attention kernel.
#   Grid = (B, Tq // tq); full KV resident per batch step (its block index is
#   invariant across the Tq axis).  q/k/v are sliced from the refs inside the
#   kernel via static column offsets, so the fused QKV tensor can be passed in
#   directly.  Per-head context is stored into its lane window of the output.
# ----------------------------------------------------------------------------
def _mha_kernel(kpad_ref, *rest, num_heads, scale, q_off, k_off, v_off, has_peek):
    if has_peek:
        peek_ref, q_ref, kv_ref, o_ref = rest
    else:
        peek_ref = None
        q_ref, kv_ref, o_ref = rest

    E = o_ref.shape[-1]
    d = E // num_heads

    mask = kpad_ref[0]                     # (1, Tk) additive f32
    if has_peek:
        mask = mask + peek_ref[...]        # (tq, Tk)

    for h in range(num_heads):
        qs = q_off + h * d
        ks = k_off + h * d
        vs = v_off + h * d
        qh = q_ref[0, :, qs:qs + d] * scale          # (tq, d) bf16, scale folded in
        kh = kv_ref[0, :, ks:ks + d]                 # (Tk, d) bf16
        vh = kv_ref[0, :, vs:vs + d]                 # (Tk, d) bf16
        # QK^T without materializing a transpose: contract the last dims.
        s = jax.lax.dot_general(qh, kh, (((1,), (1,)), ((), ())),
                                preferred_element_type=jnp.float32)
        s = s + mask
        s = s - jnp.max(s, axis=-1, keepdims=True)
        e = jnp.exp(s)
        p = e * pl.reciprocal(jnp.sum(e, axis=-1, keepdims=True), approx=True)
        ctx = jnp.dot(p.astype(jnp.bfloat16), vh,
                      preferred_element_type=jnp.float32)
        o_ref[0, :, h * d:(h + 1) * d] = ctx.astype(o_ref.dtype)


def attention(q_src, kv_src, kpad_add, num_heads, *, embed_dim,
              q_off, k_off, v_off, peek_add=None, tq_target=256):
    """q_src:(B,Tq,Dq) bf16, kv_src:(B,Tk,Dkv) bf16, kpad_add:(B,1,Tk) f32 additive,
    peek_add:(Tq,Tk) f32 additive (optional) -> ctx:(B,Tq,E) bf16."""
    B, Tq, Dq = q_src.shape
    Tk, Dkv = kv_src.shape[1], kv_src.shape[2]
    E = embed_dim
    scale = 1.0 / math.sqrt(E // num_heads)
    tq = _tile(Tq, tq_target, 8)
    grid = (B, Tq // tq)

    in_specs = [pl.BlockSpec((1, 1, Tk), lambda b, qi: (b, 0, 0))]
    args = [kpad_add]
    if peek_add is not None:
        in_specs.append(pl.BlockSpec((tq, Tk), lambda b, qi: (qi, 0)))
        args.append(peek_add)
    in_specs += [
        pl.BlockSpec((1, tq, Dq), lambda b, qi: (b, qi, 0)),
        pl.BlockSpec((1, Tk, Dkv), lambda b, qi: (b, 0, 0)),
    ]
    args += [q_src, kv_src]

    return pl.pallas_call(
        functools.partial(_mha_kernel, num_heads=num_heads, scale=scale,
                          q_off=q_off, k_off=k_off, v_off=v_off,
                          has_peek=peek_add is not None),
        grid=grid,
        in_specs=in_specs,
        out_specs=pl.BlockSpec((1, tq, E), lambda b, qi: (b, qi, 0)),
        out_shape=jax.ShapeDtypeStruct((B, Tq, E), jnp.bfloat16),
        compiler_params=pltpu.CompilerParams(
            dimension_semantics=("parallel", "parallel")),
    )(*args)


# ----------------------------------------------------------------------------
# Model glue
# ----------------------------------------------------------------------------
def self_attention(p, x, kpad_add, num_heads, peek_add=None):
    B, T, E = x.shape
    qkv = linear(x.reshape(B * T, E), p["w_qkv"], p["b_qkv"]).reshape(B, T, 3 * E)
    # Pass the fused QKV tensor straight in; q/k/v sliced inside the kernel.
    return attention(qkv, qkv, kpad_add, num_heads, embed_dim=E,
                     q_off=0, k_off=E, v_off=2 * E, peek_add=peek_add)


def encoder_block(p, x, kpad_add, num_heads):
    B, S, E = x.shape
    ctx = self_attention(p["self_attn"], x, kpad_add, num_heads)
    h = linear_residual_layernorm(
        ctx.reshape(B * S, E), p["self_attn"]["w_o"], p["self_attn"]["b_o"],
        x.reshape(B * S, E), p["ln1_g"], p["ln1_b"])
    out = ffn_layernorm(h, p["ff"]["w1"], p["ff"]["b1"], p["ff"]["w2"], p["ff"]["b2"],
                        p["ln2_g"], p["ln2_b"])
    return out.reshape(B, S, E)


def decoder_block(p, x, enc_h, tgt_kpad_add, peek_add, src_kpad_add, num_heads):
    B, T, E = x.shape
    S = enc_h.shape[1]

    sa = self_attention(p["self_attn"], x, tgt_kpad_add, num_heads, peek_add=peek_add)
    h = linear_residual_layernorm(
        sa.reshape(B * T, E), p["self_attn"]["w_o"], p["self_attn"]["b_o"],
        x.reshape(B * T, E), p["ln1_g"], p["ln1_b"]).reshape(B, T, E)

    q = linear(h.reshape(B * T, E), p["cross_attn"]["w_q"],
               p["cross_attn"]["b_q"]).reshape(B, T, E)
    enc_kv = linear(enc_h.reshape(B * S, E), p["cross_attn"]["w_kv"],
                    p["cross_attn"]["b_kv"]).reshape(B, S, 2 * E)
    ca = attention(q, enc_kv, src_kpad_add, num_heads, embed_dim=E,
                   q_off=0, k_off=0, v_off=E)

    h2 = linear_residual_layernorm(
        ca.reshape(B * T, E), p["cross_attn"]["w_o"], p["cross_attn"]["b_o"],
        h.reshape(B * T, E), p["ln2_g"], p["ln2_b"])

    out = ffn_layernorm(h2, p["ff"]["w1"], p["ff"]["b1"], p["ff"]["w2"], p["ff"]["b2"],
                        p["ln3_g"], p["ln3_b"])
    return out.reshape(B, T, E)


def sinusoidal_pos_encoding(seq_len, embed_dim):
    pos = jnp.arange(seq_len, dtype=jnp.float32)[:, None]
    i = jnp.arange(embed_dim, dtype=jnp.float32)[None, :]
    angle = pos / jnp.power(10000.0, (2.0 * jnp.floor(i / 2.0)) / embed_dim)
    pe = jnp.where(jnp.mod(jnp.arange(embed_dim), 2) == 0, jnp.sin(angle), jnp.cos(angle))
    return pe  # (seq_len, E)


def embed(token_ids, embed_table, embed_dim):
    x = jnp.take(embed_table, token_ids, axis=0) * math.sqrt(embed_dim)
    pe = sinusoidal_pos_encoding(token_ids.shape[1], embed_dim)
    return (x + pe[None, :, :]).astype(jnp.bfloat16)


def _additive_key_mask(keep_bool):
    # (B, Tk) bool -> (B, 1, Tk) additive f32 (0 = keep, -1e9 = masked)
    return jnp.where(keep_bool, 0.0, -1e9).astype(jnp.float32)[:, None, :]


@functools.partial(jax.jit, static_argnames=("num_heads",))
def transformer_forward(params, src, tgt, src_padding_mask, tgt_padding_mask,
                        no_peeking_mask, *, num_heads):
    B, S = src.shape
    _, T = tgt.shape
    E = params["src_embed"].shape[1]

    # Slim masks: per-key padding (B,1,Tk) + shared (T,T) no-peeking; no (B,Tq,Tk) in HBM.
    src_kpad_add = _additive_key_mask(src_padding_mask)                   # (B,1,S)
    tgt_kpad_add = _additive_key_mask(tgt_padding_mask)                   # (B,1,T)
    peek_add = jnp.where(no_peeking_mask, 0.0, -1e9).astype(jnp.float32)  # (T,T)

    # ---- encoder ----
    x = embed(src, params["src_embed"], E)
    for blk in params["encoder_blocks"]:
        x = encoder_block(blk, x, src_kpad_add, num_heads)
    encoder_hidden_states = x                                             # (B, S, E) bf16

    # ---- decoder ----
    y = embed(tgt, params["tgt_embed"], E)
    for blk in params["decoder_blocks"]:
        y = decoder_block(blk, y, encoder_hidden_states, tgt_kpad_add, peek_add,
                          src_kpad_add, num_heads)

    # ---- output classifier (B, T, V_tgt): large row tile => weight read ~once ----
    V = params["out_w"].shape[1]
    M = B * T
    logits = linear(y.reshape(M, E), params["out_w"], params["out_b"],
                    out_dtype=jnp.float32, tm=2048).reshape(B, T, V)
    return encoder_hidden_states, logits


# ----------------------------------------------------------------------------
# Deterministic parameter init (xavier-uniform-like); matmul weights stored bf16
# ----------------------------------------------------------------------------
def _xavier(key, shape, dtype=jnp.bfloat16):
    fan_in, fan_out = shape[0], shape[-1]
    limit = math.sqrt(6.0 / (fan_in + fan_out))
    return jax.random.uniform(key, shape, jnp.float32, -limit, limit).astype(dtype)


def init_self_attn_params(key, E, qkv_bias):
    k1, k2 = jax.random.split(key)
    return {
        "w_qkv": _xavier(k1, (E, 3 * E)),
        "b_qkv": jnp.zeros((3 * E,), jnp.float32),   # zeros == no bias when qkv_bias=False
        "w_o": _xavier(k2, (E, E)),
        "b_o": jnp.zeros((E,), jnp.float32),
    }


def init_cross_attn_params(key, E, qkv_bias):
    k1, k2, k3 = jax.random.split(key, 3)
    return {
        "w_q": _xavier(k1, (E, E)),
        "b_q": jnp.zeros((E,), jnp.float32),
        "w_kv": _xavier(k2, (E, 2 * E)),
        "b_kv": jnp.zeros((2 * E,), jnp.float32),
        "w_o": _xavier(k3, (E, E)),
        "b_o": jnp.zeros((E,), jnp.float32),
    }


def init_ff_params(key, E, F):
    k1, k2 = jax.random.split(key)
    return {
        "w1": _xavier(k1, (E, F)), "b1": jnp.zeros((F,), jnp.float32),
        "w2": _xavier(k2, (F, E)), "b2": jnp.zeros((E,), jnp.float32),
    }


def init_params(key, *, src_vocab_size, tgt_vocab_size, num_encoder_blocks,
                num_decoder_blocks, embed_dim, ff_dim, qkv_bias):
    keys = jax.random.split(key, 4 + num_encoder_blocks + num_decoder_blocks)
    E = embed_dim
    params = {
        "src_embed": _xavier(keys[0], (src_vocab_size, E), jnp.float32),
        "tgt_embed": _xavier(keys[1], (tgt_vocab_size, E), jnp.float32),
        "out_w": _xavier(keys[2], (E, tgt_vocab_size)),
        "out_b": jnp.zeros((tgt_vocab_size,), jnp.float32),
        "encoder_blocks": [],
        "decoder_blocks": [],
    }
    ones = lambda: jnp.ones((E,), jnp.float32)
    zeros = lambda: jnp.zeros((E,), jnp.float32)
    for i in range(num_encoder_blocks):
        ka, kf = jax.random.split(keys[3 + i])
        params["encoder_blocks"].append({
            "self_attn": init_self_attn_params(ka, E, qkv_bias),
            "ff": init_ff_params(kf, E, ff_dim),
            "ln1_g": ones(), "ln1_b": zeros(),
            "ln2_g": ones(), "ln2_b": zeros(),
        })
    for i in range(num_decoder_blocks):
        ka, kc, kf = jax.random.split(keys[3 + num_encoder_blocks + i], 3)
        params["decoder_blocks"].append({
            "self_attn": init_self_attn_params(ka, E, qkv_bias),
            "cross_attn": init_cross_attn_params(kc, E, qkv_bias),
            "ff": init_ff_params(kf, E, ff_dim),
            "ln1_g": ones(), "ln1_b": zeros(),
            "ln2_g": ones(), "ln2_b": zeros(),
            "ln3_g": ones(), "ln3_b": zeros(),
        })
    return params


# ----------------------------------------------------------------------------
# Demo
# ----------------------------------------------------------------------------
if __name__ == "__main__":
    # Small config consistent with the module's constructor signature.
    B, S, T = 2, 8, 8
    E, H, F = 32, 4, 64
    SRC_V, TGT_V = 50, 60
    N_ENC, N_DEC = 2, 2

    key = jax.random.PRNGKey(0)
    kp, ks, kt = jax.random.split(key, 3)

    params = init_params(
        kp, src_vocab_size=SRC_V, tgt_vocab_size=TGT_V,
        num_encoder_blocks=N_ENC, num_decoder_blocks=N_DEC,
        embed_dim=E, ff_dim=F, qkv_bias=False,
    )

    src = jax.random.randint(ks, (B, S), 0, SRC_V, dtype=jnp.int32)
    tgt = jax.random.randint(kt, (B, T), 0, TGT_V, dtype=jnp.int32)
    src_padding_mask = jnp.ones((B, S), dtype=bool)           # True = valid token
    tgt_padding_mask = jnp.ones((B, T), dtype=bool)
    no_peeking_mask = jnp.tril(jnp.ones((T, T), dtype=bool))  # True = allowed to attend

    enc_h, logits = transformer_forward(
        params, src, tgt, src_padding_mask, tgt_padding_mask, no_peeking_mask,
        num_heads=H,
    )
    jax.block_until_ready((enc_h, logits))

    assert enc_h.shape == (B, S, E)
    assert logits.shape == (B, T, TGT_V)
    assert jnp.all(jnp.isfinite(enc_h.astype(jnp.float32)))
    assert jnp.all(jnp.isfinite(logits))
    print("KERNEL_OK")
</pallas_src>

<mosaic_0001>
module attributes {stable_mosaic.version = 11 : i64} {
  func.func @_linear_kernel(%arg0: i32, %arg1: i32, %arg2: i32, %arg3: memref<16x32xbf16, #tpu.memory_space<vmem>>, %arg4: memref<32x96xbf16, #tpu.memory_space<vmem>>, %arg5: memref<1x96xf32, #tpu.memory_space<vmem>>, %arg6: memref<16x96xbf16, #tpu.memory_space<vmem>>, %arg7: memref<16x96xf32, #tpu.memory_space<vmem>>) attributes {dimension_semantics = [#tpu.dimension_semantics<parallel>, #tpu.dimension_semantics<parallel>, #tpu.dimension_semantics<arbitrary>], iteration_bounds = array<i64: 1, 1, 1>, scalar_prefetch = 0 : i64, scratch_operands = 1 : i64, tpu.core_type = #tpu.core_type<tc>, window_params = [{transform_indices = @transform_0, window_bounds = array<i64: 16, 32>}, {transform_indices = @transform_1, window_bounds = array<i64: 32, 96>}, {transform_indices = @transform_2, window_bounds = array<i64: 1, 96>}, {transform_indices = @transform_3, window_bounds = array<i64: 16, 96>}]} {
    %c0_i32 = arith.constant 0 : i32
    %0 = arith.cmpi eq, %arg2, %c0_i32 : i32
    %1 = arith.extui %0 : i1 to i32
    %c0_i32_0 = arith.constant 0 : i32
    %2 = arith.cmpi ne, %1, %c0_i32_0 : i32
    scf.if %2 {
      %cst_10 = arith.constant 0.000000e+00 : f32
      %12 = vector.broadcast %cst_10 : f32 to vector<16x96xf32>
      %c0_11 = arith.constant 0 : index
      %c0_12 = arith.constant 0 : index
      %13 = vector.load %arg7[%c0_11, %c0_12] : memref<16x96xf32, #tpu.memory_space<vmem>>, vector<16x96xf32>
      tpu.vector_store %arg7[%c0_11, %c0_12], %12 {strides = array<i32>} : memref<16x96xf32, #tpu.memory_space<vmem>>, vector<16x96xf32>,
    } else {
    }
    %c0 = arith.constant 0 : index
    %c0_1 = arith.constant 0 : index
    %3 = vector.load %arg7[%c0, %c0_1] : memref<16x96xf32, #tpu.memory_space<vmem>>, vector<16x96xf32>
    %c0_2 = arith.constant 0 : index
    %c0_3 = arith.constant 0 : index
    %4 = vector.load %arg3[%c0_2, %c0_3] : memref<16x32xbf16, #tpu.memory_space<vmem>>, vector<16x32xbf16>
    %c0_4 = arith.constant 0 : index
    %c0_5 = arith.constant 0 : index
    %5 = vector.load %arg4[%c0_4, %c0_5] : memref<32x96xbf16, #tpu.memory_space<vmem>>, vector<32x96xbf16>
    %cst = arith.constant dense<0.000000e+00> : vector<16x96xf32>
    %6 = tpu.matmul %4, %5, %cst {dimension_numbers = #tpu.dot_dimension_numbers<[1], [0], [0], [1], [0, 0, 1, 1], [], []>} : vector<16x32xbf16>, vector<32x96xbf16>, vector<16x96xf32> -> vector<16x96xf32>
    %7 = arith.addf %3, %6 : vector<16x96xf32>
    %c0_6 = arith.constant 0 : index
    %c0_7 = arith.constant 0 : index
    %8 = vector.load %arg7[%c0_6, %c0_7] : memref<16x96xf32, #tpu.memory_space<vmem>>, vector<16x96xf32>
    tpu.vector_store %arg7[%c0_6, %c0_7], %7 {strides = array<i32>} : memref<16x96xf32, #tpu.memory_space<vmem>>, vector<16x96xf32>,
    %c0_i32_8 = arith.constant 0 : i32
    %9 = arith.cmpi eq, %arg2, %c0_i32_8 : i32
    %10 = arith.extui %9 : i1 to i32
    %c0_i32_9 = arith.constant 0 : i32
    %11 = arith.cmpi ne, %10, %c0_i32_9 : i32
    scf.if %11 {
      %c0_10 = arith.constant 0 : index
      %c0_11 = arith.constant 0 : index
      %12 = vector.load %arg7[%c0_10, %c0_11] : memref<16x96xf32, #tpu.memory_space<vmem>>, vector<16x96xf32>
      %c0_12 = arith.constant 0 : index
      %c0_13 = arith.constant 0 : index
      %13 = vector.load %arg5[%c0_12, %c0_13] : memref<1x96xf32, #tpu.memory_space<vmem>>, vector<1x96xf32>
      %14 = vector.broadcast %13 : vector<1x96xf32> to vector<16x96xf32>
      %15 = arith.addf %12, %14 : vector<16x96xf32>
      %16 = arith.truncf %15 : vector<16x96xf32> to vector<16x96xbf16>
      %c0_14 = arith.constant 0 : index
      %c0_15 = arith.constant 0 : index
      %17 = vector.load %arg6[%c0_14, %c0_15] : memref<16x96xbf16, #tpu.memory_space<vmem>>, vector<16x96xbf16>
      tpu.vector_store %arg6[%c0_14, %c0_15], %16 {strides = array<i32>} : memref<16x96xbf16, #tpu.memory_space<vmem>>, vector<16x96xbf16>,
    } else {
    }
    return
  }
  func.func @transform_0(%arg0: i32, %arg1: i32, %arg2: i32) -> (i32, i32) {
    %c0_i32 = arith.constant 0 : i32
    return %arg0, %arg2 : i32, i32
  }
  func.func @transform_1(%arg0: i32, %arg1: i32, %arg2: i32) -> (i32, i32) {
    %c0_i32 = arith.constant 0 : i32
    return %arg2, %arg1 : i32, i32
  }
  func.func @transform_2(%arg0: i32, %arg1: i32, %arg2: i32) -> (i32, i32) {
    %c0_i32 = arith.constant 0 : i32
    %c0_i32_0 = arith.constant 0 : i32
    return %c0_i32, %arg1 : i32, i32
  }
  func.func @transform_3(%arg0: i32, %arg1: i32, %arg2: i32) -> (i32, i32) {
    %c0_i32 = arith.constant 0 : i32
    return %arg0, %arg1 : i32, i32
  }
}

module attributes {stable_mosaic.version = 11 : i64} {
  func.func @_mha_kernel(%arg0: i32, %arg1: i32, %arg2: memref<1x1x8xf32, #tpu.memory_space<vmem>>, %arg3: memref<1x8x96xbf16, #tpu.memory_space<vmem>>, %arg4: memref<1x8x96xbf16, #tpu.memory_space<vmem>>, %arg5: memref<1x8x32xbf16, #tpu.memory_space<vmem>>) attributes {dimension_semantics = [#tpu.dimension_semantics<parallel>, #tpu.dimension_semantics<parallel>], iteration_bounds = array<i64: 2, 1>, scalar_prefetch = 0 : i64, scratch_operands = 0 : i64, tpu.core_type = #tpu.core_type<tc>, window_params = [{transform_indices = @transform_0, window_bounds = array<i64: 1, 1, 8>}, {transform_indices = @transform_1, window_bounds = array<i64: 1, 8, 96>}, {transform_indices = @transform_2, window_bounds = array<i64: 1, 8, 96>}, {transform_indices = @transform_3, window_bounds = array<i64: 1, 8, 32>}]} {
    %c0 = arith.constant 0 : index
    %c0_0 = arith.constant 0 : index
    %c0_1 = arith.constant 0 : index
    %0 = vector.load %arg2[%c0, %c0_0, %c0_1] : memref<1x1x8xf32, #tpu.memory_space<vmem>>, vector<1x1x8xf32>
    %1 = vector.shape_cast %0 : vector<1x1x8xf32> to vector<1x8xf32>
    %c0_2 = arith.constant 0 : index
    %c0_3 = arith.constant 0 : index
    %c0_4 = arith.constant 0 : index
    %2 = vector.load %arg3[%c0_2, %c0_3, %c0_4] : memref<1x8x96xbf16, #tpu.memory_space<vmem>>, vector<1x8x8xbf16>
    %3 = vector.shape_cast %2 : vector<1x8x8xbf16> to vector<8x8xbf16>
    %cst = arith.constant 3.535160e-01 : bf16
    %4 = vector.broadcast %cst : bf16 to vector<8x8xbf16>
    %5 = arith.mulf %3, %4 : vector<8x8xbf16>
    %c0_5 = arith.constant 0 : index
    %c0_6 = arith.constant 0 : index
    %c32 = arith.constant 32 : index
    %6 = vector.load %arg4[%c0_5, %c0_6, %c32] : memref<1x8x96xbf16, #tpu.memory_space<vmem>>, vector<1x8x8xbf16>
    %7 = vector.shape_cast %6 : vector<1x8x8xbf16> to vector<8x8xbf16>
    %c0_7 = arith.constant 0 : index
    %c0_8 = arith.constant 0 : index
    %c64 = arith.constant 64 : index
    %8 = vector.load %arg4[%c0_7, %c0_8, %c64] : memref<1x8x96xbf16, #tpu.memory_space<vmem>>, vector<1x8x8xbf16>
    %9 = vector.shape_cast %8 : vector<1x8x8xbf16> to vector<8x8xbf16>
    %cst_9 = arith.constant dense<0.000000e+00> : vector<8x8xf32>
    %10 = tpu.matmul %5, %7, %cst_9 {dimension_numbers = #tpu.dot_dimension_numbers<[1], [1], [0], [0], [0, 0, 1, 0], [], []>} : vector<8x8xbf16>, vector<8x8xbf16>, vector<8x8xf32> -> vector<8x8xf32>
    %11 = vector.broadcast %1 : vector<1x8xf32> to vector<8x8xf32>
    %12 = arith.addf %10, %11 : vector<8x8xf32>
    %cst_10 = arith.constant dense<0xFF800000> : vector<8xf32>
    %13 = vector.multi_reduction <maximumf>, %12, %cst_10 [1] : vector<8x8xf32> to vector<8xf32>
    %14 = vector.shape_cast %13 : vector<8xf32> to vector<8x1xf32>
    %15 = vector.broadcast %14 : vector<8x1xf32> to vector<8x8xf32>
    %16 = arith.subf %12, %15 : vector<8x8xf32>
    %17 = math.exp %16 : vector<8x8xf32>
    %cst_11 = arith.constant dense<0.000000e+00> : vector<8xf32>
    %18 = vector.multi_reduction <add>, %17, %cst_11 [1] : vector<8x8xf32> to vector<8xf32>
    %19 = vector.shape_cast %18 : vector<8xf32> to vector<8x1xf32>
    %20 = tpu.reciprocal %19 {approx = true} : vector<8x1xf32> -> vector<8x1xf32>
    %21 = vector.broadcast %20 : vector<8x1xf32> to vector<8x8xf32>
    %22 = arith.mulf %17, %21 : vector<8x8xf32>
    %23 = arith.truncf %22 : vector<8x8xf32> to vector<8x8xbf16>
    %cst_12 = arith.constant dense<0.000000e+00> : vector<8x8xf32>
    %24 = tpu.matmul %23, %9, %cst_12 {dimension_numbers = #tpu.dot_dimension_numbers<[1], [0], [0], [1], [0, 0, 1, 1], [], []>} : vector<8x8xbf16>, vector<8x8xbf16>, vector<8x8xf32> -> vector<8x8xf32>
    %25 = arith.truncf %24 : vector<8x8xf32> to vector<8x8xbf16>
    %c0_13 = arith.constant 0 : index
    %c0_14 = arith.constant 0 : index
    %c0_15 = arith.constant 0 : index
    %26 = vector.load %arg5[%c0_13, %c0_14, %c0_15] : memref<1x8x32xbf16, #tpu.memory_space<vmem>>, vector<1x8x8xbf16>
    %27 = vector.shape_cast %26 : vector<1x8x8xbf16> to vector<8x8xbf16>
    %28 = vector.shape_cast %25 : vector<8x8xbf16> to vector<1x8x8xbf16>
    tpu.vector_store %arg5[%c0_13, %c0_14, %c0_15], %28 {strides = array<i32>} : memref<1x8x32xbf16, #tpu.memory_space<vmem>>, vector<1x8x8xbf16>,
    %c0_16 = arith.constant 0 : index
    %c0_17 = arith.constant 0 : index
    %c8 = arith.constant 8 : index
    %29 = vector.load %arg3[%c0_16, %c0_17, %c8] : memref<1x8x96xbf16, #tpu.memory_space<vmem>>, vector<1x8x8xbf16>
    %30 = vector.shape_cast %29 : vector<1x8x8xbf16> to vector<8x8xbf16>
    %cst_18 = arith.constant 3.535160e-01 : bf16
    %31 = vector.broadcast %cst_18 : bf16 to vector<8x8xbf16>
    %32 = arith.mulf %30, %31 : vector<8x8xbf16>
    %c0_19 = arith.constant 0 : index
    %c0_20 = arith.constant 0 : index
    %c40 = arith.constant 40 : index
    %33 = vector.load %arg4[%c0_19, %c0_20, %c40] : memref<1x8x96xbf16, #tpu.memory_space<vmem>>, vector<1x8x8xbf16>
    %34 = vector.shape_cast %33 : vector<1x8x8xbf16> to vector<8x8xbf16>
    %c0_21 = arith.constant 0 : index
    %c0_22 = arith.constant 0 : index
    %c72 = arith.constant 72 : index
    %35 = vector.load %arg4[%c0_21, %c0_22, %c72] : memref<1x8x96xbf16, #tpu.memory_space<vmem>>, vector<1x8x8xbf16>
    %36 = vector.shape_cast %35 : vector<1x8x8xbf16> to vector<8x8xbf16>
    %cst_23 = arith.constant dense<0.000000e+00> : vector<8x8xf32>
    %37 = tpu.matmul %32, %34, %cst_23 {dimension_numbers = #tpu.dot_dimension_numbers<[1], [1], [0], [0], [0, 0, 1, 0], [], []>} : vector<8x8xbf16>, vector<8x8xbf16>, vector<8x8xf32> -> vector<8x8xf32>
    %38 = vector.broadcast %1 : vector<1x8xf32> to vector<8x8xf32>
    %39 = arith.addf %37, %38 : vector<8x8xf32>
    %cst_24 = arith.constant dense<0xFF800000> : vector<8xf32>
    %40 = vector.multi_reduction <maximumf>, %39, %cst_24 [1] : vector<8x8xf32> to vector<8xf32>
    %41 = vector.shape_cast %40 : vector<8xf32> to vector<8x1xf32>
    %42 = vector.broadcast %41 : vector<8x1xf32> to vector<8x8xf32>
    %43 = arith.subf %39, %42 : vector<8x8xf32>
    %44 = math.exp %43 : vector<8x8xf32>
    %cst_25 = arith.constant dense<0.000000e+00> : vector<8xf32>
    %45 = vector.multi_reduction <add>, %44, %cst_25 [1] : vector<8x8xf32> to vector<8xf32>
    %46 = vector.shape_cast %45 : vector<8xf32> to vector<8x1xf32>
    %47 = tpu.reciprocal %46 {approx = true} : vector<8x1xf32> -> vector<8x1xf32>
    %48 = vector.broadcast %47 : vector<8x1xf32> to vector<8x8xf32>
    %49 = arith.mulf %44, %48 : vector<8x8xf32>
    %50 = arith.truncf %49 : vector<8x8xf32> to vector<8x8xbf16>
    %cst_26 = arith.constant dense<0.000000e+00> : vector<8x8xf32>
    %51 = tpu.matmul %50, %36, %cst_26 {dimension_numbers = #tpu.dot_dimension_numbers<[1], [0], [0], [1], [0, 0, 1, 1], [], []>} : vector<8x8xbf16>, vector<8x8xbf16>, vector<8x8xf32> -> vector<8x8xf32>
    %52 = arith.truncf %51 : vector<8x8xf32> to vector<8x8xbf16>
    %c0_27 = arith.constant 0 : index
    %c0_28 = arith.constant 0 : index
    %c8_29 = arith.constant 8 : index
    %53 = vector.load %arg5[%c0_27, %c0_28, %c8_29] : memref<1x8x32xbf16, #tpu.memory_space<vmem>>, vector<1x8x8xbf16>
    %54 = vector.shape_cast %53 : vector<1x8x8xbf16> to vector<8x8xbf16>
    %55 = vector.shape_cast %52 : vector<8x8xbf16> to vector<1x8x8xbf16>
    tpu.vector_store %arg5[%c0_27, %c0_28, %c8_29], %55 {strides = array<i32>} : memref<1x8x32xbf16, #tpu.memory_space<vmem>>, vector<1x8x8xbf16>,
    %c0_30 = arith.constant 0 : index
    %c0_31 = arith.constant 0 : index
    %c16 = arith.constant 16 : index
    %56 = vector.load %arg3[%c0_30, %c0_31, %c16] : memref<1x8x96xbf16, #tpu.memory_space<vmem>>, vector<1x8x8xbf16>
    %57 = vector.shape_cast %56 : vector<1x8x8xbf16> to vector<8x8xbf16>
    %cst_32 = arith.constant 3.535160e-01 : bf16
    %58 = vector.broadcast %cst_32 : bf16 to vector<8x8xbf16>
    %59 = arith.mulf %57, %58 : vector<8x8xbf16>
    %c0_33 = arith.constant 0 : index
    %c0_34 = arith.constant 0 : index
    %c48 = arith.constant 48 : index
    %60 = vector.load %arg4[%c0_33, %c0_34, %c48] : memref<1x8x96xbf16, #tpu.memory_space<vmem>>, vector<1x8x8xbf16>
    %61 = vector.shape_cast %60 : vector<1x8x8xbf16> to vector<8x8xbf16>
    %c0_35 = arith.constant 0 : index
    %c0_36 = arith.constant 0 : index
    %c80 = arith.constant 80 : index
    %62 = vector.load %arg4[%c0_35, %c0_36, %c80] : memref<1x8x96xbf16, #tpu.memory_space<vmem>>, vector<1x8x8xbf16>
    %63 = vector.shape_cast %62 : vector<1x8x8xbf16> to vector<8x8xbf16>
    %cst_37 = arith.constant dense<0.000000e+00> : vector<8x8xf32>
    %64 = tpu.matmul %59, %61, %cst_37 {dimension_numbers = #tpu.dot_dimension_numbers<[1], [1], [0], [0], [0, 0, 1, 0], [], []>} : vector<8x8xbf16>, vector<8x8xbf16>, vector<8x8xf32> -> vector<8x8xf32>
    %65 = vector.broadcast %1 : vector<1x8xf32> to vector<8x8xf32>
    %66 = arith.addf %64, %65 : vector<8x8xf32>
    %cst_38 = arith.constant dense<0xFF800000> : vector<8xf32>
    %67 = vector.multi_reduction <maximumf>, %66, %cst_38 [1] : vector<8x8xf32> to vector<8xf32>
    %68 = vector.shape_cast %67 : vector<8xf32> to vector<8x1xf32>
    %69 = vector.broadcast %68 : vector<8x1xf32> to vector<8x8xf32>
    %70 = arith.subf %66, %69 : vector<8x8xf32>
    %71 = math.exp %70 : vector<8x8xf32>
    %cst_39 = arith.constant dense<0.000000e+00> : vector<8xf32>
    %72 = vector.multi_reduction <add>, %71, %cst_39 [1] : vector<8x8xf32> to vector<8xf32>
    %73 = vector.shape_cast %72 : vector<8xf32> to vector<8x1xf32>
    %74 = tpu.reciprocal %73 {approx = true} : vector<8x1xf32> -> vector<8x1xf32>
    %75 = vector.broadcast %74 : vector<8x1xf32> to vector<8x8xf32>
    %76 = arith.mulf %71, %75 : vector<8x8xf32>
    %77 = arith.truncf %76 : vector<8x8xf32> to vector<8x8xbf16>
    %cst_40 = arith.constant dense<0.000000e+00> : vector<8x8xf32>
    %78 = tpu.matmul %77, %63, %cst_40 {dimension_numbers = #tpu.dot_dimension_numbers<[1], [0], [0], [1], [0, 0, 1, 1], [], []>} : vector<8x8xbf16>, vector<8x8xbf16>, vector<8x8xf32> -> vector<8x8xf32>
    %79 = arith.truncf %78 : vector<8x8xf32> to vector<8x8xbf16>
    %c0_41 = arith.constant 0 : index
    %c0_42 = arith.constant 0 : index
    %c16_43 = arith.constant 16 : index
    %80 = vector.load %arg5[%c0_41, %c0_42, %c16_43] : memref<1x8x32xbf16, #tpu.memory_space<vmem>>, vector<1x8x8xbf16>
    %81 = vector.shape_cast %80 : vector<1x8x8xbf16> to vector<8x8xbf16>
    %82 = vector.shape_cast %79 : vector<8x8xbf16> to vector<1x8x8xbf16>
    tpu.vector_store %arg5[%c0_41, %c0_42, %c16_43], %82 {strides = array<i32>} : memref<1x8x32xbf16, #tpu.memory_space<vmem>>, vector<1x8x8xbf16>,
    %c0_44 = arith.constant 0 : index
    %c0_45 = arith.constant 0 : index
    %c24 = arith.constant 24 : index
    %83 = vector.load %arg3[%c0_44, %c0_45, %c24] : memref<1x8x96xbf16, #tpu.memory_space<vmem>>, vector<1x8x8xbf16>
    %84 = vector.shape_cast %83 : vector<1x8x8xbf16> to vector<8x8xbf16>
    %cst_46 = arith.constant 3.535160e-01 : bf16
    %85 = vector.broadcast %cst_46 : bf16 to vector<8x8xbf16>
    %86 = arith.mulf %84, %85 : vector<8x8xbf16>
    %c0_47 = arith.constant 0 : index
    %c0_48 = arith.constant 0 : index
    %c56 = arith.constant 56 : index
    %87 = vector.load %arg4[%c0_47, %c0_48, %c56] : memref<1x8x96xbf16, #tpu.memory_space<vmem>>, vector<1x8x8xbf16>
    %88 = vector.shape_cast %87 : vector<1x8x8xbf16> to vector<8x8xbf16>
    %c0_49 = arith.constant 0 : index
    %c0_50 = arith.constant 0 : index
    %c88 = arith.constant 88 : index
    %89 = vector.load %arg4[%c0_49, %c0_50, %c88] : memref<1x8x96xbf16, #tpu.memory_space<vmem>>, vector<1x8x8xbf16>
    %90 = vector.shape_cast %89 : vector<1x8x8xbf16> to vector<8x8xbf16>
    %cst_51 = arith.constant dense<0.000000e+00> : vector<8x8xf32>
    %91 = tpu.matmul %86, %88, %cst_51 {dimension_numbers = #tpu.dot_dimension_numbers<[1], [1], [0], [0], [0, 0, 1, 0], [], []>} : vector<8x8xbf16>, vector<8x8xbf16>, vector<8x8xf32> -> vector<8x8xf32>
    %92 = vector.broadcast %1 : vector<1x8xf32> to vector<8x8xf32>
    %93 = arith.addf %91, %92 : vector<8x8xf32>
    %cst_52 = arith.constant dense<0xFF800000> : vector<8xf32>
    %94 = vector.multi_reduction <maximumf>, %93, %cst_52 [1] : vector<8x8xf32> to vector<8xf32>
    %95 = vector.shape_cast %94 : vector<8xf32> to vector<8x1xf32>
    %96 = vector.broadcast %95 : vector<8x1xf32> to vector<8x8xf32>
    %97 = arith.subf %93, %96 : vector<8x8xf32>
    %98 = math.exp %97 : vector<8x8xf32>
    %cst_53 = arith.constant dense<0.000000e+00> : vector<8xf32>
    %99 = vector.multi_reduction <add>, %98, %cst_53 [1] : vector<8x8xf32> to vector<8xf32>
    %100 = vector.shape_cast %99 : vector<8xf32> to vector<8x1xf32>
    %101 = tpu.reciprocal %100 {approx = true} : vector<8x1xf32> -> vector<8x1xf32>
    %102 = vector.broadcast %101 : vector<8x1xf32> to vector<8x8xf32>
    %103 = arith.mulf %98, %102 : vector<8x8xf32>
    %104 = arith.truncf %103 : vector<8x8xf32> to vector<8x8xbf16>
    %cst_54 = arith.constant dense<0.000000e+00> : vector<8x8xf32>
    %105 = tpu.matmul %104, %90, %cst_54 {dimension_numbers = #tpu.dot_dimension_numbers<[1], [0], [0], [1], [0, 0, 1, 1], [], []>} : vector<8x8xbf16>, vector<8x8xbf16>, vector<8x8xf32> -> vector<8x8xf32>
    %106 = arith.truncf %105 : vector<8x8xf32> to vector<8x8xbf16>
    %c0_55 = arith.constant 0 : index
    %c0_56 = arith.constant 0 : index
    %c24_57 = arith.constant 24 : index
    %107 = vector.load %arg5[%c0_55, %c0_56, %c24_57] : memref<1x8x32xbf16, #tpu.memory_space<vmem>>, vector<1x8x8xbf16>
    %108 = vector.shape_cast %107 : vector<1x8x8xbf16> to vector<8x8xbf16>
    %109 = vector.shape_cast %106 : vector<8x8xbf16> to vector<1x8x8xbf16>
    tpu.vector_store %arg5[%c0_55, %c0_56, %c24_57], %109 {strides = array<i32>} : memref<1x8x32xbf16, #tpu.memory_space<vmem>>, vector<1x8x8xbf16>,
    return
  }
  func.func @transform_0(%arg0: i32, %arg1: i32) -> (i32, i32, i32) {
    %c0_i32 = arith.constant 0 : i32
    %c0_i32_0 = arith.constant 0 : i32
    %c0_i32_1 = arith.constant 0 : i32
    return %arg0, %c0_i32, %c0_i32_0 : i32, i32, i32
  }
  func.func @transform_1(%arg0: i32, %arg1: i32) -> (i32, i32, i32) {
    %c0_i32 = arith.constant 0 : i32
    %c0_i32_0 = arith.constant 0 : i32
    return %arg0, %arg1, %c0_i32 : i32, i32, i32
  }
  func.func @transform_2(%arg0: i32, %arg1: i32) -> (i32, i32, i32) {
    %c0_i32 = arith.constant 0 : i32
    %c0_i32_0 = arith.constant 0 : i32
    %c0_i32_1 = arith.constant 0 : i32
    return %arg0, %c0_i32, %c0_i32_0 : i32, i32, i32
  }
  func.func @transform_3(%arg0: i32, %arg1: i32) -> (i32, i32, i32) {
    %c0_i32 = arith.constant 0 : i32
    %c0_i32_0 = arith.constant 0 : i32
    return %arg0, %arg1, %c0_i32 : i32, i32, i32
  }
}

module attributes {stable_mosaic.version = 11 : i64} {
  func.func @_linear_res_ln_kernel(%arg0: i32, %arg1: i32, %arg2: memref<16x32xbf16, #tpu.memory_space<vmem>>, %arg3: memref<32x32xbf16, #tpu.memory_space<vmem>>, %arg4: memref<1x32xf32, #tpu.memory_space<vmem>>, %arg5: memref<16x32xbf16, #tpu.memory_space<vmem>>, %arg6: memref<1x32xf32, #tpu.memory_space<vmem>>, %arg7: memref<1x32xf32, #tpu.memory_space<vmem>>, %arg8: memref<16x32xbf16, #tpu.memory_space<vmem>>, %arg9: memref<16x32xf32, #tpu.memory_space<vmem>>) attributes {dimension_semantics = [#tpu.dimension_semantics<parallel>, #tpu.dimension_semantics<arbitrary>], iteration_bounds = array<i64: 1, 1>, scalar_prefetch = 0 : i64, scratch_operands = 1 : i64, tpu.core_type = #tpu.core_type<tc>, window_params = [{transform_indices = @transform_0, window_bounds = array<i64: 16, 32>}, {transform_indices = @transform_1, window_bounds = array<i64: 32, 32>}, {pipeline_mode = #tpu.pipeline_mode<synchronous>, transform_indices = @transform_2, window_bounds = array<i64: 1, 32>}, {transform_indices = @transform_3, window_bounds = array<i64: 16, 32>}, {pipeline_mode = #tpu.pipeline_mode<synchronous>, transform_indices = @transform_4, window_bounds = array<i64: 1, 32>}, {pipeline_mode = #tpu.pipeline_mode<synchronous>, transform_indices = @transform_5, window_bounds = array<i64: 1, 32>}, {transform_indices = @transform_6, window_bounds = array<i64: 16, 32>}]} {
    %c0_i32 = arith.constant 0 : i32
    %0 = arith.cmpi eq, %arg1, %c0_i32 : i32
    %1 = arith.extui %0 : i1 to i32
    %c0_i32_0 = arith.constant 0 : i32
    %2 = arith.cmpi ne, %1, %c0_i32_0 : i32
    scf.if %2 {
      %cst_10 = arith.constant 0.000000e+00 : f32
      %12 = vector.broadcast %cst_10 : f32 to vector<16x32xf32>
      %c0_11 = arith.constant 0 : index
      %c0_12 = arith.constant 0 : index
      %13 = vector.load %arg9[%c0_11, %c0_12] : memref<16x32xf32, #tpu.memory_space<vmem>>, vector<16x32xf32>
      tpu.vector_store %arg9[%c0_11, %c0_12], %12 {strides = array<i32>} : memref<16x32xf32, #tpu.memory_space<vmem>>, vector<16x32xf32>,
    } else {
    }
    %c0 = arith.constant 0 : index
    %c0_1 = arith.constant 0 : index
    %3 = vector.load %arg9[%c0, %c0_1] : memref<16x32xf32, #tpu.memory_space<vmem>>, vector<16x32xf32>
    %c0_2 = arith.constant 0 : index
    %c0_3 = arith.constant 0 : index
    %4 = vector.load %arg2[%c0_2, %c0_3] : memref<16x32xbf16, #tpu.memory_space<vmem>>, vector<16x32xbf16>
    %c0_4 = arith.constant 0 : index
    %c0_5 = arith.constant 0 : index
    %5 = vector.load %arg3[%c0_4, %c0_5] : memref<32x32xbf16, #tpu.memory_space<vmem>>, vector<32x32xbf16>
    %cst = arith.constant dense<0.000000e+00> : vector<16x32xf32>
    %6 = tpu.matmul %4, %5, %cst {dimension_numbers = #tpu.dot_dimension_numbers<[1], [0], [0], [1], [0, 0, 1, 1], [], []>} : vector<16x32xbf16>, vector<32x32xbf16>, vector<16x32xf32> -> vector<16x32xf32>
    %7 = arith.addf %3, %6 : vector<16x32xf32>
    %c0_6 = arith.constant 0 : index
    %c0_7 = arith.constant 0 : index
    %8 = vector.load %arg9[%c0_6, %c0_7] : memref<16x32xf32, #tpu.memory_space<vmem>>, vector<16x32xf32>
    tpu.vector_store %arg9[%c0_6, %c0_7], %7 {strides = array<i32>} : memref<16x32xf32, #tpu.memory_space<vmem>>, vector<16x32xf32>,
    %c0_i32_8 = arith.constant 0 : i32
    %9 = arith.cmpi eq, %arg1, %c0_i32_8 : i32
    %10 = arith.extui %9 : i1 to i32
    %c0_i32_9 = arith.constant 0 : i32
    %11 = arith.cmpi ne, %10, %c0_i32_9 : i32
    scf.if %11 {
      %c0_10 = arith.constant 0 : index
      %c0_11 = arith.constant 0 : index
      %12 = vector.load %arg9[%c0_10, %c0_11] : memref<16x32xf32, #tpu.memory_space<vmem>>, vector<16x32xf32>
      %c0_12 = arith.constant 0 : index
      %c0_13 = arith.constant 0 : index
      %13 = vector.load %arg4[%c0_12, %c0_13] : memref<1x32xf32, #tpu.memory_space<vmem>>, vector<1x32xf32>
      %14 = vector.broadcast %13 : vector<1x32xf32> to vector<16x32xf32>
      %15 = arith.addf %12, %14 : vector<16x32xf32>
      %c0_14 = arith.constant 0 : index
      %c0_15 = arith.constant 0 : index
      %16 = vector.load %arg5[%c0_14, %c0_15] : memref<16x32xbf16, #tpu.memory_space<vmem>>, vector<16x32xbf16>
      %17 = arith.extf %16 : vector<16x32xbf16> to vector<16x32xf32>
      %18 = arith.addf %15, %17 : vector<16x32xf32>
      %cst_16 = arith.constant dense<0.000000e+00> : vector<16xf32>
      %19 = vector.multi_reduction <add>, %18, %cst_16 [1] : vector<16x32xf32> to vector<16xf32>
      %20 = vector.shape_cast %19 : vector<16xf32> to vector<16x1xf32>
      %cst_17 = arith.constant 3.200000e+01 : f32
      %21 = vector.broadcast %cst_17 : f32 to vector<16x1xf32>
      %22 = arith.divf %20, %21 : vector<16x1xf32>
      %23 = vector.broadcast %22 : vector<16x1xf32> to vector<16x32xf32>
      %24 = arith.subf %18, %23 : vector<16x32xf32>
      %25 = arith.mulf %24, %24 : vector<16x32xf32>
      %cst_18 = arith.constant dense<0.000000e+00> : vector<16xf32>
      %26 = vector.multi_reduction <add>, %25, %cst_18 [1] : vector<16x32xf32> to vector<16xf32>
      %27 = vector.shape_cast %26 : vector<16xf32> to vector<16x1xf32>
      %cst_19 = arith.constant 3.200000e+01 : f32
      %28 = vector.broadcast %cst_19 : f32 to vector<16x1xf32>
      %29 = arith.divf %27, %28 : vector<16x1xf32>
      %30 = vector.broadcast %22 : vector<16x1xf32> to vector<16x32xf32>
      %31 = arith.subf %18, %30 : vector<16x32xf32>
      %cst_20 = arith.constant 9.99999974E-6 : f32
      %32 = vector.broadcast %cst_20 : f32 to vector<16x1xf32>
      %33 = arith.addf %29, %32 : vector<16x1xf32>
      %34 = math.rsqrt %33 : vector<16x1xf32>
      %35 = vector.broadcast %34 : vector<16x1xf32> to vector<16x32xf32>
      %36 = arith.mulf %31, %35 : vector<16x32xf32>
      %c0_21 = arith.constant 0 : index
      %c0_22 = arith.constant 0 : index
      %37 = vector.load %arg6[%c0_21, %c0_22] : memref<1x32xf32, #tpu.memory_space<vmem>>, vector<1x32xf32>
      %38 = vector.broadcast %37 : vector<1x32xf32> to vector<16x32xf32>
      %39 = arith.mulf %36, %38 : vector<16x32xf32>
      %c0_23 = arith.constant 0 : index
      %c0_24 = arith.constant 0 : index
      %40 = vector.load %arg7[%c0_23, %c0_24] : memref<1x32xf32, #tpu.memory_space<vmem>>, vector<1x32xf32>
      %41 = vector.broadcast %40 : vector<1x32xf32> to vector<16x32xf32>
      %42 = arith.addf %39, %41 : vector<16x32xf32>
      %43 = arith.truncf %42 : vector<16x32xf32> to vector<16x32xbf16>
      %c0_25 = arith.constant 0 : index
      %c0_26 = arith.constant 0 : index
      %44 = vector.load %arg8[%c0_25, %c0_26] : memref<16x32xbf16, #tpu.memory_space<vmem>>, vector<16x32xbf16>
      tpu.vector_store %arg8[%c0_25, %c0_26], %43 {strides = array<i32>} : memref<16x32xbf16, #tpu.memory_space<vmem>>, vector<16x32xbf16>,
    } else {
    }
    return
  }
  func.func @transform_0(%arg0: i32, %arg1: i32) -> (i32, i32) {
    %c0_i32 = arith.constant 0 : i32
    return %arg0, %arg1 : i32, i32
  }
  func.func @transform_1(%arg0: i32, %arg1: i32) -> (i32, i32) {
    %c0_i32 = arith.constant 0 : i32
    %c0_i32_0 = arith.constant 0 : i32
    return %arg1, %c0_i32 : i32, i32
  }
  func.func @transform_2(%arg0: i32, %arg1: i32) -> (i32, i32) {
    %c0_i32 = arith.constant 0 : i32
    %c0_i32_0 = arith.constant 0 : i32
    %c0_i32_1 = arith.constant 0 : i32
    return %c0_i32, %c0_i32_0 : i32, i32
  }
  func.func @transform_3(%arg0: i32, %arg1: i32) -> (i32, i32) {
    %c0_i32 = arith.constant 0 : i32
    %c0_i32_0 = arith.constant 0 : i32
    return %arg0, %c0_i32 : i32, i32
  }
  func.func @transform_4(%arg0: i32, %arg1: i32) -> (i32, i32) {
    %c0_i32 = arith.constant 0 : i32
    %c0_i32_0 = arith.constant 0 : i32
    %c0_i32_1 = arith.constant 0 : i32
    return %c0_i32, %c0_i32_0 : i32, i32
  }
  func.func @transform_5(%arg0: i32, %arg1: i32) -> (i32, i32) {
    %c0_i32 = arith.constant 0 : i32
    %c0_i32_0 = arith.constant 0 : i32
    %c0_i32_1 = arith.constant 0 : i32
    return %c0_i32, %c0_i32_0 : i32, i32
  }
  func.func @transform_6(%arg0: i32, %arg1: i32) -> (i32, i32) {
    %c0_i32 = arith.constant 0 : i32
    %c0_i32_0 = arith.constant 0 : i32
    return %arg0, %c0_i32 : i32, i32
  }
}

module attributes {stable_mosaic.version = 11 : i64} {
  func.func @_ffn_ln_kernel(%arg0: i32, %arg1: i32, %arg2: memref<16x32xbf16, #tpu.memory_space<vmem>>, %arg3: memref<32x64xbf16, #tpu.memory_space<vmem>>, %arg4: memref<1x64xf32, #tpu.memory_space<vmem>>, %arg5: memref<64x32xbf16, #tpu.memory_space<vmem>>, %arg6: memref<1x32xf32, #tpu.memory_space<vmem>>, %arg7: memref<1x32xf32, #tpu.memory_space<vmem>>, %arg8: memref<1x32xf32, #tpu.memory_space<vmem>>, %arg9: memref<16x32xbf16, #tpu.memory_space<vmem>>, %arg10: memref<16x32xf32, #tpu.memory_space<vmem>>) attributes {dimension_semantics = [#tpu.dimension_semantics<parallel>, #tpu.dimension_semantics<arbitrary>], iteration_bounds = array<i64: 1, 1>, scalar_prefetch = 0 : i64, scratch_operands = 1 : i64, tpu.core_type = #tpu.core_type<tc>, window_params = [{transform_indices = @transform_0, window_bounds = array<i64: 16, 32>}, {transform_indices = @transform_1, window_bounds = array<i64: 32, 64>}, {transform_indices = @transform_2, window_bounds = array<i64: 1, 64>}, {transform_indices = @transform_3, window_bounds = array<i64: 64, 32>}, {pipeline_mode = #tpu.pipeline_mode<synchronous>, transform_indices = @transform_4, window_bounds = array<i64: 1, 32>}, {pipeline_mode = #tpu.pipeline_mode<synchronous>, transform_indices = @transform_5, window_bounds = array<i64: 1, 32>}, {pipeline_mode = #tpu.pipeline_mode<synchronous>, transform_indices = @transform_6, window_bounds = array<i64: 1, 32>}, {transform_indices = @transform_7, window_bounds = array<i64: 16, 32>}]} {
    %c0_i32 = arith.constant 0 : i32
    %0 = arith.cmpi eq, %arg1, %c0_i32 : i32
    %1 = arith.extui %0 : i1 to i32
    %c0_i32_0 = arith.constant 0 : i32
    %2 = arith.cmpi ne, %1, %c0_i32_0 : i32
    scf.if %2 {
      %cst_16 = arith.constant 0.000000e+00 : f32
      %20 = vector.broadcast %cst_16 : f32 to vector<16x32xf32>
      %c0_17 = arith.constant 0 : index
      %c0_18 = arith.constant 0 : index
      %21 = vector.load %arg10[%c0_17, %c0_18] : memref<16x32xf32, #tpu.memory_space<vmem>>, vector<16x32xf32>
      tpu.vector_store %arg10[%c0_17, %c0_18], %20 {strides = array<i32>} : memref<16x32xf32, #tpu.memory_space<vmem>>, vector<16x32xf32>,
    } else {
    }
    %c0 = arith.constant 0 : index
    %c0_1 = arith.constant 0 : index
    %3 = vector.load %arg2[%c0, %c0_1] : memref<16x32xbf16, #tpu.memory_space<vmem>>, vector<16x32xbf16>
    %c0_2 = arith.constant 0 : index
    %c0_3 = arith.constant 0 : index
    %4 = vector.load %arg3[%c0_2, %c0_3] : memref<32x64xbf16, #tpu.memory_space<vmem>>, vector<32x64xbf16>
    %cst = arith.constant dense<0.000000e+00> : vector<16x64xf32>
    %5 = tpu.matmul %3, %4, %cst {dimension_numbers = #tpu.dot_dimension_numbers<[1], [0], [0], [1], [0, 0, 1, 1], [], []>} : vector<16x32xbf16>, vector<32x64xbf16>, vector<16x64xf32> -> vector<16x64xf32>
    %c0_4 = arith.constant 0 : index
    %c0_5 = arith.constant 0 : index
    %6 = vector.load %arg4[%c0_4, %c0_5] : memref<1x64xf32, #tpu.memory_space<vmem>>, vector<1x64xf32>
    %7 = vector.broadcast %6 : vector<1x64xf32> to vector<16x64xf32>
    %8 = arith.addf %5, %7 : vector<16x64xf32>
    %cst_6 = arith.constant 0.000000e+00 : f32
    %9 = vector.broadcast %cst_6 : f32 to vector<16x64xf32>
    %10 = arith.maximumf %8, %9 : vector<16x64xf32>
    %c0_7 = arith.constant 0 : index
    %c0_8 = arith.constant 0 : index
    %11 = vector.load %arg10[%c0_7, %c0_8] : memref<16x32xf32, #tpu.memory_space<vmem>>, vector<16x32xf32>
    %12 = arith.truncf %10 : vector<16x64xf32> to vector<16x64xbf16>
    %c0_9 = arith.constant 0 : index
    %c0_10 = arith.constant 0 : index
    %13 = vector.load %arg5[%c0_9, %c0_10] : memref<64x32xbf16, #tpu.memory_space<vmem>>, vector<64x32xbf16>
    %cst_11 = arith.constant dense<0.000000e+00> : vector<16x32xf32>
    %14 = tpu.matmul %12, %13, %cst_11 {dimension_numbers = #tpu.dot_dimension_numbers<[1], [0], [0], [1], [0, 0, 1, 1], [], []>} : vector<16x64xbf16>, vector<64x32xbf16>, vector<16x32xf32> -> vector<16x32xf32>
    %15 = arith.addf %11, %14 : vector<16x32xf32>
    %c0_12 = arith.constant 0 : index
    %c0_13 = arith.constant 0 : index
    %16 = vector.load %arg10[%c0_12, %c0_13] : memref<16x32xf32, #tpu.memory_space<vmem>>, vector<16x32xf32>
    tpu.vector_store %arg10[%c0_12, %c0_13], %15 {strides = array<i32>} : memref<16x32xf32, #tpu.memory_space<vmem>>, vector<16x32xf32>,
    %c0_i32_14 = arith.constant 0 : i32
    %17 = arith.cmpi eq, %arg1, %c0_i32_14 : i32
    %18 = arith.extui %17 : i1 to i32
    %c0_i32_15 = arith.constant 0 : i32
    %19 = arith.cmpi ne, %18, %c0_i32_15 : i32
    scf.if %19 {
      %c0_16 = arith.constant 0 : index
      %c0_17 = arith.constant 0 : index
      %20 = vector.load %arg10[%c0_16, %c0_17] : memref<16x32xf32, #tpu.memory_space<vmem>>, vector<16x32xf32>
      %c0_18 = arith.constant 0 : index
      %c0_19 = arith.constant 0 : index
      %21 = vector.load %arg6[%c0_18, %c0_19] : memref<1x32xf32, #tpu.memory_space<vmem>>, vector<1x32xf32>
      %22 = vector.broadcast %21 : vector<1x32xf32> to vector<16x32xf32>
      %23 = arith.addf %20, %22 : vector<16x32xf32>
      %c0_20 = arith.constant 0 : index
      %c0_21 = arith.constant 0 : index
      %24 = vector.load %arg2[%c0_20, %c0_21] : memref<16x32xbf16, #tpu.memory_space<vmem>>, vector<16x32xbf16>
      %25 = arith.extf %24 : vector<16x32xbf16> to vector<16x32xf32>
      %26 = arith.addf %23, %25 : vector<16x32xf32>
      %cst_22 = arith.constant dense<0.000000e+00> : vector<16xf32>
      %27 = vector.multi_reduction <add>, %26, %cst_22 [1] : vector<16x32xf32> to vector<16xf32>
      %28 = vector.shape_cast %27 : vector<16xf32> to vector<16x1xf32>
      %cst_23 = arith.constant 3.200000e+01 : f32
      %29 = vector.broadcast %cst_23 : f32 to vector<16x1xf32>
      %30 = arith.divf %28, %29 : vector<16x1xf32>
      %31 = vector.broadcast %30 : vector<16x1xf32> to vector<16x32xf32>
      %32 = arith.subf %26, %31 : vector<16x32xf32>
      %33 = arith.mulf %32, %32 : vector<16x32xf32>
      %cst_24 = arith.constant dense<0.000000e+00> : vector<16xf32>
      %34 = vector.multi_reduction <add>, %33, %cst_24 [1] : vector<16x32xf32> to vector<16xf32>
      %35 = vector.shape_cast %34 : vector<16xf32> to vector<16x1xf32>
      %cst_25 = arith.constant 3.200000e+01 : f32
      %36 = vector.broadcast %cst_25 : f32 to vector<16x1xf32>
      %37 = arith.divf %35, %36 : vector<16x1xf32>
      %38 = vector.broadcast %30 : vector<16x1xf32> to vector<16x32xf32>
      %39 = arith.subf %26, %38 : vector<16x32xf32>
      %cst_26 = arith.constant 9.99999974E-6 : f32
      %40 = vector.broadcast %cst_26 : f32 to vector<16x1xf32>
      %41 = arith.addf %37, %40 : vector<16x1xf32>
      %42 = math.rsqrt %41 : vector<16x1xf32>
      %43 = vector.broadcast %42 : vector<16x1xf32> to vector<16x32xf32>
      %44 = arith.mulf %39, %43 : vector<16x32xf32>
      %c0_27 = arith.constant 0 : index
      %c0_28 = arith.constant 0 : index
      %45 = vector.load %arg7[%c0_27, %c0_28] : memref<1x32xf32, #tpu.memory_space<vmem>>, vector<1x32xf32>
      %46 = vector.broadcast %45 : vector<1x32xf32> to vector<16x32xf32>
      %47 = arith.mulf %44, %46 : vector<16x32xf32>
      %c0_29 = arith.constant 0 : index
      %c0_30 = arith.constant 0 : index
      %48 = vector.load %arg8[%c0_29, %c0_30] : memref<1x32xf32, #tpu.memory_space<vmem>>, vector<1x32xf32>
      %49 = vector.broadcast %48 : vector<1x32xf32> to vector<16x32xf32>
      %50 = arith.addf %47, %49 : vector<16x32xf32>
      %51 = arith.truncf %50 : vector<16x32xf32> to vector<16x32xbf16>
      %c0_31 = arith.constant 0 : index
      %c0_32 = arith.constant 0 : index
      %52 = vector.load %arg9[%c0_31, %c0_32] : memref<16x32xbf16, #tpu.memory_space<vmem>>, vector<16x32xbf16>
      tpu.vector_store %arg9[%c0_31, %c0_32], %51 {strides = array<i32>} : memref<16x32xbf16, #tpu.memory_space<vmem>>, vector<16x32xbf16>,
    } else {
    }
    return
  }
  func.func @transform_0(%arg0: i32, %arg1: i32) -> (i32, i32) {
    %c0_i32 = arith.constant 0 : i32
    %c0_i32_0 = arith.constant 0 : i32
    return %arg0, %c0_i32 : i32, i32
  }
  func.func @transform_1(%arg0: i32, %arg1: i32) -> (i32, i32) {
    %c0_i32 = arith.constant 0 : i32
    %c0_i32_0 = arith.constant 0 : i32
    return %c0_i32, %arg1 : i32, i32
  }
  func.func @transform_2(%arg0: i32, %arg1: i32) -> (i32, i32) {
    %c0_i32 = arith.constant 0 : i32
    %c0_i32_0 = arith.constant 0 : i32
    return %c0_i32, %arg1 : i32, i32
  }
  func.func @transform_3(%arg0: i32, %arg1: i32) -> (i32, i32) {
    %c0_i32 = arith.constant 0 : i32
    %c0_i32_0 = arith.constant 0 : i32
    return %arg1, %c0_i32 : i32, i32
  }
  func.func @transform_4(%arg0: i32, %arg1: i32) -> (i32, i32) {
    %c0_i32 = arith.constant 0 : i32
    %c0_i32_0 = arith.constant 0 : i32
    %c0_i32_1 = arith.constant 0 : i32
    return %c0_i32, %c0_i32_0 : i32, i32
  }
  func.func @transform_5(%arg0: i32, %arg1: i32) -> (i32, i32) {
    %c0_i32 = arith.constant 0 : i32
    %c0_i32_0 = arith.constant 0 : i32
    %c0_i32_1 = arith.constant 0 : i32
    return %c0_i32, %c0_i32_0 : i32, i32
  }
  func.func @transform_6(%arg0: i32, %arg1: i32) -> (i32, i32) {
    %c0_i32 = arith.constant 0 : i32
    %c0_i32_0 = arith.constant 0 : i32
    %c0_i32_1 = arith.constant 0 : i32
    return %c0_i32, %c0_i32_0 : i32, i32
  }
  func.func @transform_7(%arg0: i32, %arg1: i32) -> (i32, i32) {
    %c0_i32 = arith.constant 0 : i32
    %c0_i32_0 = arith.constant 0 : i32
    return %arg0, %c0_i32 : i32, i32
  }
}

module attributes {stable_mosaic.version = 11 : i64} {
  func.func @_linear_kernel(%arg0: i32, %arg1: i32, %arg2: i32, %arg3: memref<16x32xbf16, #tpu.memory_space<vmem>>, %arg4: memref<32x64xbf16, #tpu.memory_space<vmem>>, %arg5: memref<1x64xf32, #tpu.memory_space<vmem>>, %arg6: memref<16x64xbf16, #tpu.memory_space<vmem>>, %arg7: memref<16x64xf32, #tpu.memory_space<vmem>>) attributes {dimension_semantics = [#tpu.dimension_semantics<parallel>, #tpu.dimension_semantics<parallel>, #tpu.dimension_semantics<arbitrary>], iteration_bounds = array<i64: 1, 1, 1>, scalar_prefetch = 0 : i64, scratch_operands = 1 : i64, tpu.core_type = #tpu.core_type<tc>, window_params = [{transform_indices = @transform_0, window_bounds = array<i64: 16, 32>}, {transform_indices = @transform_1, window_bounds = array<i64: 32, 64>}, {transform_indices = @transform_2, window_bounds = array<i64: 1, 64>}, {transform_indices = @transform_3, window_bounds = array<i64: 16, 64>}]} {
    %c0_i32 = arith.constant 0 : i32
    %0 = arith.cmpi eq, %arg2, %c0_i32 : i32
    %1 = arith.extui %0 : i1 to i32
    %c0_i32_0 = arith.constant 0 : i32
    %2 = arith.cmpi ne, %1, %c0_i32_0 : i32
    scf.if %2 {
      %cst_10 = arith.constant 0.000000e+00 : f32
      %12 = vector.broadcast %cst_10 : f32 to vector<16x64xf32>
      %c0_11 = arith.constant 0 : index
      %c0_12 = arith.constant 0 : index
      %13 = vector.load %arg7[%c0_11, %c0_12] : memref<16x64xf32, #tpu.memory_space<vmem>>, vector<16x64xf32>
      tpu.vector_store %arg7[%c0_11, %c0_12], %12 {strides = array<i32>} : memref<16x64xf32, #tpu.memory_space<vmem>>, vector<16x64xf32>,
    } else {
    }
    %c0 = arith.constant 0 : index
    %c0_1 = arith.constant 0 : index
    %3 = vector.load %arg7[%c0, %c0_1] : memref<16x64xf32, #tpu.memory_space<vmem>>, vector<16x64xf32>
    %c0_2 = arith.constant 0 : index
    %c0_3 = arith.constant 0 : index
    %4 = vector.load %arg3[%c0_2, %c0_3] : memref<16x32xbf16, #tpu.memory_space<vmem>>, vector<16x32xbf16>
    %c0_4 = arith.constant 0 : index
    %c0_5 = arith.constant 0 : index
    %5 = vector.load %arg4[%c0_4, %c0_5] : memref<32x64xbf16, #tpu.memory_space<vmem>>, vector<32x64xbf16>
    %cst = arith.constant dense<0.000000e+00> : vector<16x64xf32>
    %6 = tpu.matmul %4, %5, %cst {dimension_numbers = #tpu.dot_dimension_numbers<[1], [0], [0], [1], [0, 0, 1, 1], [], []>} : vector<16x32xbf16>, vector<32x64xbf16>, vector<16x64xf32> -> vector<16x64xf32>
    %7 = arith.addf %3, %6 : vector<16x64xf32>
    %c0_6 = arith.constant 0 : index
    %c0_7 = arith.constant 0 : index
    %8 = vector.load %arg7[%c0_6, %c0_7] : memref<16x64xf32, #tpu.memory_space<vmem>>, vector<16x64xf32>
    tpu.vector_store %arg7[%c0_6, %c0_7], %7 {strides = array<i32>} : memref<16x64xf32, #tpu.memory_space<vmem>>, vector<16x64xf32>,
    %c0_i32_8 = arith.constant 0 : i32
    %9 = arith.cmpi eq, %arg2, %c0_i32_8 : i32
    %10 = arith.extui %9 : i1 to i32
    %c0_i32_9 = arith.constant 0 : i32
    %11 = arith.cmpi ne, %10, %c0_i32_9 : i32
    scf.if %11 {
      %c0_10 = arith.constant 0 : index
      %c0_11 = arith.constant 0 : index
      %12 = vector.load %arg7[%c0_10, %c0_11] : memref<16x64xf32, #tpu.memory_space<vmem>>, vector<16x64xf32>
      %c0_12 = arith.constant 0 : index
      %c0_13 = arith.constant 0 : index
      %13 = vector.load %arg5[%c0_12, %c0_13] : memref<1x64xf32, #tpu.memory_space<vmem>>, vector<1x64xf32>
      %14 = vector.broadcast %13 : vector<1x64xf32> to vector<16x64xf32>
      %15 = arith.addf %12, %14 : vector<16x64xf32>
      %16 = arith.truncf %15 : vector<16x64xf32> to vector<16x64xbf16>
      %c0_14 = arith.constant 0 : index
      %c0_15 = arith.constant 0 : index
      %17 = vector.load %arg6[%c0_14, %c0_15] : memref<16x64xbf16, #tpu.memory_space<vmem>>, vector<16x64xbf16>
      tpu.vector_store %arg6[%c0_14, %c0_15], %16 {strides = array<i32>} : memref<16x64xbf16, #tpu.memory_space<vmem>>, vector<16x64xbf16>,
    } else {
    }
    return
  }
  func.func @transform_0(%arg0: i32, %arg1: i32, %arg2: i32) -> (i32, i32) {
    %c0_i32 = arith.constant 0 : i32
    return %arg0, %arg2 : i32, i32
  }
  func.func @transform_1(%arg0: i32, %arg1: i32, %arg2: i32) -> (i32, i32) {
    %c0_i32 = arith.constant 0 : i32
    return %arg2, %arg1 : i32, i32
  }
  func.func @transform_2(%arg0: i32, %arg1: i32, %arg2: i32) -> (i32, i32) {
    %c0_i32 = arith.constant 0 : i32
    %c0_i32_0 = arith.constant 0 : i32
    return %c0_i32, %arg1 : i32, i32
  }
  func.func @transform_3(%arg0: i32, %arg1: i32, %arg2: i32) -> (i32, i32) {
    %c0_i32 = arith.constant 0 : i32
    return %arg0, %arg1 : i32, i32
  }
}

module attributes {stable_mosaic.version = 11 : i64} {
  func.func @_linear_kernel(%arg0: i32, %arg1: i32, %arg2: i32, %arg3: memref<16x32xbf16, #tpu.memory_space<vmem>>, %arg4: memref<32x32xbf16, #tpu.memory_space<vmem>>, %arg5: memref<1x32xf32, #tpu.memory_space<vmem>>, %arg6: memref<16x32xbf16, #tpu.memory_space<vmem>>, %arg7: memref<16x32xf32, #tpu.memory_space<vmem>>) attributes {dimension_semantics = [#tpu.dimension_semantics<parallel>, #tpu.dimension_semantics<parallel>, #tpu.dimension_semantics<arbitrary>], iteration_bounds = array<i64: 1, 1, 1>, scalar_prefetch = 0 : i64, scratch_operands = 1 : i64, tpu.core_type = #tpu.core_type<tc>, window_params = [{transform_indices = @transform_0, window_bounds = array<i64: 16, 32>}, {transform_indices = @transform_1, window_bounds = array<i64: 32, 32>}, {transform_indices = @transform_2, window_bounds = array<i64: 1, 32>}, {transform_indices = @transform_3, window_bounds = array<i64: 16, 32>}]} {
    %c0_i32 = arith.constant 0 : i32
    %0 = arith.cmpi eq, %arg2, %c0_i32 : i32
    %1 = arith.extui %0 : i1 to i32
    %c0_i32_0 = arith.constant 0 : i32
    %2 = arith.cmpi ne, %1, %c0_i32_0 : i32
    scf.if %2 {
      %cst_10 = arith.constant 0.000000e+00 : f32
      %12 = vector.broadcast %cst_10 : f32 to vector<16x32xf32>
      %c0_11 = arith.constant 0 : index
      %c0_12 = arith.constant 0 : index
      %13 = vector.load %arg7[%c0_11, %c0_12] : memref<16x32xf32, #tpu.memory_space<vmem>>, vector<16x32xf32>
      tpu.vector_store %arg7[%c0_11, %c0_12], %12 {strides = array<i32>} : memref<16x32xf32, #tpu.memory_space<vmem>>, vector<16x32xf32>,
    } else {
    }
    %c0 = arith.constant 0 : index
    %c0_1 = arith.constant 0 : index
    %3 = vector.load %arg7[%c0, %c0_1] : memref<16x32xf32, #tpu.memory_space<vmem>>, vector<16x32xf32>
    %c0_2 = arith.constant 0 : index
    %c0_3 = arith.constant 0 : index
    %4 = vector.load %arg3[%c0_2, %c0_3] : memref<16x32xbf16, #tpu.memory_space<vmem>>, vector<16x32xbf16>
    %c0_4 = arith.constant 0 : index
    %c0_5 = arith.constant 0 : index
    %5 = vector.load %arg4[%c0_4, %c0_5] : memref<32x32xbf16, #tpu.memory_space<vmem>>, vector<32x32xbf16>
    %cst = arith.constant dense<0.000000e+00> : vector<16x32xf32>
    %6 = tpu.matmul %4, %5, %cst {dimension_numbers = #tpu.dot_dimension_numbers<[1], [0], [0], [1], [0, 0, 1, 1], [], []>} : vector<16x32xbf16>, vector<32x32xbf16>, vector<16x32xf32> -> vector<16x32xf32>
    %7 = arith.addf %3, %6 : vector<16x32xf32>
    %c0_6 = arith.constant 0 : index
    %c0_7 = arith.constant 0 : index
    %8 = vector.load %arg7[%c0_6, %c0_7] : memref<16x32xf32, #tpu.memory_space<vmem>>, vector<16x32xf32>
    tpu.vector_store %arg7[%c0_6, %c0_7], %7 {strides = array<i32>} : memref<16x32xf32, #tpu.memory_space<vmem>>, vector<16x32xf32>,
    %c0_i32_8 = arith.constant 0 : i32
    %9 = arith.cmpi eq, %arg2, %c0_i32_8 : i32
    %10 = arith.extui %9 : i1 to i32
    %c0_i32_9 = arith.constant 0 : i32
    %11 = arith.cmpi ne, %10, %c0_i32_9 : i32
    scf.if %11 {
      %c0_10 = arith.constant 0 : index
      %c0_11 = arith.constant 0 : index
      %12 = vector.load %arg7[%c0_10, %c0_11] : memref<16x32xf32, #tpu.memory_space<vmem>>, vector<16x32xf32>
      %c0_12 = arith.constant 0 : index
      %c0_13 = arith.constant 0 : index
      %13 = vector.load %arg5[%c0_12, %c0_13] : memref<1x32xf32, #tpu.memory_space<vmem>>, vector<1x32xf32>
      %14 = vector.broadcast %13 : vector<1x32xf32> to vector<16x32xf32>
      %15 = arith.addf %12, %14 : vector<16x32xf32>
      %16 = arith.truncf %15 : vector<16x32xf32> to vector<16x32xbf16>
      %c0_14 = arith.constant 0 : index
      %c0_15 = arith.constant 0 : index
      %17 = vector.load %arg6[%c0_14, %c0_15] : memref<16x32xbf16, #tpu.memory_space<vmem>>, vector<16x32xbf16>
      tpu.vector_store %arg6[%c0_14, %c0_15], %16 {strides = array<i32>} : memref<16x32xbf16, #tpu.memory_space<vmem>>, vector<16x32xbf16>,
    } else {
    }
    return
  }
  func.func @transform_0(%arg0: i32, %arg1: i32, %arg2: i32) -> (i32, i32) {
    %c0_i32 = arith.constant 0 : i32
    return %arg0, %arg2 : i32, i32
  }
  func.func @transform_1(%arg0: i32, %arg1: i32, %arg2: i32) -> (i32, i32) {
    %c0_i32 = arith.constant 0 : i32
    return %arg2, %arg1 : i32, i32
  }
  func.func @transform_2(%arg0: i32, %arg1: i32, %arg2: i32) -> (i32, i32) {
    %c0_i32 = arith.constant 0 : i32
    %c0_i32_0 = arith.constant 0 : i32
    return %c0_i32, %arg1 : i32, i32
  }
  func.func @transform_3(%arg0: i32, %arg1: i32, %arg2: i32) -> (i32, i32) {
    %c0_i32 = arith.constant 0 : i32
    return %arg0, %arg1 : i32, i32
  }
}

module attributes {stable_mosaic.version = 11 : i64} {
  func.func @_mha_kernel(%arg0: i32, %arg1: i32, %arg2: memref<1x1x8xf32, #tpu.memory_space<vmem>>, %arg3: memref<8x8xf32, #tpu.memory_space<vmem>>, %arg4: memref<1x8x96xbf16, #tpu.memory_space<vmem>>, %arg5: memref<1x8x96xbf16, #tpu.memory_space<vmem>>, %arg6: memref<1x8x32xbf16, #tpu.memory_space<vmem>>) attributes {dimension_semantics = [#tpu.dimension_semantics<parallel>, #tpu.dimension_semantics<parallel>], iteration_bounds = array<i64: 2, 1>, scalar_prefetch = 0 : i64, scratch_operands = 0 : i64, tpu.core_type = #tpu.core_type<tc>, window_params = [{transform_indices = @transform_0, window_bounds = array<i64: 1, 1, 8>}, {transform_indices = @transform_1, window_bounds = array<i64: 8, 8>}, {transform_indices = @transform_2, window_bounds = array<i64: 1, 8, 96>}, {transform_indices = @transform_3, window_bounds = array<i64: 1, 8, 96>}, {transform_indices = @transform_4, window_bounds = array<i64: 1, 8, 32>}]} {
    %c0 = arith.constant 0 : index
    %c0_0 = arith.constant 0 : index
    %c0_1 = arith.constant 0 : index
    %0 = vector.load %arg2[%c0, %c0_0, %c0_1] : memref<1x1x8xf32, #tpu.memory_space<vmem>>, vector<1x1x8xf32>
    %1 = vector.shape_cast %0 : vector<1x1x8xf32> to vector<1x8xf32>
    %c0_2 = arith.constant 0 : index
    %c0_3 = arith.constant 0 : index
    %2 = vector.load %arg3[%c0_2, %c0_3] : memref<8x8xf32, #tpu.memory_space<vmem>>, vector<8x8xf32>
    %3 = vector.broadcast %1 : vector<1x8xf32> to vector<8x8xf32>
    %4 = arith.addf %3, %2 : vector<8x8xf32>
    %c0_4 = arith.constant 0 : index
    %c0_5 = arith.constant 0 : index
    %c0_6 = arith.constant 0 : index
    %5 = vector.load %arg4[%c0_4, %c0_5, %c0_6] : memref<1x8x96xbf16, #tpu.memory_space<vmem>>, vector<1x8x8xbf16>
    %6 = vector.shape_cast %5 : vector<1x8x8xbf16> to vector<8x8xbf16>
    %cst = arith.constant 3.535160e-01 : bf16
    %7 = vector.broadcast %cst : bf16 to vector<8x8xbf16>
    %8 = arith.mulf %6, %7 : vector<8x8xbf16>
    %c0_7 = arith.constant 0 : index
    %c0_8 = arith.constant 0 : index
    %c32 = arith.constant 32 : index
    %9 = vector.load %arg5[%c0_7, %c0_8, %c32] : memref<1x8x96xbf16, #tpu.memory_space<vmem>>, vector<1x8x8xbf16>
    %10 = vector.shape_cast %9 : vector<1x8x8xbf16> to vector<8x8xbf16>
    %c0_9 = arith.constant 0 : index
    %c0_10 = arith.constant 0 : index
    %c64 = arith.constant 64 : index
    %11 = vector.load %arg5[%c0_9, %c0_10, %c64] : memref<1x8x96xbf16, #tpu.memory_space<vmem>>, vector<1x8x8xbf16>
    %12 = vector.shape_cast %11 : vector<1x8x8xbf16> to vector<8x8xbf16>
    %cst_11 = arith.constant dense<0.000000e+00> : vector<8x8xf32>
    %13 = tpu.matmul %8, %10, %cst_11 {dimension_numbers = #tpu.dot_dimension_numbers<[1], [1], [0], [0], [0, 0, 1, 0], [], []>} : vector<8x8xbf16>, vector<8x8xbf16>, vector<8x8xf32> -> vector<8x8xf32>
    %14 = arith.addf %13, %4 : vector<8x8xf32>
    %cst_12 = arith.constant dense<0xFF800000> : vector<8xf32>
    %15 = vector.multi_reduction <maximumf>, %14, %cst_12 [1] : vector<8x8xf32> to vector<8xf32>
    %16 = vector.shape_cast %15 : vector<8xf32> to vector<8x1xf32>
    %17 = vector.broadcast %16 : vector<8x1xf32> to vector<8x8xf32>
    %18 = arith.subf %14, %17 : vector<8x8xf32>
    %19 = math.exp %18 : vector<8x8xf32>
    %cst_13 = arith.constant dense<0.000000e+00> : vector<8xf32>
    %20 = vector.multi_reduction <add>, %19, %cst_13 [1] : vector<8x8xf32> to vector<8xf32>
    %21 = vector.shape_cast %20 : vector<8xf32> to vector<8x1xf32>
    %22 = tpu.reciprocal %21 {approx = true} : vector<8x1xf32> -> vector<8x1xf32>
    %23 = vector.broadcast %22 : vector<8x1xf32> to vector<8x8xf32>
    %24 = arith.mulf %19, %23 : vector<8x8xf32>
    %25 = arith.truncf %24 : vector<8x8xf32> to vector<8x8xbf16>
    %cst_14 = arith.constant dense<0.000000e+00> : vector<8x8xf32>
    %26 = tpu.matmul %25, %12, %cst_14 {dimension_numbers = #tpu.dot_dimension_numbers<[1], [0], [0], [1], [0, 0, 1, 1], [], []>} : vector<8x8xbf16>, vector<8x8xbf16>, vector<8x8xf32> -> vector<8x8xf32>
    %27 = arith.truncf %26 : vector<8x8xf32> to vector<8x8xbf16>
    %c0_15 = arith.constant 0 : index
    %c0_16 = arith.constant 0 : index
    %c0_17 = arith.constant 0 : index
    %28 = vector.load %arg6[%c0_15, %c0_16, %c0_17] : memref<1x8x32xbf16, #tpu.memory_space<vmem>>, vector<1x8x8xbf16>
    %29 = vector.shape_cast %28 : vector<1x8x8xbf16> to vector<8x8xbf16>
    %30 = vector.shape_cast %27 : vector<8x8xbf16> to vector<1x8x8xbf16>
    tpu.vector_store %arg6[%c0_15, %c0_16, %c0_17], %30 {strides = array<i32>} : memref<1x8x32xbf16, #tpu.memory_space<vmem>>, vector<1x8x8xbf16>,
    %c0_18 = arith.constant 0 : index
    %c0_19 = arith.constant 0 : index
    %c8 = arith.constant 8 : index
    %31 = vector.load %arg4[%c0_18, %c0_19, %c8] : memref<1x8x96xbf16, #tpu.memory_space<vmem>>, vector<1x8x8xbf16>
    %32 = vector.shape_cast %31 : vector<1x8x8xbf16> to vector<8x8xbf16>
    %cst_20 = arith.constant 3.535160e-01 : bf16
    %33 = vector.broadcast %cst_20 : bf16 to vector<8x8xbf16>
    %34 = arith.mulf %32, %33 : vector<8x8xbf16>
    %c0_21 = arith.constant 0 : index
    %c0_22 = arith.constant 0 : index
    %c40 = arith.constant 40 : index
    %35 = vector.load %arg5[%c0_21, %c0_22, %c40] : memref<1x8x96xbf16, #tpu.memory_space<vmem>>, vector<1x8x8xbf16>
    %36 = vector.shape_cast %35 : vector<1x8x8xbf16> to vector<8x8xbf16>
    %c0_23 = arith.constant 0 : index
    %c0_24 = arith.constant 0 : index
    %c72 = arith.constant 72 : index
    %37 = vector.load %arg5[%c0_23, %c0_24, %c72] : memref<1x8x96xbf16, #tpu.memory_space<vmem>>, vector<1x8x8xbf16>
    %38 = vector.shape_cast %37 : vector<1x8x8xbf16> to vector<8x8xbf16>
    %cst_25 = arith.constant dense<0.000000e+00> : vector<8x8xf32>
    %39 = tpu.matmul %34, %36, %cst_25 {dimension_numbers = #tpu.dot_dimension_numbers<[1], [1], [0], [0], [0, 0, 1, 0], [], []>} : vector<8x8xbf16>, vector<8x8xbf16>, vector<8x8xf32> -> vector<8x8xf32>
    %40 = arith.addf %39, %4 : vector<8x8xf32>
    %cst_26 = arith.constant dense<0xFF800000> : vector<8xf32>
    %41 = vector.multi_reduction <maximumf>, %40, %cst_26 [1] : vector<8x8xf32> to vector<8xf32>
    %42 = vector.shape_cast %41 : vector<8xf32> to vector<8x1xf32>
    %43 = vector.broadcast %42 : vector<8x1xf32> to vector<8x8xf32>
    %44 = arith.subf %40, %43 : vector<8x8xf32>
    %45 = math.exp %44 : vector<8x8xf32>
    %cst_27 = arith.constant dense<0.000000e+00> : vector<8xf32>
    %46 = vector.multi_reduction <add>, %45, %cst_27 [1] : vector<8x8xf32> to vector<8xf32>
    %47 = vector.shape_cast %46 : vector<8xf32> to vector<8x1xf32>
    %48 = tpu.reciprocal %47 {approx = true} : vector<8x1xf32> -> vector<8x1xf32>
    %49 = vector.broadcast %48 : vector<8x1xf32> to vector<8x8xf32>
    %50 = arith.mulf %45, %49 : vector<8x8xf32>
    %51 = arith.truncf %50 : vector<8x8xf32> to vector<8x8xbf16>
    %cst_28 = arith.constant dense<0.000000e+00> : vector<8x8xf32>
    %52 = tpu.matmul %51, %38, %cst_28 {dimension_numbers = #tpu.dot_dimension_numbers<[1], [0], [0], [1], [0, 0, 1, 1], [], []>} : vector<8x8xbf16>, vector<8x8xbf16>, vector<8x8xf32> -> vector<8x8xf32>
    %53 = arith.truncf %52 : vector<8x8xf32> to vector<8x8xbf16>
    %c0_29 = arith.constant 0 : index
    %c0_30 = arith.constant 0 : index
    %c8_31 = arith.constant 8 : index
    %54 = vector.load %arg6[%c0_29, %c0_30, %c8_31] : memref<1x8x32xbf16, #tpu.memory_space<vmem>>, vector<1x8x8xbf16>
    %55 = vector.shape_cast %54 : vector<1x8x8xbf16> to vector<8x8xbf16>
    %56 = vector.shape_cast %53 : vector<8x8xbf16> to vector<1x8x8xbf16>
    tpu.vector_store %arg6[%c0_29, %c0_30, %c8_31], %56 {strides = array<i32>} : memref<1x8x32xbf16, #tpu.memory_space<vmem>>, vector<1x8x8xbf16>,
    %c0_32 = arith.constant 0 : index
    %c0_33 = arith.constant 0 : index
    %c16 = arith.constant 16 : index
    %57 = vector.load %arg4[%c0_32, %c0_33, %c16] : memref<1x8x96xbf16, #tpu.memory_space<vmem>>, vector<1x8x8xbf16>
    %58 = vector.shape_cast %57 : vector<1x8x8xbf16> to vector<8x8xbf16>
    %cst_34 = arith.constant 3.535160e-01 : bf16
    %59 = vector.broadcast %cst_34 : bf16 to vector<8x8xbf16>
    %60 = arith.mulf %58, %59 : vector<8x8xbf16>
    %c0_35 = arith.constant 0 : index
    %c0_36 = arith.constant 0 : index
    %c48 = arith.constant 48 : index
    %61 = vector.load %arg5[%c0_35, %c0_36, %c48] : memref<1x8x96xbf16, #tpu.memory_space<vmem>>, vector<1x8x8xbf16>
    %62 = vector.shape_cast %61 : vector<1x8x8xbf16> to vector<8x8xbf16>
    %c0_37 = arith.constant 0 : index
    %c0_38 = arith.constant 0 : index
    %c80 = arith.constant 80 : index
    %63 = vector.load %arg5[%c0_37, %c0_38, %c80] : memref<1x8x96xbf16, #tpu.memory_space<vmem>>, vector<1x8x8xbf16>
    %64 = vector.shape_cast %63 : vector<1x8x8xbf16> to vector<8x8xbf16>
    %cst_39 = arith.constant dense<0.000000e+00> : vector<8x8xf32>
    %65 = tpu.matmul %60, %62, %cst_39 {dimension_numbers = #tpu.dot_dimension_numbers<[1], [1], [0], [0], [0, 0, 1, 0], [], []>} : vector<8x8xbf16>, vector<8x8xbf16>, vector<8x8xf32> -> vector<8x8xf32>
    %66 = arith.addf %65, %4 : vector<8x8xf32>
    %cst_40 = arith.constant dense<0xFF800000> : vector<8xf32>
    %67 = vector.multi_reduction <maximumf>, %66, %cst_40 [1] : vector<8x8xf32> to vector<8xf32>
    %68 = vector.shape_cast %67 : vector<8xf32> to vector<8x1xf32>
    %69 = vector.broadcast %68 : vector<8x1xf32> to vector<8x8xf32>
    %70 = arith.subf %66, %69 : vector<8x8xf32>
    %71 = math.exp %70 : vector<8x8xf32>
    %cst_41 = arith.constant dense<0.000000e+00> : vector<8xf32>
    %72 = vector.multi_reduction <add>, %71, %cst_41 [1] : vector<8x8xf32> to vector<8xf32>
    %73 = vector.shape_cast %72 : vector<8xf32> to vector<8x1xf32>
    %74 = tpu.reciprocal %73 {approx = true} : vector<8x1xf32> -> vector<8x1xf32>
    %75 = vector.broadcast %74 : vector<8x1xf32> to vector<8x8xf32>
    %76 = arith.mulf %71, %75 : vector<8x8xf32>
    %77 = arith.truncf %76 : vector<8x8xf32> to vector<8x8xbf16>
    %cst_42 = arith.constant dense<0.000000e+00> : vector<8x8xf32>
    %78 = tpu.matmul %77, %64, %cst_42 {dimension_numbers = #tpu.dot_dimension_numbers<[1], [0], [0], [1], [0, 0, 1, 1], [], []>} : vector<8x8xbf16>, vector<8x8xbf16>, vector<8x8xf32> -> vector<8x8xf32>
    %79 = arith.truncf %78 : vector<8x8xf32> to vector<8x8xbf16>
    %c0_43 = arith.constant 0 : index
    %c0_44 = arith.constant 0 : index
    %c16_45 = arith.constant 16 : index
    %80 = vector.load %arg6[%c0_43, %c0_44, %c16_45] : memref<1x8x32xbf16, #tpu.memory_space<vmem>>, vector<1x8x8xbf16>
    %81 = vector.shape_cast %80 : vector<1x8x8xbf16> to vector<8x8xbf16>
    %82 = vector.shape_cast %79 : vector<8x8xbf16> to vector<1x8x8xbf16>
    tpu.vector_store %arg6[%c0_43, %c0_44, %c16_45], %82 {strides = array<i32>} : memref<1x8x32xbf16, #tpu.memory_space<vmem>>, vector<1x8x8xbf16>,
    %c0_46 = arith.constant 0 : index
    %c0_47 = arith.constant 0 : index
    %c24 = arith.constant 24 : index
    %83 = vector.load %arg4[%c0_46, %c0_47, %c24] : memref<1x8x96xbf16, #tpu.memory_space<vmem>>, vector<1x8x8xbf16>
    %84 = vector.shape_cast %83 : vector<1x8x8xbf16> to vector<8x8xbf16>
    %cst_48 = arith.constant 3.535160e-01 : bf16
    %85 = vector.broadcast %cst_48 : bf16 to vector<8x8xbf16>
    %86 = arith.mulf %84, %85 : vector<8x8xbf16>
    %c0_49 = arith.constant 0 : index
    %c0_50 = arith.constant 0 : index
    %c56 = arith.constant 56 : index
    %87 = vector.load %arg5[%c0_49, %c0_50, %c56] : memref<1x8x96xbf16, #tpu.memory_space<vmem>>, vector<1x8x8xbf16>
    %88 = vector.shape_cast %87 : vector<1x8x8xbf16> to vector<8x8xbf16>
    %c0_51 = arith.constant 0 : index
    %c0_52 = arith.constant 0 : index
    %c88 = arith.constant 88 : index
    %89 = vector.load %arg5[%c0_51, %c0_52, %c88] : memref<1x8x96xbf16, #tpu.memory_space<vmem>>, vector<1x8x8xbf16>
    %90 = vector.shape_cast %89 : vector<1x8x8xbf16> to vector<8x8xbf16>
    %cst_53 = arith.constant dense<0.000000e+00> : vector<8x8xf32>
    %91 = tpu.matmul %86, %88, %cst_53 {dimension_numbers = #tpu.dot_dimension_numbers<[1], [1], [0], [0], [0, 0, 1, 0], [], []>} : vector<8x8xbf16>, vector<8x8xbf16>, vector<8x8xf32> -> vector<8x8xf32>
    %92 = arith.addf %91, %4 : vector<8x8xf32>
    %cst_54 = arith.constant dense<0xFF800000> : vector<8xf32>
    %93 = vector.multi_reduction <maximumf>, %92, %cst_54 [1] : vector<8x8xf32> to vector<8xf32>
    %94 = vector.shape_cast %93 : vector<8xf32> to vector<8x1xf32>
    %95 = vector.broadcast %94 : vector<8x1xf32> to vector<8x8xf32>
    %96 = arith.subf %92, %95 : vector<8x8xf32>
    %97 = math.exp %96 : vector<8x8xf32>
    %cst_55 = arith.constant dense<0.000000e+00> : vector<8xf32>
    %98 = vector.multi_reduction <add>, %97, %cst_55 [1] : vector<8x8xf32> to vector<8xf32>
    %99 = vector.shape_cast %98 : vector<8xf32> to vector<8x1xf32>
    %100 = tpu.reciprocal %99 {approx = true} : vector<8x1xf32> -> vector<8x1xf32>
    %101 = vector.broadcast %100 : vector<8x1xf32> to vector<8x8xf32>
    %102 = arith.mulf %97, %101 : vector<8x8xf32>
    %103 = arith.truncf %102 : vector<8x8xf32> to vector<8x8xbf16>
    %cst_56 = arith.constant dense<0.000000e+00> : vector<8x8xf32>
    %104 = tpu.matmul %103, %90, %cst_56 {dimension_numbers = #tpu.dot_dimension_numbers<[1], [0], [0], [1], [0, 0, 1, 1], [], []>} : vector<8x8xbf16>, vector<8x8xbf16>, vector<8x8xf32> -> vector<8x8xf32>
    %105 = arith.truncf %104 : vector<8x8xf32> to vector<8x8xbf16>
    %c0_57 = arith.constant 0 : index
    %c0_58 = arith.constant 0 : index
    %c24_59 = arith.constant 24 : index
    %106 = vector.load %arg6[%c0_57, %c0_58, %c24_59] : memref<1x8x32xbf16, #tpu.memory_space<vmem>>, vector<1x8x8xbf16>
    %107 = vector.shape_cast %106 : vector<1x8x8xbf16> to vector<8x8xbf16>
    %108 = vector.shape_cast %105 : vector<8x8xbf16> to vector<1x8x8xbf16>
    tpu.vector_store %arg6[%c0_57, %c0_58, %c24_59], %108 {strides = array<i32>} : memref<1x8x32xbf16, #tpu.memory_space<vmem>>, vector<1x8x8xbf16>,
    return
  }
  func.func @transform_0(%arg0: i32, %arg1: i32) -> (i32, i32, i32) {
    %c0_i32 = arith.constant 0 : i32
    %c0_i32_0 = arith.constant 0 : i32
    %c0_i32_1 = arith.constant 0 : i32
    return %arg0, %c0_i32, %c0_i32_0 : i32, i32, i32
  }
  func.func @transform_1(%arg0: i32, %arg1: i32) -> (i32, i32) {
    %c0_i32 = arith.constant 0 : i32
    %c0_i32_0 = arith.constant 0 : i32
    return %arg1, %c0_i32 : i32, i32
  }
  func.func @transform_2(%arg0: i32, %arg1: i32) -> (i32, i32, i32) {
    %c0_i32 = arith.constant 0 : i32
    %c0_i32_0 = arith.constant 0 : i32
    return %arg0, %arg1, %c0_i32 : i32, i32, i32
  }
  func.func @transform_3(%arg0: i32, %arg1: i32) -> (i32, i32, i32) {
    %c0_i32 = arith.constant 0 : i32
    %c0_i32_0 = arith.constant 0 : i32
    %c0_i32_1 = arith.constant 0 : i32
    return %arg0, %c0_i32, %c0_i32_0 : i32, i32, i32
  }
  func.func @transform_4(%arg0: i32, %arg1: i32) -> (i32, i32, i32) {
    %c0_i32 = arith.constant 0 : i32
    %c0_i32_0 = arith.constant 0 : i32
    return %arg0, %arg1, %c0_i32 : i32, i32, i32
  }
}

module attributes {stable_mosaic.version = 11 : i64} {
  func.func @_mha_kernel(%arg0: i32, %arg1: i32, %arg2: memref<1x1x8xf32, #tpu.memory_space<vmem>>, %arg3: memref<1x8x32xbf16, #tpu.memory_space<vmem>>, %arg4: memref<1x8x64xbf16, #tpu.memory_space<vmem>>, %arg5: memref<1x8x32xbf16, #tpu.memory_space<vmem>>) attributes {dimension_semantics = [#tpu.dimension_semantics<parallel>, #tpu.dimension_semantics<parallel>], iteration_bounds = array<i64: 2, 1>, scalar_prefetch = 0 : i64, scratch_operands = 0 : i64, tpu.core_type = #tpu.core_type<tc>, window_params = [{transform_indices = @transform_0, window_bounds = array<i64: 1, 1, 8>}, {transform_indices = @transform_1, window_bounds = array<i64: 1, 8, 32>}, {transform_indices = @transform_2, window_bounds = array<i64: 1, 8, 64>}, {transform_indices = @transform_3, window_bounds = array<i64: 1, 8, 32>}]} {
    %c0 = arith.constant 0 : index
    %c0_0 = arith.constant 0 : index
    %c0_1 = arith.constant 0 : index
    %0 = vector.load %arg2[%c0, %c0_0, %c0_1] : memref<1x1x8xf32, #tpu.memory_space<vmem>>, vector<1x1x8xf32>
    %1 = vector.shape_cast %0 : vector<1x1x8xf32> to vector<1x8xf32>
    %c0_2 = arith.constant 0 : index
    %c0_3 = arith.constant 0 : index
    %c0_4 = arith.constant 0 : index
    %2 = vector.load %arg3[%c0_2, %c0_3, %c0_4] : memref<1x8x32xbf16, #tpu.memory_space<vmem>>, vector<1x8x8xbf16>
    %3 = vector.shape_cast %2 : vector<1x8x8xbf16> to vector<8x8xbf16>
    %cst = arith.constant 3.535160e-01 : bf16
    %4 = vector.broadcast %cst : bf16 to vector<8x8xbf16>
    %5 = arith.mulf %3, %4 : vector<8x8xbf16>
    %c0_5 = arith.constant 0 : index
    %c0_6 = arith.constant 0 : index
    %c0_7 = arith.constant 0 : index
    %6 = vector.load %arg4[%c0_5, %c0_6, %c0_7] : memref<1x8x64xbf16, #tpu.memory_space<vmem>>, vector<1x8x8xbf16>
    %7 = vector.shape_cast %6 : vector<1x8x8xbf16> to vector<8x8xbf16>
    %c0_8 = arith.constant 0 : index
    %c0_9 = arith.constant 0 : index
    %c32 = arith.constant 32 : index
    %8 = vector.load %arg4[%c0_8, %c0_9, %c32] : memref<1x8x64xbf16, #tpu.memory_space<vmem>>, vector<1x8x8xbf16>
    %9 = vector.shape_cast %8 : vector<1x8x8xbf16> to vector<8x8xbf16>
    %cst_10 = arith.constant dense<0.000000e+00> : vector<8x8xf32>
    %10 = tpu.matmul %5, %7, %cst_10 {dimension_numbers = #tpu.dot_dimension_numbers<[1], [1], [0], [0], [0, 0, 1, 0], [], []>} : vector<8x8xbf16>, vector<8x8xbf16>, vector<8x8xf32> -> vector<8x8xf32>
    %11 = vector.broadcast %1 : vector<1x8xf32> to vector<8x8xf32>
    %12 = arith.addf %10, %11 : vector<8x8xf32>
    %cst_11 = arith.constant dense<0xFF800000> : vector<8xf32>
    %13 = vector.multi_reduction <maximumf>, %12, %cst_11 [1] : vector<8x8xf32> to vector<8xf32>
    %14 = vector.shape_cast %13 : vector<8xf32> to vector<8x1xf32>
    %15 = vector.broadcast %14 : vector<8x1xf32> to vector<8x8xf32>
    %16 = arith.subf %12, %15 : vector<8x8xf32>
    %17 = math.exp %16 : vector<8x8xf32>
    %cst_12 = arith.constant dense<0.000000e+00> : vector<8xf32>
    %18 = vector.multi_reduction <add>, %17, %cst_12 [1] : vector<8x8xf32> to vector<8xf32>
    %19 = vector.shape_cast %18 : vector<8xf32> to vector<8x1xf32>
    %20 = tpu.reciprocal %19 {approx = true} : vector<8x1xf32> -> vector<8x1xf32>
    %21 = vector.broadcast %20 : vector<8x1xf32> to vector<8x8xf32>
    %22 = arith.mulf %17, %21 : vector<8x8xf32>
    %23 = arith.truncf %22 : vector<8x8xf32> to vector<8x8xbf16>
    %cst_13 = arith.constant dense<0.000000e+00> : vector<8x8xf32>
    %24 = tpu.matmul %23, %9, %cst_13 {dimension_numbers = #tpu.dot_dimension_numbers<[1], [0], [0], [1], [0, 0, 1, 1], [], []>} : vector<8x8xbf16>, vector<8x8xbf16>, vector<8x8xf32> -> vector<8x8xf32>
    %25 = arith.truncf %24 : vector<8x8xf32> to vector<8x8xbf16>
    %c0_14 = arith.constant 0 : index
    %c0_15 = arith.constant 0 : index
    %c0_16 = arith.constant 0 : index
    %26 = vector.load %arg5[%c0_14, %c0_15, %c0_16] : memref<1x8x32xbf16, #tpu.memory_space<vmem>>, vector<1x8x8xbf16>
    %27 = vector.shape_cast %26 : vector<1x8x8xbf16> to vector<8x8xbf16>
    %28 = vector.shape_cast %25 : vector<8x8xbf16> to vector<1x8x8xbf16>
    tpu.vector_store %arg5[%c0_14, %c0_15, %c0_16], %28 {strides = array<i32>} : memref<1x8x32xbf16, #tpu.memory_space<vmem>>, vector<1x8x8xbf16>,
    %c0_17 = arith.constant 0 : index
    %c0_18 = arith.constant 0 : index
    %c8 = arith.constant 8 : index
    %29 = vector.load %arg3[%c0_17, %c0_18, %c8] : memref<1x8x32xbf16, #tpu.memory_space<vmem>>, vector<1x8x8xbf16>
    %30 = vector.shape_cast %29 : vector<1x8x8xbf16> to vector<8x8xbf16>
    %cst_19 = arith.constant 3.535160e-01 : bf16
    %31 = vector.broadcast %cst_19 : bf16 to vector<8x8xbf16>
    %32 = arith.mulf %30, %31 : vector<8x8xbf16>
    %c0_20 = arith.constant 0 : index
    %c0_21 = arith.constant 0 : index
    %c8_22 = arith.constant 8 : index
    %33 = vector.load %arg4[%c0_20, %c0_21, %c8_22] : memref<1x8x64xbf16, #tpu.memory_space<vmem>>, vector<1x8x8xbf16>
    %34 = vector.shape_cast %33 : vector<1x8x8xbf16> to vector<8x8xbf16>
    %c0_23 = arith.constant 0 : index
    %c0_24 = arith.constant 0 : index
    %c40 = arith.constant 40 : index
    %35 = vector.load %arg4[%c0_23, %c0_24, %c40] : memref<1x8x64xbf16, #tpu.memory_space<vmem>>, vector<1x8x8xbf16>
    %36 = vector.shape_cast %35 : vector<1x8x8xbf16> to vector<8x8xbf16>
    %cst_25 = arith.constant dense<0.000000e+00> : vector<8x8xf32>
    %37 = tpu.matmul %32, %34, %cst_25 {dimension_numbers = #tpu.dot_dimension_numbers<[1], [1], [0], [0], [0, 0, 1, 0], [], []>} : vector<8x8xbf16>, vector<8x8xbf16>, vector<8x8xf32> -> vector<8x8xf32>
    %38 = vector.broadcast %1 : vector<1x8xf32> to vector<8x8xf32>
    %39 = arith.addf %37, %38 : vector<8x8xf32>
    %cst_26 = arith.constant dense<0xFF800000> : vector<8xf32>
    %40 = vector.multi_reduction <maximumf>, %39, %cst_26 [1] : vector<8x8xf32> to vector<8xf32>
    %41 = vector.shape_cast %40 : vector<8xf32> to vector<8x1xf32>
    %42 = vector.broadcast %41 : vector<8x1xf32> to vector<8x8xf32>
    %43 = arith.subf %39, %42 : vector<8x8xf32>
    %44 = math.exp %43 : vector<8x8xf32>
    %cst_27 = arith.constant dense<0.000000e+00> : vector<8xf32>
    %45 = vector.multi_reduction <add>, %44, %cst_27 [1] : vector<8x8xf32> to vector<8xf32>
    %46 = vector.shape_cast %45 : vector<8xf32> to vector<8x1xf32>
    %47 = tpu.reciprocal %46 {approx = true} : vector<8x1xf32> -> vector<8x1xf32>
    %48 = vector.broadcast %47 : vector<8x1xf32> to vector<8x8xf32>
    %49 = arith.mulf %44, %48 : vector<8x8xf32>
    %50 = arith.truncf %49 : vector<8x8xf32> to vector<8x8xbf16>
    %cst_28 = arith.constant dense<0.000000e+00> : vector<8x8xf32>
    %51 = tpu.matmul %50, %36, %cst_28 {dimension_numbers = #tpu.dot_dimension_numbers<[1], [0], [0], [1], [0, 0, 1, 1], [], []>} : vector<8x8xbf16>, vector<8x8xbf16>, vector<8x8xf32> -> vector<8x8xf32>
    %52 = arith.truncf %51 : vector<8x8xf32> to vector<8x8xbf16>
    %c0_29 = arith.constant 0 : index
    %c0_30 = arith.constant 0 : index
    %c8_31 = arith.constant 8 : index
    %53 = vector.load %arg5[%c0_29, %c0_30, %c8_31] : memref<1x8x32xbf16, #tpu.memory_space<vmem>>, vector<1x8x8xbf16>
    %54 = vector.shape_cast %53 : vector<1x8x8xbf16> to vector<8x8xbf16>
    %55 = vector.shape_cast %52 : vector<8x8xbf16> to vector<1x8x8xbf16>
    tpu.vector_store %arg5[%c0_29, %c0_30, %c8_31], %55 {strides = array<i32>} : memref<1x8x32xbf16, #tpu.memory_space<vmem>>, vector<1x8x8xbf16>,
    %c0_32 = arith.constant 0 : index
    %c0_33 = arith.constant 0 : index
    %c16 = arith.constant 16 : index
    %56 = vector.load %arg3[%c0_32, %c0_33, %c16] : memref<1x8x32xbf16, #tpu.memory_space<vmem>>, vector<1x8x8xbf16>
    %57 = vector.shape_cast %56 : vector<1x8x8xbf16> to vector<8x8xbf16>
    %cst_34 = arith.constant 3.535160e-01 : bf16
    %58 = vector.broadcast %cst_34 : bf16 to vector<8x8xbf16>
    %59 = arith.mulf %57, %58 : vector<8x8xbf16>
    %c0_35 = arith.constant 0 : index
    %c0_36 = arith.constant 0 : index
    %c16_37 = arith.constant 16 : index
    %60 = vector.load %arg4[%c0_35, %c0_36, %c16_37] : memref<1x8x64xbf16, #tpu.memory_space<vmem>>, vector<1x8x8xbf16>
    %61 = vector.shape_cast %60 : vector<1x8x8xbf16> to vector<8x8xbf16>
    %c0_38 = arith.constant 0 : index
    %c0_39 = arith.constant 0 : index
    %c48 = arith.constant 48 : index
    %62 = vector.load %arg4[%c0_38, %c0_39, %c48] : memref<1x8x64xbf16, #tpu.memory_space<vmem>>, vector<1x8x8xbf16>
    %63 = vector.shape_cast %62 : vector<1x8x8xbf16> to vector<8x8xbf16>
    %cst_40 = arith.constant dense<0.000000e+00> : vector<8x8xf32>
    %64 = tpu.matmul %59, %61, %cst_40 {dimension_numbers = #tpu.dot_dimension_numbers<[1], [1], [0], [0], [0, 0, 1, 0], [], []>} : vector<8x8xbf16>, vector<8x8xbf16>, vector<8x8xf32> -> vector<8x8xf32>
    %65 = vector.broadcast %1 : vector<1x8xf32> to vector<8x8xf32>
    %66 = arith.addf %64, %65 : vector<8x8xf32>
    %cst_41 = arith.constant dense<0xFF800000> : vector<8xf32>
    %67 = vector.multi_reduction <maximumf>, %66, %cst_41 [1] : vector<8x8xf32> to vector<8xf32>
    %68 = vector.shape_cast %67 : vector<8xf32> to vector<8x1xf32>
    %69 = vector.broadcast %68 : vector<8x1xf32> to vector<8x8xf32>
    %70 = arith.subf %66, %69 : vector<8x8xf32>
    %71 = math.exp %70 : vector<8x8xf32>
    %cst_42 = arith.constant dense<0.000000e+00> : vector<8xf32>
    %72 = vector.multi_reduction <add>, %71, %cst_42 [1] : vector<8x8xf32> to vector<8xf32>
    %73 = vector.shape_cast %72 : vector<8xf32> to vector<8x1xf32>
    %74 = tpu.reciprocal %73 {approx = true} : vector<8x1xf32> -> vector<8x1xf32>
    %75 = vector.broadcast %74 : vector<8x1xf32> to vector<8x8xf32>
    %76 = arith.mulf %71, %75 : vector<8x8xf32>
    %77 = arith.truncf %76 : vector<8x8xf32> to vector<8x8xbf16>
    %cst_43 = arith.constant dense<0.000000e+00> : vector<8x8xf32>
    %78 = tpu.matmul %77, %63, %cst_43 {dimension_numbers = #tpu.dot_dimension_numbers<[1], [0], [0], [1], [0, 0, 1, 1], [], []>} : vector<8x8xbf16>, vector<8x8xbf16>, vector<8x8xf32> -> vector<8x8xf32>
    %79 = arith.truncf %78 : vector<8x8xf32> to vector<8x8xbf16>
    %c0_44 = arith.constant 0 : index
    %c0_45 = arith.constant 0 : index
    %c16_46 = arith.constant 16 : index
    %80 = vector.load %arg5[%c0_44, %c0_45, %c16_46] : memref<1x8x32xbf16, #tpu.memory_space<vmem>>, vector<1x8x8xbf16>
    %81 = vector.shape_cast %80 : vector<1x8x8xbf16> to vector<8x8xbf16>
    %82 = vector.shape_cast %79 : vector<8x8xbf16> to vector<1x8x8xbf16>
    tpu.vector_store %arg5[%c0_44, %c0_45, %c16_46], %82 {strides = array<i32>} : memref<1x8x32xbf16, #tpu.memory_space<vmem>>, vector<1x8x8xbf16>,
    %c0_47 = arith.constant 0 : index
    %c0_48 = arith.constant 0 : index
    %c24 = arith.constant 24 : index
    %83 = vector.load %arg3[%c0_47, %c0_48, %c24] : memref<1x8x32xbf16, #tpu.memory_space<vmem>>, vector<1x8x8xbf16>
    %84 = vector.shape_cast %83 : vector<1x8x8xbf16> to vector<8x8xbf16>
    %cst_49 = arith.constant 3.535160e-01 : bf16
    %85 = vector.broadcast %cst_49 : bf16 to vector<8x8xbf16>
    %86 = arith.mulf %84, %85 : vector<8x8xbf16>
    %c0_50 = arith.constant 0 : index
    %c0_51 = arith.constant 0 : index
    %c24_52 = arith.constant 24 : index
    %87 = vector.load %arg4[%c0_50, %c0_51, %c24_52] : memref<1x8x64xbf16, #tpu.memory_space<vmem>>, vector<1x8x8xbf16>
    %88 = vector.shape_cast %87 : vector<1x8x8xbf16> to vector<8x8xbf16>
    %c0_53 = arith.constant 0 : index
    %c0_54 = arith.constant 0 : index
    %c56 = arith.constant 56 : index
    %89 = vector.load %arg4[%c0_53, %c0_54, %c56] : memref<1x8x64xbf16, #tpu.memory_space<vmem>>, vector<1x8x8xbf16>
    %90 = vector.shape_cast %89 : vector<1x8x8xbf16> to vector<8x8xbf16>
    %cst_55 = arith.constant dense<0.000000e+00> : vector<8x8xf32>
    %91 = tpu.matmul %86, %88, %cst_55 {dimension_numbers = #tpu.dot_dimension_numbers<[1], [1], [0], [0], [0, 0, 1, 0], [], []>} : vector<8x8xbf16>, vector<8x8xbf16>, vector<8x8xf32> -> vector<8x8xf32>
    %92 = vector.broadcast %1 : vector<1x8xf32> to vector<8x8xf32>
    %93 = arith.addf %91, %92 : vector<8x8xf32>
    %cst_56 = arith.constant dense<0xFF800000> : vector<8xf32>
    %94 = vector.multi_reduction <maximumf>, %93, %cst_56 [1] : vector<8x8xf32> to vector<8xf32>
    %95 = vector.shape_cast %94 : vector<8xf32> to vector<8x1xf32>
    %96 = vector.broadcast %95 : vector<8x1xf32> to vector<8x8xf32>
    %97 = arith.subf %93, %96 : vector<8x8xf32>
    %98 = math.exp %97 : vector<8x8xf32>
    %cst_57 = arith.constant dense<0.000000e+00> : vector<8xf32>
    %99 = vector.multi_reduction <add>, %98, %cst_57 [1] : vector<8x8xf32> to vector<8xf32>
    %100 = vector.shape_cast %99 : vector<8xf32> to vector<8x1xf32>
    %101 = tpu.reciprocal %100 {approx = true} : vector<8x1xf32> -> vector<8x1xf32>
    %102 = vector.broadcast %101 : vector<8x1xf32> to vector<8x8xf32>
    %103 = arith.mulf %98, %102 : vector<8x8xf32>
    %104 = arith.truncf %103 : vector<8x8xf32> to vector<8x8xbf16>
    %cst_58 = arith.constant dense<0.000000e+00> : vector<8x8xf32>
    %105 = tpu.matmul %104, %90, %cst_58 {dimension_numbers = #tpu.dot_dimension_numbers<[1], [0], [0], [1], [0, 0, 1, 1], [], []>} : vector<8x8xbf16>, vector<8x8xbf16>, vector<8x8xf32> -> vector<8x8xf32>
    %106 = arith.truncf %105 : vector<8x8xf32> to vector<8x8xbf16>
    %c0_59 = arith.constant 0 : index
    %c0_60 = arith.constant 0 : index
    %c24_61 = arith.constant 24 : index
    %107 = vector.load %arg5[%c0_59, %c0_60, %c24_61] : memref<1x8x32xbf16, #tpu.memory_space<vmem>>, vector<1x8x8xbf16>
    %108 = vector.shape_cast %107 : vector<1x8x8xbf16> to vector<8x8xbf16>
    %109 = vector.shape_cast %106 : vector<8x8xbf16> to vector<1x8x8xbf16>
    tpu.vector_store %arg5[%c0_59, %c0_60, %c24_61], %109 {strides = array<i32>} : memref<1x8x32xbf16, #tpu.memory_space<vmem>>, vector<1x8x8xbf16>,
    return
  }
  func.func @transform_0(%arg0: i32, %arg1: i32) -> (i32, i32, i32) {
    %c0_i32 = arith.constant 0 : i32
    %c0_i32_0 = arith.constant 0 : i32
    %c0_i32_1 = arith.constant 0 : i32
    return %arg0, %c0_i32, %c0_i32_0 : i32, i32, i32
  }
  func.func @transform_1(%arg0: i32, %arg1: i32) -> (i32, i32, i32) {
    %c0_i32 = arith.constant 0 : i32
    %c0_i32_0 = arith.constant 0 : i32
    return %arg0, %arg1, %c0_i32 : i32, i32, i32
  }
  func.func @transform_2(%arg0: i32, %arg1: i32) -> (i32, i32, i32) {
    %c0_i32 = arith.constant 0 : i32
    %c0_i32_0 = arith.constant 0 : i32
    %c0_i32_1 = arith.constant 0 : i32
    return %arg0, %c0_i32, %c0_i32_0 : i32, i32, i32
  }
  func.func @transform_3(%arg0: i32, %arg1: i32) -> (i32, i32, i32) {
    %c0_i32 = arith.constant 0 : i32
    %c0_i32_0 = arith.constant 0 : i32
    return %arg0, %arg1, %c0_i32 : i32, i32, i32
  }
}

module attributes {stable_mosaic.version = 11 : i64} {
  func.func @_linear_kernel(%arg0: i32, %arg1: i32, %arg2: i32, %arg3: memref<16x32xbf16, #tpu.memory_space<vmem>>, %arg4: memref<32x60xbf16, #tpu.memory_space<vmem>>, %arg5: memref<1x60xf32, #tpu.memory_space<vmem>>, %arg6: memref<16x60xf32, #tpu.memory_space<vmem>>, %arg7: memref<16x60xf32, #tpu.memory_space<vmem>>) attributes {dimension_semantics = [#tpu.dimension_semantics<parallel>, #tpu.dimension_semantics<parallel>, #tpu.dimension_semantics<arbitrary>], iteration_bounds = array<i64: 1, 1, 1>, scalar_prefetch = 0 : i64, scratch_operands = 1 : i64, tpu.core_type = #tpu.core_type<tc>, window_params = [{transform_indices = @transform_0, window_bounds = array<i64: 16, 32>}, {transform_indices = @transform_1, window_bounds = array<i64: 32, 60>}, {transform_indices = @transform_2, window_bounds = array<i64: 1, 60>}, {transform_indices = @transform_3, window_bounds = array<i64: 16, 60>}]} {
    %c0_i32 = arith.constant 0 : i32
    %0 = arith.cmpi eq, %arg2, %c0_i32 : i32
    %1 = arith.extui %0 : i1 to i32
    %c0_i32_0 = arith.constant 0 : i32
    %2 = arith.cmpi ne, %1, %c0_i32_0 : i32
    scf.if %2 {
      %cst_10 = arith.constant 0.000000e+00 : f32
      %12 = vector.broadcast %cst_10 : f32 to vector<16x60xf32>
      %c0_11 = arith.constant 0 : index
      %c0_12 = arith.constant 0 : index
      %13 = vector.load %arg7[%c0_11, %c0_12] : memref<16x60xf32, #tpu.memory_space<vmem>>, vector<16x60xf32>
      tpu.vector_store %arg7[%c0_11, %c0_12], %12 {strides = array<i32>} : memref<16x60xf32, #tpu.memory_space<vmem>>, vector<16x60xf32>,
    } else {
    }
    %c0 = arith.constant 0 : index
    %c0_1 = arith.constant 0 : index
    %3 = vector.load %arg7[%c0, %c0_1] : memref<16x60xf32, #tpu.memory_space<vmem>>, vector<16x60xf32>
    %c0_2 = arith.constant 0 : index
    %c0_3 = arith.constant 0 : index
    %4 = vector.load %arg3[%c0_2, %c0_3] : memref<16x32xbf16, #tpu.memory_space<vmem>>, vector<16x32xbf16>
    %c0_4 = arith.constant 0 : index
    %c0_5 = arith.constant 0 : index
    %5 = vector.load %arg4[%c0_4, %c0_5] : memref<32x60xbf16, #tpu.memory_space<vmem>>, vector<32x60xbf16>
    %cst = arith.constant dense<0.000000e+00> : vector<16x60xf32>
    %6 = tpu.matmul %4, %5, %cst {dimension_numbers = #tpu.dot_dimension_numbers<[1], [0], [0], [1], [0, 0, 1, 1], [], []>} : vector<16x32xbf16>, vector<32x60xbf16>, vector<16x60xf32> -> vector<16x60xf32>
    %7 = arith.addf %3, %6 : vector<16x60xf32>
    %c0_6 = arith.constant 0 : index
    %c0_7 = arith.constant 0 : index
    %8 = vector.load %arg7[%c0_6, %c0_7] : memref<16x60xf32, #tpu.memory_space<vmem>>, vector<16x60xf32>
    tpu.vector_store %arg7[%c0_6, %c0_7], %7 {strides = array<i32>} : memref<16x60xf32, #tpu.memory_space<vmem>>, vector<16x60xf32>,
    %c0_i32_8 = arith.constant 0 : i32
    %9 = arith.cmpi eq, %arg2, %c0_i32_8 : i32
    %10 = arith.extui %9 : i1 to i32
    %c0_i32_9 = arith.constant 0 : i32
    %11 = arith.cmpi ne, %10, %c0_i32_9 : i32
    scf.if %11 {
      %c0_10 = arith.constant 0 : index
      %c0_11 = arith.constant 0 : index
      %12 = vector.load %arg7[%c0_10, %c0_11] : memref<16x60xf32, #tpu.memory_space<vmem>>, vector<16x60xf32>
      %c0_12 = arith.constant 0 : index
      %c0_13 = arith.constant 0 : index
      %13 = vector.load %arg5[%c0_12, %c0_13] : memref<1x60xf32, #tpu.memory_space<vmem>>, vector<1x60xf32>
      %14 = vector.broadcast %13 : vector<1x60xf32> to vector<16x60xf32>
      %15 = arith.addf %12, %14 : vector<16x60xf32>
      %c0_14 = arith.constant 0 : index
      %c0_15 = arith.constant 0 : index
      %16 = vector.load %arg6[%c0_14, %c0_15] : memref<16x60xf32, #tpu.memory_space<vmem>>, vector<16x60xf32>
      tpu.vector_store %arg6[%c0_14, %c0_15], %15 {strides = array<i32>} : memref<16x60xf32, #tpu.memory_space<vmem>>, vector<16x60xf32>,
    } else {
    }
    return
  }
  func.func @transform_0(%arg0: i32, %arg1: i32, %arg2: i32) -> (i32, i32) {
    %c0_i32 = arith.constant 0 : i32
    return %arg0, %arg2 : i32, i32
  }
  func.func @transform_1(%arg0: i32, %arg1: i32, %arg2: i32) -> (i32, i32) {
    %c0_i32 = arith.constant 0 : i32
    return %arg2, %arg1 : i32, i32
  }
  func.func @transform_2(%arg0: i32, %arg1: i32, %arg2: i32) -> (i32, i32) {
    %c0_i32 = arith.constant 0 : i32
    %c0_i32_0 = arith.constant 0 : i32
    return %c0_i32, %arg1 : i32, i32
  }
  func.func @transform_3(%arg0: i32, %arg1: i32, %arg2: i32) -> (i32, i32) {
    %c0_i32 = arith.constant 0 : i32
    return %arg0, %arg1 : i32, i32
  }
}

</mosaic_0001>

<llo_original>
// kernel: transformer_forward.25
$region0: #{transformer_forward.25}
  #allocation0 [shape = 'u32[]', space=smem, size = 0x4, offset = 0x4, fixed_abs, tag = 'smem constant byte address 0x4 - core index']
  #allocation1 [shape = 'u32[144,128]{1,0:T(1,128)}', space=vmem, size = 0x12000, scoped, tag = 'internal scratch']
  #allocation2 [shape = 'f32[16,96]{1,0:T(8,128)}', space=vmem, size = 0x2000, scoped, tag = 'scratch operand']
  %s0 = inlined_call_operand.vmem [shape: bf16[16,32], index: 0, kind: input, shape index: {}]
  %s1 = inlined_call_operand.vmem [shape: bf16[32,96], index: 1, kind: input, shape index: {}]
  %s2 = inlined_call_operand.vmem [shape: f32[1,96], index: 2, kind: input, shape index: {}]
  %s3 = inlined_call_operand.vmem [shape: bf16[16,96], index: 3, kind: output, shape index: {}]
  %s4 = sld [smem:[#allocation0]]
  $region30: #{transformer_forward.25} parent=0
    _
  %s6 = ssub.s32 1, %s4
  %s7 = scalar_select 0, %s6, %s4
  // Predicated region
  $region2: #{transformer_forward.25} parent=0 // pred_check
    _
  $region3: #{transformer_forward.25} parent=0 // pred_check_branch
    %9 = sbr.rel (0) target = $region5
  $region4: #{transformer_forward.25} parent=0 // pred_region
    _
  $region5: #{transformer_forward.25} parent=0 // pred_fallthru
    _
  // Predicated region
  $region6: #{transformer_forward.25} parent=0 // pred_check
    _
  $region7: #{transformer_forward.25} parent=0 // pred_check_branch
    %11 = sbr.rel (0) target = $region9
  $region8: #{transformer_forward.25} parent=0 // pred_region
    _
  $region9: #{transformer_forward.25} parent=0 // pred_fallthru
    _
  // Predicated region
  $region10: #{transformer_forward.25} parent=0 // pred_check
    _
  $region11: #{transformer_forward.25} parent=0 // pred_check_branch
    %13 = sbr.rel (0) target = $region13
  $region12: #{transformer_forward.25} parent=0 // pred_region
    _
  $region13: #{transformer_forward.25} parent=0 // pred_fallthru
    _
  %p15 = scmp.eq.s32.totalorder 0, 0
  // Predicated region
  $region14: #{transformer_forward.25} parent=0 // pred_check
    %p16 = pneg %p15
  $region15: #{transformer_forward.25} parent=0 // pred_check_branch
    %18 = sbr.rel (%p16) target = $region17
  $region16: #{transformer_forward.25} parent=0 // pred_region
    %vm19 = vcmask 785408
    %20 = vst.msk [vmem:[#allocation2] sm:$0xff] %vm19, 0.0
    %21 = vst.msk [vmem:[#allocation2 + $0x8] sm:$0xff] %vm19, 0.0
  $region17: #{transformer_forward.25} parent=0 // pred_fallthru
    _
  %v22 = vld [vmem:[#allocation2] sm:$0xff]
  %v23 = vld [vmem:[#allocation2 + $0x8] sm:$0xff]
  %v24 = vld [vmem:[%s0] sm:$0xf]
  %v25 = vld [vmem:[%s0 + $0x4] sm:$0xf]
  %v26 = vld [vmem:[%s1] sm:$0xf]
  %v27 = vld [vmem:[%s1 + $0x4] sm:$0xf]
  %v28 = vld [vmem:[%s1 + $0x8] sm:$0xf]
  %v29 = vld [vmem:[%s1 + $0xc] sm:$0xf]
  %v32 = vunpack.c.l.b16 %v24
  %v33 = vunpack.c.l.b16 %v25
  %v34 = vpack.c.b16 %v33, %v32
  %v39 = vunpack.c.l.b16 %v26
  %v40 = vunpack.c.l.b16 %v27
  %v41 = vunpack.c.l.b16 %v28
  %v42 = vunpack.c.l.b16 %v29
  %v43 = vpack.c.b16 %v40, %v39
  %v44 = vpack.c.b16 %v42, %v41
  %vm47 = vcmask 261120
  %v49 = vsel %vm47, %v34, 0
  %51 = vmatprep.subr.bf16.mxu0 0
  %52 = vmatpush1.bf16.msra.mxu0 0
  %53 = vmatprep.subr.bf16.mxu0 0
  %54 = vmatpush1.bf16.msra.mxu0 0
  %55 = vmatprep.subr.bf16.mxu0 0
  %56 = vmatpush1.bf16.msra.mxu0 0
  %57 = vmatprep.subr.bf16.mxu0 0
  %58 = vmatpush1.bf16.msra.mxu0 0
  %59 = vmatprep.subr.bf16.mxu0 0
  %60 = vmatpush1.bf16.msra.mxu0 0
  %61 = vmatprep.subr.bf16.mxu0 0
  %62 = vmatpush1.bf16.msra.mxu0 0
  %63 = vmatprep.subr.bf16.mxu0 0
  %64 = vmatpush1.bf16.msra.mxu0 %v44
  %65 = vmatprep.subr.bf16.mxu0 0
  %66 = vmatpush1.bf16.msra.mxu0 %v43
  %67 = vmatprep.subr.bf16.mxu0 0
  %68 = vmatpush2.bf16.msra.mxu0 0
  %69 = vmatprep.subr.bf16.mxu0 0
  %70 = vmatpush2.bf16.msra.mxu0 0
  %71 = vmatprep.subr.bf16.mxu0 0
  %72 = vmatpush2.bf16.msra.mxu0 0
  %73 = vmatprep.subr.bf16.mxu0 0
  %74 = vmatpush2.bf16.msra.mxu0 0
  %75 = vmatprep.subr.bf16.mxu0 0
  %76 = vmatpush2.bf16.msra.mxu0 0
  %77 = vmatprep.subr.bf16.mxu0 0
  %78 = vmatpush2.bf16.msra.mxu0 0
  %79 = vmatprep.subr.bf16.mxu0 0
  %80 = vmatpush2.bf16.msra.mxu0 0
  %81 = vmatprep.subr.bf16.mxu0 0
  %82 = vmatpush2.bf16.msra.mxu0 0
  %83 = vmatprep.mubr.bf16.mxu0 0
  %84 = vmatmul.mubr.bf16.gmra.mxu0 %v49
  %v85 = vpop.f32.mrf.mxu0
  %v86 = vadd.f32 0.0, %v85
  %v87 = vpop.f32.mrf.mxu0
  %v88 = vpop.f32.mrf.mxu0
  %v89 = vadd.f32 0.0, %v88
  %v90 = vpop.f32.mrf.mxu0
  %91 = vdwg.mxu0
  %v92 = vadd.f32 %v22, %v86
  %v93 = vadd.f32 %v23, %v89
  %vm94 = vcmask 785408
  %95 = vst.msk [vmem:[#allocation2] sm:$0xff] %vm94, %v92
  %96 = vst.msk [vmem:[#allocation2 + $0x8] sm:$0xff] %vm94, %v93
  // Predicated region
  $region18: #{transformer_forward.25} parent=0 // pred_check
    %p97 = pneg %p15
  $region19: #{transformer_forward.25} parent=0 // pred_check_branch
    %99 = sbr.rel (%p97) target = $region21
  $region20: #{transformer_forward.25} parent=0 // pred_region
    %v100 = vld [vmem:[#allocation2] sm:$0xff]
    %v101 = vld [vmem:[#allocation2 + $0x8] sm:$0xff]
    %v102 = vld [vmem:[%s2] sm:$0x1]
    %v104 = vlaneseq
    %v105 = vshrl.u32 %v104, 7
    %v106 = vsub.s32 0, %v105
    %v107 = vrot.slane %v102, %v106
    %v109 = vadd.f32 %v100, %v107
    %v110 = vadd.f32 %v101, %v107
    %v111 = vpack.c.bf16 %v110, %v109
    %v113 = vunpack.c.l.b16 %v111
    %v114 = vunpack.c.h.b16 %v111
    %v115 = vpack.c.b16 %v113, %v113
    %v116 = vpack.c.b16 %v114, %v114
    %vm119 = vcmask 781312
    %120 = vst.msk [vmem:[%s3] sm:$0xf] %vm119, %v115
    %121 = vst.msk [vmem:[%s3 + $0x4] sm:$0xf] %vm119, %v116
  $region21: #{transformer_forward.25} parent=0 // pred_fallthru
    _
  // Predicated region
  $region22: #{transformer_forward.25} parent=0 // pred_check
    _
  $region23: #{transformer_forward.25} parent=0 // pred_check_branch
    %123 = sbr.rel (0) target = $region25
  $region24: #{transformer_forward.25} parent=0 // pred_region
    _
  $region25: #{transformer_forward.25} parent=0 // pred_fallthru
    _
  // Predicated region
  $region26: #{transformer_forward.25} parent=0 // pred_check
    _
  $region27: #{transformer_forward.25} parent=0 // pred_check_branch
    %125 = sbr.rel (0) target = $region29
  $region28: #{transformer_forward.25} parent=0 // pred_region
    _
  $region29: #{transformer_forward.25} parent=0 // pred_fallthru
    _

// kernel: transformer_forward.27
$region0: #{transformer_forward.27}
  #allocation0 [shape = 'u32[]', space=smem, size = 0x4, offset = 0x4, fixed_abs, tag = 'smem constant byte address 0x4 - core index']
  #allocation1 [shape = 'u32[144,128]{1,0:T(1,128)}', space=vmem, size = 0x12000, scoped, tag = 'internal scratch']
  #allocation2 [shape = 'f32[16,32]{1,0:T(8,128)}', space=vmem, size = 0x2000, scoped, tag = 'scratch operand']
  %s0 = inlined_call_operand.vmem [shape: bf16[16,32], index: 0, kind: input, shape index: {}]
  %s1 = inlined_call_operand.vmem [shape: bf16[32,32], index: 1, kind: input, shape index: {}]
  %s2 = inlined_call_operand.vmem [shape: f32[1,32], index: 2, kind: input, shape index: {}]
  %s3 = inlined_call_operand.vmem [shape: bf16[16,32], index: 3, kind: input, shape index: {}]
  %s4 = inlined_call_operand.vmem [shape: f32[1,32], index: 4, kind: input, shape index: {}]
  %s5 = inlined_call_operand.vmem [shape: f32[1,32], index: 5, kind: input, shape index: {}]
  %s6 = inlined_call_operand.vmem [shape: bf16[16,32], index: 6, kind: output, shape index: {}]
  %s7 = sld [smem:[#allocation0]]
  $region42: #{transformer_forward.27} parent=0
    _
  %s9 = ssub.s32 1, %s7
  %s10 = scalar_select 0, %s9, %s7
  // Predicated region
  $region2: #{transformer_forward.27} parent=0 // pred_check
    _
  $region3: #{transformer_forward.27} parent=0 // pred_check_branch
    %12 = sbr.rel (0) target = $region5
  $region4: #{transformer_forward.27} parent=0 // pred_region
    _
  $region5: #{transformer_forward.27} parent=0 // pred_fallthru
    _
  // Predicated region
  $region6: #{transformer_forward.27} parent=0 // pred_check
    _
  $region7: #{transformer_forward.27} parent=0 // pred_check_branch
    %14 = sbr.rel (0) target = $region9
  $region8: #{transformer_forward.27} parent=0 // pred_region
    _
  $region9: #{transformer_forward.27} parent=0 // pred_fallthru
    _
  // Predicated region
  $region10: #{transformer_forward.27} parent=0 // pred_check
    _
  $region11: #{transformer_forward.27} parent=0 // pred_check_branch
    %16 = sbr.rel (0) target = $region13
  $region12: #{transformer_forward.27} parent=0 // pred_region
    _
  $region13: #{transformer_forward.27} parent=0 // pred_fallthru
    _
  // Predicated region
  $region14: #{transformer_forward.27} parent=0 // pred_check
    _
  $region15: #{transformer_forward.27} parent=0 // pred_check_branch
    %18 = sbr.rel (0) target = $region17
  $region16: #{transformer_forward.27} parent=0 // pred_region
    _
  $region17: #{transformer_forward.27} parent=0 // pred_fallthru
    _
  // Predicated region
  $region18: #{transformer_forward.27} parent=0 // pred_check
    _
  $region19: #{transformer_forward.27} parent=0 // pred_check_branch
    %20 = sbr.rel (0) target = $region21
  $region20: #{transformer_forward.27} parent=0 // pred_region
    _
  $region21: #{transformer_forward.27} parent=0 // pred_fallthru
    _
  // Predicated region
  $region22: #{transformer_forward.27} parent=0 // pred_check
    _
  $region23: #{transformer_forward.27} parent=0 // pred_check_branch
    %22 = sbr.rel (0) target = $region25
  $region24: #{transformer_forward.27} parent=0 // pred_region
    _
  $region25: #{transformer_forward.27} parent=0 // pred_fallthru
    _
  %p24 = scmp.eq.s32.totalorder 0, 0
  // Predicated region
  $region26: #{transformer_forward.27} parent=0 // pred_check
    %p25 = pneg %p24
  $region27: #{transformer_forward.27} parent=0 // pred_check_branch
    %27 = sbr.rel (%p25) target = $region29
  $region28: #{transformer_forward.27} parent=0 // pred_region
    %vm28 = vcmask 261120
    %29 = vst.msk [vmem:[#allocation2] sm:$0xff] %vm28, 0.0
    %30 = vst.msk [vmem:[#allocation2 + $0x8] sm:$0xff] %vm28, 0.0
  $region29: #{transformer_forward.27} parent=0 // pred_fallthru
    _
  %v31 = vld [vmem:[#allocation2] sm:$0xff]
  %v32 = vld [vmem:[#allocation2 + $0x8] sm:$0xff]
  %v33 = vld [vmem:[%s0] sm:$0xf]
  %v34 = vld [vmem:[%s0 + $0x4] sm:$0xf]
  %v35 = vld [vmem:[%s1] sm:$0xf]
  %v36 = vld [vmem:[%s1 + $0x4] sm:$0xf]
  %v37 = vld [vmem:[%s1 + $0x8] sm:$0xf]
  %v38 = vld [vmem:[%s1 + $0xc] sm:$0xf]
  %v41 = vunpack.c.l.b16 %v33
  %v42 = vunpack.c.l.b16 %v34
  %v43 = vpack.c.b16 %v42, %v41
  %v48 = vunpack.c.l.b16 %v35
  %v49 = vunpack.c.l.b16 %v36
  %v50 = vunpack.c.l.b16 %v37
  %v51 = vunpack.c.l.b16 %v38
  %v52 = vpack.c.b16 %v49, %v48
  %v53 = vpack.c.b16 %v51, %v50
  %vm56 = vcmask 261120
  %v58 = vsel %vm56, %v43, 0
  %60 = vmatprep.subr.bf16.mxu0 0
  %61 = vmatpush1.bf16.msra.mxu0 0
  %62 = vmatprep.subr.bf16.mxu0 0
  %63 = vmatpush1.bf16.msra.mxu0 0
  %64 = vmatprep.subr.bf16.mxu0 0
  %65 = vmatpush1.bf16.msra.mxu0 0
  %66 = vmatprep.subr.bf16.mxu0 0
  %67 = vmatpush1.bf16.msra.mxu0 0
  %68 = vmatprep.subr.bf16.mxu0 0
  %69 = vmatpush1.bf16.msra.mxu0 0
  %70 = vmatprep.subr.bf16.mxu0 0
  %71 = vmatpush1.bf16.msra.mxu0 0
  %72 = vmatprep.subr.bf16.mxu0 0
  %73 = vmatpush1.bf16.msra.mxu0 %v53
  %74 = vmatprep.subr.bf16.mxu0 0
  %75 = vmatpush1.bf16.msra.mxu0 %v52
  %76 = vmatprep.subr.bf16.mxu0 0
  %77 = vmatpush2.bf16.msra.mxu0 0
  %78 = vmatprep.subr.bf16.mxu0 0
  %79 = vmatpush2.bf16.msra.mxu0 0
  %80 = vmatprep.subr.bf16.mxu0 0
  %81 = vmatpush2.bf16.msra.mxu0 0
  %82 = vmatprep.subr.bf16.mxu0 0
  %83 = vmatpush2.bf16.msra.mxu0 0
  %84 = vmatprep.subr.bf16.mxu0 0
  %85 = vmatpush2.bf16.msra.mxu0 0
  %86 = vmatprep.subr.bf16.mxu0 0
  %87 = vmatpush2.bf16.msra.mxu0 0
  %88 = vmatprep.subr.bf16.mxu0 0
  %89 = vmatpush2.bf16.msra.mxu0 0
  %90 = vmatprep.subr.bf16.mxu0 0
  %91 = vmatpush2.bf16.msra.mxu0 0
  %92 = vmatprep.mubr.bf16.mxu0 0
  %93 = vmatmul.mubr.bf16.gmra.mxu0 %v58
  %v94 = vpop.f32.mrf.mxu0
  %v95 = vadd.f32 0.0, %v94
  %v96 = vpop.f32.mrf.mxu0
  %v97 = vpop.f32.mrf.mxu0
  %v98 = vadd.f32 0.0, %v97
  %v99 = vpop.f32.mrf.mxu0
  %100 = vdwg.mxu0
  %v101 = vadd.f32 %v31, %v95
  %v102 = vadd.f32 %v32, %v98
  %103 = vst.msk [vmem:[#allocation2] sm:$0xff] %vm56, %v101
  %104 = vst.msk [vmem:[#allocation2 + $0x8] sm:$0xff] %vm56, %v102
  // Predicated region
  $region30: #{transformer_forward.27} parent=0 // pred_check
    %p105 = pneg %p24
  $region31: #{transformer_forward.27} parent=0 // pred_check_branch
    %107 = sbr.rel (%p105) target = $region33
  $region32: #{transformer_forward.27} parent=0 // pred_region
    %v108 = vld [vmem:[#allocation2] sm:$0xff]
    %v109 = vld [vmem:[#allocation2 + $0x8] sm:$0xff]
    %v110 = vld [vmem:[%s2] sm:$0x1]
    %v112 = vlaneseq
    %v113 = vshrl.u32 %v112, 7
    %v114 = vsub.s32 0, %v113
    %v115 = vrot.slane %v110, %v114
    %v117 = vadd.f32 %v108, %v115
    %v118 = vadd.f32 %v109, %v115
    %v119 = vld [vmem:[%s3] sm:$0xf]
    %v120 = vld [vmem:[%s3 + $0x4] sm:$0xf]
    %v121 = vunpack.c.l.bf16 %v119
    %v122 = vunpack.c.l.bf16 %v120
    %v123 = vadd.f32 %v117, %v121
    %v124 = vadd.f32 %v118, %v122
    %v125 = vsel %vm56, %v123, 0.0
    %126 = vadd.xlane.f32.xlu0 %v125
    %v127 = vpop.xlane.xlu0 %126
    %v128 = vsel %vm56, %v124, 0.0
    %129 = vadd.xlane.f32.xlu0 %v128
    %v130 = vpop.xlane.xlu0 %129
    %v131 = vrcp.pop 32.0
    %v132 = vmul.f32 %v127, %v131
    %v133 = vmul.f32 %v130, %v131
    %v134 = vsub.f32 %v123, %v132
    %v135 = vsub.f32 %v124, %v133
    %v136 = vmul.f32 %v134, %v134
    %v137 = vmul.f32 %v135, %v135
    %v138 = vsel %vm56, %v136, 0.0
    %139 = vadd.xlane.f32.xlu0 %v138
    %v140 = vpop.xlane.xlu0 %139
    %v141 = vsel %vm56, %v137, 0.0
    %142 = vadd.xlane.f32.xlu0 %v141
    %v143 = vpop.xlane.xlu0 %142
    %v144 = vmul.f32 %v140, %v131
    %v145 = vmul.f32 %v143, %v131
    %v146 = vadd.f32 %v144, 1e-05
    %v147 = vadd.f32 %v145, 1e-05
    %v148 = vrsqrt.pop %v146
    %v149 = vrsqrt.pop %v147
    %v150 = vmul.f32 %v134, %v148
    %v151 = vmul.f32 %v135, %v149
    %v152 = vld [vmem:[%s4] sm:$0x1]
    %v154 = vlaneseq
    %v155 = vshrl.u32 %v154, 7
    %v156 = vsub.s32 0, %v155
    %v157 = vrot.slane %v152, %v156
    %v159 = vmul.f32 %v150, %v157
    %v160 = vmul.f32 %v151, %v157
    %v161 = vld [vmem:[%s5] sm:$0x1]
    %v163 = vlaneseq
    %v164 = vshrl.u32 %v163, 7
    %v165 = vsub.s32 0, %v164
    %v166 = vrot.slane %v161, %v165
    %v168 = vadd.f32 %v159, %v166
    %v169 = vadd.f32 %v160, %v166
    %v170 = vpack.c.bf16 %v169, %v168
    %v172 = vunpack.c.l.b16 %v170
    %v173 = vunpack.c.h.b16 %v170
    %v174 = vpack.c.b16 %v172, %v172
    %v175 = vpack.c.b16 %v173, %v173
    %vm178 = vcmask 257024
    %179 = vst.msk [vmem:[%s6] sm:$0xf] %vm178, %v174
    %180 = vst.msk [vmem:[%s6 + $0x4] sm:$0xf] %vm178, %v175
  $region33: #{transformer_forward.27} parent=0 // pred_fallthru
    _
  // Predicated region
  $region34: #{transformer_forward.27} parent=0 // pred_check
    _
  $region35: #{transformer_forward.27} parent=0 // pred_check_branch
    %182 = sbr.rel (0) target = $region37
  $region36: #{transformer_forward.27} parent=0 // pred_region
    _
  $region37: #{transformer_forward.27} parent=0 // pred_fallthru
    _
  // Predicated region
  $region38: #{transformer_forward.27} parent=0 // pred_check
    _
  $region39: #{transformer_forward.27} parent=0 // pred_check_branch
    %184 = sbr.rel (0) target = $region41
  $region40: #{transformer_forward.27} parent=0 // pred_region
    _
  $region41: #{transformer_forward.27} parent=0 // pred_fallthru
    _

// kernel: transformer_forward.28
$region0: #{transformer_forward.28}
  #allocation0 [shape = 'u32[]', space=smem, size = 0x4, offset = 0x4, fixed_abs, tag = 'smem constant byte address 0x4 - core index']
  #allocation1 [shape = 'u32[144,128]{1,0:T(1,128)}', space=vmem, size = 0x12000, scoped, tag = 'internal scratch']
  #allocation2 [shape = 'f32[16,32]{1,0:T(8,128)}', space=vmem, size = 0x2000, scoped, tag = 'scratch operand']
  %s0 = inlined_call_operand.vmem [shape: bf16[16,32], index: 0, kind: input, shape index: {}]
  %s1 = inlined_call_operand.vmem [shape: bf16[32,64], index: 1, kind: input, shape index: {}]
  %s2 = inlined_call_operand.vmem [shape: f32[1,64], index: 2, kind: input, shape index: {}]
  %s3 = inlined_call_operand.vmem [shape: bf16[64,32], index: 3, kind: input, shape index: {}]
  %s4 = inlined_call_operand.vmem [shape: f32[1,32], index: 4, kind: input, shape index: {}]
  %s5 = inlined_call_operand.vmem [shape: f32[1,32], index: 5, kind: input, shape index: {}]
  %s6 = inlined_call_operand.vmem [shape: f32[1,32], index: 6, kind: input, shape index: {}]
  %s7 = inlined_call_operand.vmem [shape: bf16[16,32], index: 7, kind: output, shape index: {}]
  %s8 = sld [smem:[#allocation0]]
  $region46: #{transformer_forward.28} parent=0
    _
  %s10 = ssub.s32 1, %s8
  %s11 = scalar_select 0, %s10, %s8
  // Predicated region
  $region2: #{transformer_forward.28} parent=0 // pred_check
    _
  $region3: #{transformer_forward.28} parent=0 // pred_check_branch
    %13 = sbr.rel (0) target = $region5
  $region4: #{transformer_forward.28} parent=0 // pred_region
    _
  $region5: #{transformer_forward.28} parent=0 // pred_fallthru
    _
  // Predicated region
  $region6: #{transformer_forward.28} parent=0 // pred_check
    _
  $region7: #{transformer_forward.28} parent=0 // pred_check_branch
    %15 = sbr.rel (0) target = $region9
  $region8: #{transformer_forward.28} parent=0 // pred_region
    _
  $region9: #{transformer_forward.28} parent=0 // pred_fallthru
    _
  // Predicated region
  $region10: #{transformer_forward.28} parent=0 // pred_check
    _
  $region11: #{transformer_forward.28} parent=0 // pred_check_branch
    %17 = sbr.rel (0) target = $region13
  $region12: #{transformer_forward.28} parent=0 // pred_region
    _
  $region13: #{transformer_forward.28} parent=0 // pred_fallthru
    _
  // Predicated region
  $region14: #{transformer_forward.28} parent=0 // pred_check
    _
  $region15: #{transformer_forward.28} parent=0 // pred_check_branch
    %19 = sbr.rel (0) target = $region17
  $region16: #{transformer_forward.28} parent=0 // pred_region
    _
  $region17: #{transformer_forward.28} parent=0 // pred_fallthru
    _
  // Predicated region
  $region18: #{transformer_forward.28} parent=0 // pred_check
    _
  $region19: #{transformer_forward.28} parent=0 // pred_check_branch
    %21 = sbr.rel (0) target = $region21
  $region20: #{transformer_forward.28} parent=0 // pred_region
    _
  $region21: #{transformer_forward.28} parent=0 // pred_fallthru
    _
  // Predicated region
  $region22: #{transformer_forward.28} parent=0 // pred_check
    _
  $region23: #{transformer_forward.28} parent=0 // pred_check_branch
    %23 = sbr.rel (0) target = $region25
  $region24: #{transformer_forward.28} parent=0 // pred_region
    _
  $region25: #{transformer_forward.28} parent=0 // pred_fallthru
    _
  // Predicated region
  $region26: #{transformer_forward.28} parent=0 // pred_check
    _
  $region27: #{transformer_forward.28} parent=0 // pred_check_branch
    %25 = sbr.rel (0) target = $region29
  $region28: #{transformer_forward.28} parent=0 // pred_region
    _
  $region29: #{transformer_forward.28} parent=0 // pred_fallthru
    _
  %p27 = scmp.eq.s32.totalorder 0, 0
  // Predicated region
  $region30: #{transformer_forward.28} parent=0 // pred_check
    %p28 = pneg %p27
  $region31: #{transformer_forward.28} parent=0 // pred_check_branch
    %30 = sbr.rel (%p28) target = $region33
  $region32: #{transformer_forward.28} parent=0 // pred_region
    %vm31 = vcmask 261120
    %32 = vst.msk [vmem:[#allocation2] sm:$0xff] %vm31, 0.0
    %33 = vst.msk [vmem:[#allocation2 + $0x8] sm:$0xff] %vm31, 0.0
  $region33: #{transformer_forward.28} parent=0 // pred_fallthru
    _
  %v34 = vld [vmem:[%s0] sm:$0xf]
  %v35 = vld [vmem:[%s0 + $0x4] sm:$0xf]
  %v36 = vld [vmem:[%s1] sm:$0xf]
  %v37 = vld [vmem:[%s1 + $0x4] sm:$0xf]
  %v38 = vld [vmem:[%s1 + $0x8] sm:$0xf]
  %v39 = vld [vmem:[%s1 + $0xc] sm:$0xf]
  %v40 = vld [vmem:[%s2] sm:$0x1]
  %v42 = vlaneseq
  %v43 = vshrl.u32 %v42, 7
  %v44 = vsub.s32 0, %v43
  %v45 = vrot.slane %v40, %v44
  %v49 = vunpack.c.l.b16 %v34
  %v50 = vunpack.c.l.b16 %v35
  %v51 = vpack.c.b16 %v50, %v49
  %v56 = vunpack.c.l.b16 %v36
  %v57 = vunpack.c.l.b16 %v37
  %v58 = vunpack.c.l.b16 %v38
  %v59 = vunpack.c.l.b16 %v39
  %v60 = vpack.c.b16 %v57, %v56
  %v61 = vpack.c.b16 %v59, %v58
  %vm64 = vcmask 261120
  %v66 = vsel %vm64, %v51, 0
  %68 = vmatprep.subr.bf16.mxu0 0
  %69 = vmatpush1.bf16.msra.mxu0 0
  %70 = vmatprep.subr.bf16.mxu0 0
  %71 = vmatpush1.bf16.msra.mxu0 0
  %72 = vmatprep.subr.bf16.mxu0 0
  %73 = vmatpush1.bf16.msra.mxu0 0
  %74 = vmatprep.subr.bf16.mxu0 0
  %75 = vmatpush1.bf16.msra.mxu0 0
  %76 = vmatprep.subr.bf16.mxu0 0
  %77 = vmatpush1.bf16.msra.mxu0 0
  %78 = vmatprep.subr.bf16.mxu0 0
  %79 = vmatpush1.bf16.msra.mxu0 0
  %80 = vmatprep.subr.bf16.mxu0 0
  %81 = vmatpush1.bf16.msra.mxu0 %v61
  %82 = vmatprep.subr.bf16.mxu0 0
  %83 = vmatpush1.bf16.msra.mxu0 %v60
  %84 = vmatprep.subr.bf16.mxu0 0
  %85 = vmatpush2.bf16.msra.mxu0 0
  %86 = vmatprep.subr.bf16.mxu0 0
  %87 = vmatpush2.bf16.msra.mxu0 0
  %88 = vmatprep.subr.bf16.mxu0 0
  %89 = vmatpush2.bf16.msra.mxu0 0
  %90 = vmatprep.subr.bf16.mxu0 0
  %91 = vmatpush2.bf16.msra.mxu0 0
  %92 = vmatprep.subr.bf16.mxu0 0
  %93 = vmatpush2.bf16.msra.mxu0 0
  %94 = vmatprep.subr.bf16.mxu0 0
  %95 = vmatpush2.bf16.msra.mxu0 0
  %96 = vmatprep.subr.bf16.mxu0 0
  %97 = vmatpush2.bf16.msra.mxu0 0
  %98 = vmatprep.subr.bf16.mxu0 0
  %99 = vmatpush2.bf16.msra.mxu0 0
  %100 = vmatprep.mubr.bf16.mxu0 0
  %101 = vmatmul.mubr.bf16.gmra.mxu0 %v66
  %v102 = vpop.f32.mrf.mxu0
  %v103 = vadd.f32 %v45, %v102
  %v104 = vpop.f32.mrf.mxu0
  %v105 = vpop.f32.mrf.mxu0
  %v106 = vadd.f32 %v45, %v105
  %v107 = vpop.f32.mrf.mxu0
  %108 = vdwg.mxu0
  %v109 = vmax.f32 %v103, 0.0
  %v110 = vmax.f32 %v106, 0.0
  %v111 = vld [vmem:[#allocation2] sm:$0xff]
  %v112 = vld [vmem:[#allocation2 + $0x8] sm:$0xff]
  %v113 = vpack.c.bf16 %v110, %v109
  %v114 = vld [vmem:[%s3] sm:$0xf]
  %v115 = vld [vmem:[%s3 + $0x4] sm:$0xf]
  %v116 = vld [vmem:[%s3 + $0x8] sm:$0xf]
  %v117 = vld [vmem:[%s3 + $0xc] sm:$0xf]
  %v118 = vld [vmem:[%s3 + $0x10] sm:$0xf]
  %v119 = vld [vmem:[%s3 + $0x14] sm:$0xf]
  %v120 = vld [vmem:[%s3 + $0x18] sm:$0xf]
  %v121 = vld [vmem:[%s3 + $0x1c] sm:$0xf]
  %v130 = vunpack.c.l.b16 %v114
  %v131 = vunpack.c.l.b16 %v115
  %v132 = vunpack.c.l.b16 %v116
  %v133 = vunpack.c.l.b16 %v117
  %v134 = vunpack.c.l.b16 %v118
  %v135 = vunpack.c.l.b16 %v119
  %v136 = vunpack.c.l.b16 %v120
  %v137 = vunpack.c.l.b16 %v121
  %v138 = vpack.c.b16 %v131, %v130
  %v139 = vpack.c.b16 %v133, %v132
  %v140 = vpack.c.b16 %v135, %v134
  %v141 = vpack.c.b16 %v137, %v136
  %vm146 = vcmask 523264
  %v148 = vsel %vm146, %v113, 0
  %150 = vmatprep.subr.bf16.mxu0 0
  %151 = vmatpush1.bf16.msra.mxu0 0
  %152 = vmatprep.subr.bf16.mxu0 0
  %153 = vmatpush1.bf16.msra.mxu0 0
  %154 = vmatprep.subr.bf16.mxu0 0
  %155 = vmatpush1.bf16.msra.mxu0 0
  %156 = vmatprep.subr.bf16.mxu0 0
  %157 = vmatpush1.bf16.msra.mxu0 0
  %158 = vmatprep.subr.bf16.mxu0 0
  %159 = vmatpush1.bf16.msra.mxu0 %v141
  %160 = vmatprep.subr.bf16.mxu0 0
  %161 = vmatpush1.bf16.msra.mxu0 %v140
  %162 = vmatprep.subr.bf16.mxu0 0
  %163 = vmatpush1.bf16.msra.mxu0 %v139
  %164 = vmatprep.subr.bf16.mxu0 0
  %165 = vmatpush1.bf16.msra.mxu0 %v138
  %166 = vmatprep.subr.bf16.mxu0 0
  %167 = vmatpush2.bf16.msra.mxu0 0
  %168 = vmatprep.subr.bf16.mxu0 0
  %169 = vmatpush2.bf16.msra.mxu0 0
  %170 = vmatprep.subr.bf16.mxu0 0
  %171 = vmatpush2.bf16.msra.mxu0 0
  %172 = vmatprep.subr.bf16.mxu0 0
  %173 = vmatpush2.bf16.msra.mxu0 0
  %174 = vmatprep.subr.bf16.mxu0 0
  %175 = vmatpush2.bf16.msra.mxu0 0
  %176 = vmatprep.subr.bf16.mxu0 0
  %177 = vmatpush2.bf16.msra.mxu0 0
  %178 = vmatprep.subr.bf16.mxu0 0
  %179 = vmatpush2.bf16.msra.mxu0 0
  %180 = vmatprep.subr.bf16.mxu0 0
  %181 = vmatpush2.bf16.msra.mxu0 0
  %182 = vmatprep.mubr.bf16.mxu0 0
  %183 = vmatmul.mubr.bf16.gmra.mxu0 %v148
  %v184 = vpop.f32.mrf.mxu0
  %v185 = vadd.f32 0.0, %v184
  %v186 = vpop.f32.mrf.mxu0
  %v187 = vpop.f32.mrf.mxu0
  %v188 = vadd.f32 0.0, %v187
  %v189 = vpop.f32.mrf.mxu0
  %190 = vdwg.mxu0
  %v191 = vadd.f32 %v111, %v185
  %v192 = vadd.f32 %v112, %v188
  %193 = vst.msk [vmem:[#allocation2] sm:$0xff] %vm64, %v191
  %194 = vst.msk [vmem:[#allocation2 + $0x8] sm:$0xff] %vm64, %v192
  // Predicated region
  $region34: #{transformer_forward.28} parent=0 // pred_check
    %p195 = pneg %p27
  $region35: #{transformer_forward.28} parent=0 // pred_check_branch
    %197 = sbr.rel (%p195) target = $region37
  $region36: #{transformer_forward.28} parent=0 // pred_region
    %v198 = vld [vmem:[#allocation2] sm:$0xff]
    %v199 = vld [vmem:[#allocation2 + $0x8] sm:$0xff]
    %v200 = vld [vmem:[%s4] sm:$0x1]
    %v202 = vlaneseq
    %v203 = vshrl.u32 %v202, 7
    %v204 = vsub.s32 0, %v203
    %v205 = vrot.slane %v200, %v204
    %v207 = vadd.f32 %v198, %v205
    %v208 = vadd.f32 %v199, %v205
    %v209 = vld [vmem:[%s0] sm:$0xf]
    %v210 = vld [vmem:[%s0 + $0x4] sm:$0xf]
    %v211 = vunpack.c.l.bf16 %v209
    %v212 = vunpack.c.l.bf16 %v210
    %v213 = vadd.f32 %v207, %v211
    %v214 = vadd.f32 %v208, %v212
    %v215 = vsel %vm64, %v213, 0.0
    %216 = vadd.xlane.f32.xlu0 %v215
    %v217 = vpop.xlane.xlu0 %216
    %v218 = vsel %vm64, %v214, 0.0
    %219 = vadd.xlane.f32.xlu0 %v218
    %v220 = vpop.xlane.xlu0 %219
    %v221 = vrcp.pop 32.0
    %v222 = vmul.f32 %v217, %v221
    %v223 = vmul.f32 %v220, %v221
    %v224 = vsub.f32 %v213, %v222
    %v225 = vsub.f32 %v214, %v223
    %v226 = vmul.f32 %v224, %v224
    %v227 = vmul.f32 %v225, %v225
    %v228 = vsel %vm64, %v226, 0.0
    %229 = vadd.xlane.f32.xlu0 %v228
    %v230 = vpop.xlane.xlu0 %229
    %v231 = vsel %vm64, %v227, 0.0
    %232 = vadd.xlane.f32.xlu0 %v231
    %v233 = vpop.xlane.xlu0 %232
    %v234 = vmul.f32 %v230, %v221
    %v235 = vmul.f32 %v233, %v221
    %v236 = vadd.f32 %v234, 1e-05
    %v237 = vadd.f32 %v235, 1e-05
    %v238 = vrsqrt.pop %v236
    %v239 = vrsqrt.pop %v237
    %v240 = vmul.f32 %v224, %v238
    %v241 = vmul.f32 %v225, %v239
    %v242 = vld [vmem:[%s5] sm:$0x1]
    %v244 = vlaneseq
    %v245 = vshrl.u32 %v244, 7
    %v246 = vsub.s32 0, %v245
    %v247 = vrot.slane %v242, %v246
    %v249 = vmul.f32 %v240, %v247
    %v250 = vmul.f32 %v241, %v247
    %v251 = vld [vmem:[%s6] sm:$0x1]
    %v253 = vlaneseq
    %v254 = vshrl.u32 %v253, 7
    %v255 = vsub.s32 0, %v254
    %v256 = vrot.slane %v251, %v255
    %v258 = vadd.f32 %v249, %v256
    %v259 = vadd.f32 %v250, %v256
    %v260 = vpack.c.bf16 %v259, %v258
    %v262 = vunpack.c.l.b16 %v260
    %v263 = vunpack.c.h.b16 %v260
    %v264 = vpack.c.b16 %v262, %v262
    %v265 = vpack.c.b16 %v263, %v263
    %vm268 = vcmask 257024
    %269 = vst.msk [vmem:[%s7] sm:$0xf] %vm268, %v264
    %270 = vst.msk [vmem:[%s7 + $0x4] sm:$0xf] %vm268, %v265
  $region37: #{transformer_forward.28} parent=0 // pred_fallthru
    _
  // Predicated region
  $region38: #{transformer_forward.28} parent=0 // pred_check
    _
  $region39: #{transformer_forward.28} parent=0 // pred_check_branch
    %272 = sbr.rel (0) target = $region41
  $region40: #{transformer_forward.28} parent=0 // pred_region
    _
  $region41: #{transformer_forward.28} parent=0 // pred_fallthru
    _
  // Predicated region
  $region42: #{transformer_forward.28} parent=0 // pred_check
    _
  $region43: #{transformer_forward.28} parent=0 // pred_check_branch
    %274 = sbr.rel (0) target = $region45
  $region44: #{transformer_forward.28} parent=0 // pred_region
    _
  $region45: #{transformer_forward.28} parent=0 // pred_fallthru
    _

// kernel: transformer_forward.26
$region0: #{transformer_forward.26}
  #allocation0 [shape = 'u32[]', space=smem, size = 0x4, offset = 0x4, fixed_abs, tag = 'smem constant byte address 0x4 - core index']
  #allocation1 [shape = 'u32[144,128]{1,0:T(1,128)}', space=vmem, size = 0x12000, scoped, tag = 'internal scratch']
  %s0 = inlined_call_operand.vmem [shape: f32[2,1,8], index: 0, kind: input, shape index: {}]
  %s1 = inlined_call_operand.vmem [shape: bf16[2,8,96], index: 1, kind: input, shape index: {}, may-alias: {1,2}]
  %s2 = inlined_call_operand.vmem [shape: bf16[2,8,96], index: 2, kind: input, shape index: {}, may-alias: {1,2}]
  %s3 = inlined_call_operand.vmem [shape: bf16[2,8,32], index: 3, kind: output, shape index: {}]
  %s4 = sld [smem:[#allocation0]]
  $region45: #{transformer_forward.26} parent=0
    _
  %s6 = ssub.s32 1, %s4
  %s7 = scalar_select 0, %s6, %s4
  loop: start=0, step=1, limit=4
  $region2: #{transformer_forward.26} parent=0 // loop_pre_header
    _
  $region3: #{transformer_forward.26} parent=0 // loop_header
    %s9 = sphi 0, %s13
    %p10 = scmp.ge.s32.totalorder %s9, 4
    %s16 = sphi 0, %s28
    %s17 = sphi 0, %s24
    %s18 = sphi 0, %s16
    %s19 = sphi 0, %s17
    %s20 = sphi 0, %s18
    %s21 = sphi 0, %s19
    %s31 = sphi 0, %s33
    %s34 = sphi 0, %s31
    %s35 = sphi 0, %s34
    %s51 = sphi 0, %s35
    %s59 = sphi 0, %s61
    %s62 = sphi 0, %s59
    %s63 = sphi 0, %s62
    %s79 = sphi 0, %s63
    %s85 = sphi 0, %s87
    %s88 = sphi 0, %s85
    %s89 = sphi 0, %s88
    %s105 = sphi 0, %s89
    %s113 = sphi 0, %s115
    %s116 = sphi 0, %s113
    %s117 = sphi 0, %s116
    %s133 = sphi 0, %s117
  $region4: #{transformer_forward.26} parent=0 // loop_header_branch
    %12 = sbr.rel (%p10) target = $region8
  $region5: #{transformer_forward.26} parent=0 // loop_body
    %s14 = ssub.s32 %s9, 1
    %s15 = ssub.s32 %s9, 2
    %s22 = sadd.s32 1, %s17
    %p23 = scmp.ge.s32.totalorder %s22, 1
    %s24 = scalar_select %p23, 0, %s22
    %s25 = sadd.s32 1, %s16
    %s26 = scalar_select %p23, %s25, %s16
    %p27 = scmp.ge.s32.totalorder %s26, 2
    %s28 = scalar_select %p27, 0, %s26
    %s29 = ssub.s32 %s16, %s28
    %p30 = scmp.eq.s32.totalorder %s29, 0
    %s32 = sadd.s32 %s31, 1
    %s33 = scalar_select %p30, %s31, %s32
    %p36 = pneg %p30
    %p37 = scmp.eq.s32.totalorder %s9, 1
    %p38 = por %p36, %p37
    %p39 = scmp.ne.s32.totalorder %s31, %s34
    %p40 = scmp.eq.s32.totalorder %s9, 0
    %p41 = por %p39, %p40
    %p42 = scmp.ne.s32.totalorder %s31, %s34
    %p43 = scmp.eq.s32.totalorder %s14, 1
    %p44 = por %p42, %p43
    %p45 = scmp.ne.s32.totalorder %s34, %s35
    %p46 = scmp.eq.s32.totalorder %s14, 0
    %p47 = por %p45, %p46
    %p48 = scmp.ne.s32.totalorder %s34, %s35
    %p49 = scmp.eq.s32.totalorder %s15, 1
    %p50 = por %p48, %p49
    %p52 = scmp.ne.s32.totalorder %s35, %s51
    %p53 = scmp.eq.s32.totalorder %s15, 0
    %p54 = por %p52, %p53
    %s55 = ssub.s32 %s16, %s28
    %s56 = ssub.s32 %s17, %s24
    %s57 = sor.u32 %s55, %s56
    %p58 = scmp.eq.s32.totalorder %s57, 0
    %s60 = sadd.s32 %s59, 1
    %s61 = scalar_select %p58, %s59, %s60
    %p64 = pneg %p58
    %p65 = scmp.eq.s32.totalorder %s9, 1
    %p66 = por %p64, %p65
    %p67 = scmp.ne.s32.totalorder %s59, %s62
    %p68 = scmp.eq.s32.totalorder %s9, 0
    %p69 = por %p67, %p68
    %p70 = scmp.ne.s32.totalorder %s59, %s62
    %p71 = scmp.eq.s32.totalorder %s14, 1
    %p72 = por %p70, %p71
    %p73 = scmp.ne.s32.totalorder %s62, %s63
    %p74 = scmp.eq.s32.totalorder %s14, 0
    %p75 = por %p73, %p74
    %p76 = scmp.ne.s32.totalorder %s62, %s63
    %p77 = scmp.eq.s32.totalorder %s15, 1
    %p78 = por %p76, %p77
    %p80 = scmp.ne.s32.totalorder %s63, %s79
    %p81 = scmp.eq.s32.totalorder %s15, 0
    %p82 = por %p80, %p81
    %s83 = ssub.s32 %s16, %s28
    %p84 = scmp.eq.s32.totalorder %s83, 0
    %s86 = sadd.s32 %s85, 1
    %s87 = scalar_select %p84, %s85, %s86
    %p90 = pneg %p84
    %p91 = scmp.eq.s32.totalorder %s9, 1
    %p92 = por %p90, %p91
    %p93 = scmp.ne.s32.totalorder %s85, %s88
    %p94 = scmp.eq.s32.totalorder %s9, 0
    %p95 = por %p93, %p94
    %p96 = scmp.ne.s32.totalorder %s85, %s88
    %p97 = scmp.eq.s32.totalorder %s14, 1
    %p98 = por %p96, %p97
    %p99 = scmp.ne.s32.totalorder %s88, %s89
    %p100 = scmp.eq.s32.totalorder %s14, 0
    %p101 = por %p99, %p100
    %p102 = scmp.ne.s32.totalorder %s88, %s89
    %p103 = scmp.eq.s32.totalorder %s15, 1
    %p104 = por %p102, %p103
    %p106 = scmp.ne.s32.totalorder %s89, %s105
    %p107 = scmp.eq.s32.totalorder %s15, 0
    %p108 = por %p106, %p107
    %s109 = ssub.s32 %s16, %s28
    %s110 = ssub.s32 %s17, %s24
    %s111 = sor.u32 %s109, %s110
    %p112 = scmp.eq.s32.totalorder %s111, 0
    %s114 = sadd.s32 %s113, 1
    %s115 = scalar_select %p112, %s113, %s114
    %p118 = pneg %p112
    %p119 = scmp.eq.s32.totalorder %s9, 1
    %p120 = por %p118, %p119
    %p121 = scmp.ne.s32.totalorder %s113, %s116
    %p122 = scmp.eq.s32.totalorder %s9, 0
    %p123 = por %p121, %p122
    %p124 = scmp.ne.s32.totalorder %s113, %s116
    %p125 = scmp.eq.s32.totalorder %s14, 1
    %p126 = por %p124, %p125
    %p127 = scmp.ne.s32.totalorder %s116, %s117
    %p128 = scmp.eq.s32.totalorder %s14, 0
    %p129 = por %p127, %p128
    %p130 = scmp.ne.s32.totalorder %s116, %s117
    %p131 = scmp.eq.s32.totalorder %s15, 1
    %p132 = por %p130, %p131
    %p134 = scmp.ne.s32.totalorder %s117, %s133
    %p135 = scmp.eq.s32.totalorder %s15, 0
    %p136 = por %p134, %p135
    %p137 = scmp.le.s32.totalorder 1, %s9
    %p138 = scmp.lt.s32.totalorder %s9, 3
    %p139 = pnand %p137, %p138
    %p140 = pneg %p139
    // Predicated region
    $region9: #{transformer_forward.26} parent=5 // pred_check
      _
    $region10: #{transformer_forward.26} parent=5 // pred_check_branch
      %142 = sbr.rel (%p139) target = $region12
    $region11: #{transformer_forward.26} parent=5 // pred_region
      %s143 = ssub.s32 %s9, 1
    $region12: #{transformer_forward.26} parent=5 // pred_fallthru
      _
    %p144 = scmp.lt.s32.totalorder %s9, 2
    // Predicated region
    $region13: #{transformer_forward.26} parent=5 // pred_check
      %p145 = pneg %p144
    $region14: #{transformer_forward.26} parent=5 // pred_check_branch
      %147 = sbr.rel (%p145) target = $region16
    $region15: #{transformer_forward.26} parent=5 // pred_region
      // Predicated region
      $region17: #{transformer_forward.26} parent=15 // pred_check
        %p148 = pneg %p41
      $region18: #{transformer_forward.26} parent=15 // pred_check_branch
        %150 = sbr.rel (%p148) target = $region20
      $region19: #{transformer_forward.26} parent=15 // pred_region
        %p151 = scmp.lt.s32.totalorder %s16, 1
        %s152 = scalar_select %p151, %s16, 1
        %s153 = scalar_lea.vmem %s0, %s152
      $region20: #{transformer_forward.26} parent=15 // pred_fallthru
        _
      // Predicated region
      $region21: #{transformer_forward.26} parent=15 // pred_check
        %p154 = pneg %p69
      $region22: #{transformer_forward.26} parent=15 // pred_check_branch
        %156 = sbr.rel (%p154) target = $region24
      $region23: #{transformer_forward.26} parent=15 // pred_region
        %p157 = scmp.lt.s32.totalorder %s16, 1
        %s158 = scalar_select %p157, %s16, 1
        %p159 = scmp.lt.s32.totalorder %s17, 0
        %s160 = scalar_select %p159, %s17, 0
        %s161 = sadd.s32 %s160, %s158
        %s162 = smul.addr %s161, 4
        %s163 = scalar_lea.vmem %s1, %s162
      $region24: #{transformer_forward.26} parent=15 // pred_fallthru
        _
      // Predicated region
      $region25: #{transformer_forward.26} parent=15 // pred_check
        %p164 = pneg %p95
      $region26: #{transformer_forward.26} parent=15 // pred_check_branch
        %166 = sbr.rel (%p164) target = $region28
      $region27: #{transformer_forward.26} parent=15 // pred_region
        %p167 = scmp.lt.s32.totalorder %s16, 1
        %s168 = scalar_select %p167, %s16, 1
        %s169 = smul.addr %s168, 4
        %s170 = scalar_lea.vmem %s2, %s169
      $region28: #{transformer_forward.26} parent=15 // pred_fallthru
        _
    $region16: #{transformer_forward.26} parent=5 // pred_fallthru
      _
    %p171 = scmp.le.s32.totalorder 1, %s9
    %p172 = scmp.lt.s32.totalorder %s9, 3
    %p173 = pnand %p171, %p172
    %p174 = pneg %p173
    // Predicated region
    $region29: #{transformer_forward.26} parent=5 // pred_check
      _
    $region30: #{transformer_forward.26} parent=5 // pred_check_branch
      %176 = sbr.rel (%p173) target = $region32
    $region31: #{transformer_forward.26} parent=5 // pred_region
      %s177 = ssub.s32 %s9, 1
      %p178 = scmp.lt.s32.totalorder %s18, 1
      %s179 = scalar_select %p178, %s18, 1
      %s180 = scalar_lea.vmem %s0, %s179
      %p181 = pneg %p47
      %p182 = pneg %p44
      %p183 = scmp.lt.s32.totalorder %s18, 1
      %s184 = scalar_select %p183, %s18, 1
      %p185 = scmp.lt.s32.totalorder %s19, 0
      %s186 = scalar_select %p185, %s19, 0
      %s187 = sadd.s32 %s186, %s184
      %s188 = smul.addr %s187, 4
      %s189 = scalar_lea.vmem %s1, %s188
      %p190 = pneg %p75
      %p191 = pneg %p72
      %p192 = scmp.lt.s32.totalorder %s18, 1
      %s193 = scalar_select %p192, %s18, 1
      %s194 = smul.addr %s193, 4
      %s195 = scalar_lea.vmem %s2, %s194
      %p196 = pneg %p101
      %p197 = pneg %p98
      %p198 = pneg %p129
      %p199 = pneg %p126
      %p200 = scmp.lt.s32.totalorder %s18, 1
      %s201 = scalar_select %p200, %s18, 1
      %p202 = scmp.lt.s32.totalorder %s19, 0
      %s203 = scalar_select %p202, %s19, 0
      %s204 = sadd.s32 %s203, %s201
      %s205 = smul.addr %s204, 4
      %s206 = scalar_lea.vmem %s3, %s205
      %p207 = scmp.lt.s32.totalorder %s18, 1
      %s208 = scalar_select %p207, %s18, 1
      %s209 = scalar_lea.vmem %s0, %s208
      %p210 = scmp.lt.s32.totalorder %s18, 1
      %s211 = scalar_select %p210, %s18, 1
      %p212 = scmp.lt.s32.totalorder %s19, 0
      %s213 = scalar_select %p212, %s19, 0
      %s214 = sadd.s32 %s213, %s211
      %s215 = smul.addr %s214, 4
      %s216 = scalar_lea.vmem %s1, %s215
      %p217 = scmp.lt.s32.totalorder %s18, 1
      %s218 = scalar_select %p217, %s18, 1
      %s219 = smul.addr %s218, 4
      %s220 = scalar_lea.vmem %s2, %s219
      %p221 = scmp.lt.s32.totalorder %s18, 1
      %s222 = scalar_select %p221, %s18, 1
      %p223 = scmp.lt.s32.totalorder %s19, 0
      %s224 = scalar_select %p223, %s19, 0
      %s225 = sadd.s32 %s224, %s222
      %s226 = smul.addr %s225, 4
      %s227 = scalar_lea.vmem %s3, %s226
      %v230 = vld [vmem:[%s209] sm:$0x1]
      %v231 = vld [vmem:[%s216] sm:$0xf]
      %v232 = vmul.bf16 %v231, 1052065461
      %v233 = vld [vmem:[%s220] sm:$0xf]
      %v235 = vlaneseq
      %v236 = vshrl.u32 %v235, 7
      %v237 = vsub.s32 0, %v236
      %v238 = vrot.slane %v230, %v237
      %v241 = vunpack.c.l.b16 %v233
      %v242 = vpack.c.b16 %v241, %v241
      %243 = vrot.lane.b32.xlu0 %v242, 96
      %v244 = vpop.permute.xlu0 %243
      %vm245 = vcmask 64512
      %v247 = vsel %vm245, %v232, 0
      %v250 = vsel %vm245, %v244, 0
      %252 = vmatprep.subr.bf16.mxu0 0
      %253 = vmatpush1.bf16.xpose.msra.mxu0 0
      %254 = vmatprep.subr.bf16.mxu0 0
      %255 = vmatpush1.bf16.xpose.msra.mxu0 0
      %256 = vmatprep.subr.bf16.mxu0 0
      %257 = vmatpush1.bf16.xpose.msra.mxu0 0
      %258 = vmatprep.subr.bf16.mxu0 0
      %259 = vmatpush1.bf16.xpose.msra.mxu0 0
      %260 = vmatprep.subr.bf16.mxu0 0
      %261 = vmatpush1.bf16.xpose.msra.mxu0 0
      %262 = vmatprep.subr.bf16.mxu0 0
      %263 = vmatpush1.bf16.xpose.msra.mxu0 0
      %264 = vmatprep.subr.bf16.mxu0 0
      %265 = vmatpush1.bf16.xpose.msra.mxu0 0
      %266 = vmatprep.subr.bf16.mxu0 0
      %267 = vmatpush1.bf16.xpose.msra.mxu0 %v250
      %268 = vmatprep.subr.bf16.mxu0 0
      %269 = vmatpush2.bf16.xpose.msra.mxu0 0
      %270 = vmatprep.subr.bf16.mxu0 0
      %271 = vmatpush2.bf16.xpose.msra.mxu0 0
      %272 = vmatprep.subr.bf16.mxu0 0
      %273 = vmatpush2.bf16.xpose.msra.mxu0 0
      %274 = vmatprep.subr.bf16.mxu0 0
      %275 = vmatpush2.bf16.xpose.msra.mxu0 0
      %276 = vmatprep.subr.bf16.mxu0 0
      %277 = vmatpush2.bf16.xpose.msra.mxu0 0
      %278 = vmatprep.subr.bf16.mxu0 0
      %279 = vmatpush2.bf16.xpose.msra.mxu0 0
      %280 = vmatprep.subr.bf16.mxu0 0
      %281 = vmatpush2.bf16.xpose.msra.mxu0 0
      %282 = vmatprep.subr.bf16.mxu0 0
      %283 = vmatpush2.bf16.xpose.msra.mxu0 0
      %284 = vmatprep.mubr.bf16.mxu0 0
      %285 = vmatmul.mubr.bf16.gmra.mxu0 %v247
      %v286 = vpop.f32.mrf.mxu0
      %v287 = vadd.f32 %v238, %v286
      %v288 = vpop.f32.mrf.mxu0
      %v289 = vpop.f32.mrf.mxu0
      %v290 = vpop.f32.mrf.mxu0
      %291 = vdwg.mxu0
      %v292 = vsel %vm245, %v287, -inf
      %293 = vmax.xlane.f32.xlu0 %v292
      %v294 = vpop.xlane.xlu0 %293
      %v295 = vsub.f32 %v287, %v294
      %v296 = vmul.f32 %v295, 1.442695
      %v297 = vpow.pop %v296
      %v298 = vsel %vm245, %v297, 0.0
      %299 = vadd.xlane.f32.xlu0 %v298
      %v300 = vpop.xlane.xlu0 %299
      %v301 = vrcp.pop %v300
      %v302 = vmul.f32 %v297, %v301
      %v303 = vpack.c.bf16 %v302, %v302
      %304 = vrot.lane.b32.xlu0 %v242, 64
      %v305 = vpop.permute.xlu0 %304
      %v307 = vsel %vm245, %v303, 0
      %vm309 = vcmask 1043456
      %v311 = vsel %vm309, %v305, 0
      %313 = vmatprep.subr.bf16.mxu0 0
      %314 = vmatpush1.bf16.msra.mxu0 0
      %315 = vmatprep.subr.bf16.mxu0 0
      %316 = vmatpush1.bf16.msra.mxu0 0
      %317 = vmatprep.subr.bf16.mxu0 0
      %318 = vmatpush1.bf16.msra.mxu0 0
      %319 = vmatprep.subr.bf16.mxu0 0
      %320 = vmatpush1.bf16.msra.mxu0 0
      %321 = vmatprep.subr.bf16.mxu0 0
      %322 = vmatpush1.bf16.msra.mxu0 0
      %323 = vmatprep.subr.bf16.mxu0 0
      %324 = vmatpush1.bf16.msra.mxu0 0
      %325 = vmatprep.subr.bf16.mxu0 0
      %326 = vmatpush1.bf16.msra.mxu0 0
      %327 = vmatprep.subr.bf16.mxu0 0
      %328 = vmatpush1.bf16.msra.mxu0 %v311
      %329 = vmatprep.subr.bf16.mxu0 0
      %330 = vmatpush2.bf16.msra.mxu0 0
      %331 = vmatprep.subr.bf16.mxu0 0
      %332 = vmatpush2.bf16.msra.mxu0 0
      %333 = vmatprep.subr.bf16.mxu0 0
      %334 = vmatpush2.bf16.msra.mxu0 0
      %335 = vmatprep.subr.bf16.mxu0 0
      %336 = vmatpush2.bf16.msra.mxu0 0
      %337 = vmatprep.subr.bf16.mxu0 0
      %338 = vmatpush2.bf16.msra.mxu0 0
      %339 = vmatprep.subr.bf16.mxu0 0
      %340 = vmatpush2.bf16.msra.mxu0 0
      %341 = vmatprep.subr.bf16.mxu0 0
      %342 = vmatpush2.bf16.msra.mxu0 0
      %343 = vmatprep.subr.bf16.mxu0 0
      %344 = vmatpush2.bf16.msra.mxu0 0
      %345 = vmatprep.mubr.bf16.mxu0 0
      %346 = vmatmul.mubr.bf16.gmra.mxu0 %v307
      %v347 = vpop.f32.mrf.mxu0
      %v348 = vadd.f32 0.0, %v347
      %v349 = vpop.f32.mrf.mxu0
      %v350 = vpop.f32.mrf.mxu0
      %v351 = vpop.f32.mrf.mxu0
      %352 = vdwg.mxu0
      %v353 = vpack.c.bf16 %v348, %v348
      %vm354 = vcmask 60416
      %355 = vst.msk [vmem:[%s227] sm:$0xf] %vm354, %v353
      %v356 = vld [vmem:[%s216] sm:$0xf]
      %v357 = vmul.bf16 %v356, 1052065461
      %v358 = vld [vmem:[%s220] sm:$0xf]
      %v360 = vunpack.c.l.b16 %v357
      %v361 = vpack.c.b16 %v360, %v360
      %362 = vrot.lane.b32.xlu0 %v361, 120
      %v363 = vpop.permute.xlu0 %362
      %v365 = vunpack.c.l.b16 %v358
      %v366 = vpack.c.b16 %v365, %v365
      %367 = vrot.lane.b32.xlu0 %v366, 88
      %v368 = vpop.permute.xlu0 %367
      %v370 = vsel %vm245, %v363, 0
      %v373 = vsel %vm245, %v368, 0
      %375 = vmatprep.subr.bf16.mxu0 0
      %376 = vmatpush1.bf16.xpose.msra.mxu0 0
      %377 = vmatprep.subr.bf16.mxu0 0
      %378 = vmatpush1.bf16.xpose.msra.mxu0 0
      %379 = vmatprep.subr.bf16.mxu0 0
      %380 = vmatpush1.bf16.xpose.msra.mxu0 0
      %381 = vmatprep.subr.bf16.mxu0 0
      %382 = vmatpush1.bf16.xpose.msra.mxu0 0
      %383 = vmatprep.subr.bf16.mxu0 0
      %384 = vmatpush1.bf16.xpose.msra.mxu0 0
      %385 = vmatprep.subr.bf16.mxu0 0
      %386 = vmatpush1.bf16.xpose.msra.mxu0 0
      %387 = vmatprep.subr.bf16.mxu0 0
      %388 = vmatpush1.bf16.xpose.msra.mxu0 0
      %389 = vmatprep.subr.bf16.mxu0 0
      %390 = vmatpush1.bf16.xpose.msra.mxu0 %v373
      %391 = vmatprep.subr.bf16.mxu0 0
      %392 = vmatpush2.bf16.xpose.msra.mxu0 0
      %393 = vmatprep.subr.bf16.mxu0 0
      %394 = vmatpush2.bf16.xpose.msra.mxu0 0
      %395 = vmatprep.subr.bf16.mxu0 0
      %396 = vmatpush2.bf16.xpose.msra.mxu0 0
      %397 = vmatprep.subr.bf16.mxu0 0
      %398 = vmatpush2.bf16.xpose.msra.mxu0 0
      %399 = vmatprep.subr.bf16.mxu0 0
      %400 = vmatpush2.bf16.xpose.msra.mxu0 0
      %401 = vmatprep.subr.bf16.mxu0 0
      %402 = vmatpush2.bf16.xpose.msra.mxu0 0
      %403 = vmatprep.subr.bf16.mxu0 0
      %404 = vmatpush2.bf16.xpose.msra.mxu0 0
      %405 = vmatprep.subr.bf16.mxu0 0
      %406 = vmatpush2.bf16.xpose.msra.mxu0 0
      %407 = vmatprep.mubr.bf16.mxu0 0
      %408 = vmatmul.mubr.bf16.gmra.mxu0 %v370
      %v409 = vpop.f32.mrf.mxu0
      %v410 = vadd.f32 %v238, %v409
      %v411 = vpop.f32.mrf.mxu0
      %v412 = vpop.f32.mrf.mxu0
      %v413 = vpop.f32.mrf.mxu0
      %414 = vdwg.mxu0
      %v415 = vsel %vm245, %v410, -inf
      %416 = vmax.xlane.f32.xlu0 %v415
      %v417 = vpop.xlane.xlu0 %416
      %v418 = vsub.f32 %v410, %v417
      %v419 = vmul.f32 %v418, 1.442695
      %v420 = vpow.pop %v419
      %v421 = vsel %vm245, %v420, 0.0
      %422 = vadd.xlane.f32.xlu0 %v421
      %v423 = vpop.xlane.xlu0 %422
      %v424 = vrcp.pop %v423
      %v425 = vmul.f32 %v420, %v424
      %v426 = vpack.c.bf16 %v425, %v425
      %427 = vrot.lane.b32.xlu0 %v366, 56
      %v428 = vpop.permute.xlu0 %427
      %v430 = vsel %vm245, %v426, 0
      %v433 = vsel %vm309, %v428, 0
      %435 = vmatprep.subr.bf16.mxu0 0
      %436 = vmatpush1.bf16.msra.mxu0 0
      %437 = vmatprep.subr.bf16.mxu0 0
      %438 = vmatpush1.bf16.msra.mxu0 0
      %439 = vmatprep.subr.bf16.mxu0 0
      %440 = vmatpush1.bf16.msra.mxu0 0
      %441 = vmatprep.subr.bf16.mxu0 0
      %442 = vmatpush1.bf16.msra.mxu0 0
      %443 = vmatprep.subr.bf16.mxu0 0
      %444 = vmatpush1.bf16.msra.mxu0 0
      %445 = vmatprep.subr.bf16.mxu0 0
      %446 = vmatpush1.bf16.msra.mxu0 0
      %447 = vmatprep.subr.bf16.mxu0 0
      %448 = vmatpush1.bf16.msra.mxu0 0
      %449 = vmatprep.subr.bf16.mxu0 0
      %450 = vmatpush1.bf16.msra.mxu0 %v433
      %451 = vmatprep.subr.bf16.mxu0 0
      %452 = vmatpush2.bf16.msra.mxu0 0
      %453 = vmatprep.subr.bf16.mxu0 0
      %454 = vmatpush2.bf16.msra.mxu0 0
      %455 = vmatprep.subr.bf16.mxu0 0
      %456 = vmatpush2.bf16.msra.mxu0 0
      %457 = vmatprep.subr.bf16.mxu0 0
      %458 = vmatpush2.bf16.msra.mxu0 0
      %459 = vmatprep.subr.bf16.mxu0 0
      %460 = vmatpush2.bf16.msra.mxu0 0
      %461 = vmatprep.subr.bf16.mxu0 0
      %462 = vmatpush2.bf16.msra.mxu0 0
      %463 = vmatprep.subr.bf16.mxu0 0
      %464 = vmatpush2.bf16.msra.mxu0 0
      %465 = vmatprep.subr.bf16.mxu0 0
      %466 = vmatpush2.bf16.msra.mxu0 0
      %467 = vmatprep.mubr.bf16.mxu0 0
      %468 = vmatmul.mubr.bf16.gmra.mxu0 %v430
      %v469 = vpop.f32.mrf.mxu0
      %v470 = vadd.f32 0.0, %v469
      %v471 = vpop.f32.mrf.mxu0
      %v472 = vpop.f32.mrf.mxu0
      %v473 = vpop.f32.mrf.mxu0
      %474 = vdwg.mxu0
      %v475 = vpack.c.bf16 %v470, %v470
      %v477 = vunpack.c.l.b16 %v475
      %v478 = vpack.c.b16 %v477, %v477
      %479 = vrot.lane.b32.xlu0 %v478, 8
      %v480 = vpop.permute.xlu0 %479
      %vm482 = vcmask 126016
      %483 = vst.msk [vmem:[%s227] sm:$0xf] %vm482, %v480
      %v484 = vld [vmem:[%s216] sm:$0xf]
      %v485 = vmul.bf16 %v484, 1052065461
      %v486 = vld [vmem:[%s220] sm:$0xf]
      %v488 = vunpack.c.l.b16 %v485
      %v489 = vpack.c.b16 %v488, %v488
      %490 = vrot.lane.b32.xlu0 %v489, 112
      %v491 = vpop.permute.xlu0 %490
      %v493 = vunpack.c.l.b16 %v486
      %v494 = vpack.c.b16 %v493, %v493
      %495 = vrot.lane.b32.xlu0 %v494, 80
      %v496 = vpop.permute.xlu0 %495
      %v498 = vsel %vm245, %v491, 0
      %v501 = vsel %vm245, %v496, 0
      %503 = vmatprep.subr.bf16.mxu0 0
      %504 = vmatpush1.bf16.xpose.msra.mxu0 0
      %505 = vmatprep.subr.bf16.mxu0 0
      %506 = vmatpush1.bf16.xpose.msra.mxu0 0
      %507 = vmatprep.subr.bf16.mxu0 0
      %508 = vmatpush1.bf16.xpose.msra.mxu0 0
      %509 = vmatprep.subr.bf16.mxu0 0
      %510 = vmatpush1.bf16.xpose.msra.mxu0 0
      %511 = vmatprep.subr.bf16.mxu0 0
      %512 = vmatpush1.bf16.xpose.msra.mxu0 0
      %513 = vmatprep.subr.bf16.mxu0 0
      %514 = vmatpush1.bf16.xpose.msra.mxu0 0
      %515 = vmatprep.subr.bf16.mxu0 0
      %516 = vmatpush1.bf16.xpose.msra.mxu0 0
      %517 = vmatprep.subr.bf16.mxu0 0
      %518 = vmatpush1.bf16.xpose.msra.mxu0 %v501
      %519 = vmatprep.subr.bf16.mxu0 0
      %520 = vmatpush2.bf16.xpose.msra.mxu0 0
      %521 = vmatprep.subr.bf16.mxu0 0
      %522 = vmatpush2.bf16.xpose.msra.mxu0 0
      %523 = vmatprep.subr.bf16.mxu0 0
      %524 = vmatpush2.bf16.xpose.msra.mxu0 0
      %525 = vmatprep.subr.bf16.mxu0 0
      %526 = vmatpush2.bf16.xpose.msra.mxu0 0
      %527 = vmatprep.subr.bf16.mxu0 0
      %528 = vmatpush2.bf16.xpose.msra.mxu0 0
      %529 = vmatprep.subr.bf16.mxu0 0
      %530 = vmatpush2.bf16.xpose.msra.mxu0 0
      %531 = vmatprep.subr.bf16.mxu0 0
      %532 = vmatpush2.bf16.xpose.msra.mxu0 0
      %533 = vmatprep.subr.bf16.mxu0 0
      %534 = vmatpush2.bf16.xpose.msra.mxu0 0
      %535 = vmatprep.mubr.bf16.mxu0 0
      %536 = vmatmul.mubr.bf16.gmra.mxu0 %v498
      %v537 = vpop.f32.mrf.mxu0
      %v538 = vadd.f32 %v238, %v537
      %v539 = vpop.f32.mrf.mxu0
      %v540 = vpop.f32.mrf.mxu0
      %v541 = vpop.f32.mrf.mxu0
      %542 = vdwg.mxu0
      %v543 = vsel %vm245, %v538, -inf
      %544 = vmax.xlane.f32.xlu0 %v543
      %v545 = vpop.xlane.xlu0 %544
      %v546 = vsub.f32 %v538, %v545
      %v547 = vmul.f32 %v546, 1.442695
      %v548 = vpow.pop %v547
      %v549 = vsel %vm245, %v548, 0.0
      %550 = vadd.xlane.f32.xlu0 %v549
      %v551 = vpop.xlane.xlu0 %550
      %v552 = vrcp.pop %v551
      %v553 = vmul.f32 %v548, %v552
      %v554 = vpack.c.bf16 %v553, %v553
      %555 = vrot.lane.b32.xlu0 %v494, 48
      %v556 = vpop.permute.xlu0 %555
      %v558 = vsel %vm245, %v554, 0
      %v561 = vsel %vm309, %v556, 0
      %563 = vmatprep.subr.bf16.mxu0 0
      %564 = vmatpush1.bf16.msra.mxu0 0
      %565 = vmatprep.subr.bf16.mxu0 0
      %566 = vmatpush1.bf16.msra.mxu0 0
      %567 = vmatprep.subr.bf16.mxu0 0
      %568 = vmatpush1.bf16.msra.mxu0 0
      %569 = vmatprep.subr.bf16.mxu0 0
      %570 = vmatpush1.bf16.msra.mxu0 0
      %571 = vmatprep.subr.bf16.mxu0 0
      %572 = vmatpush1.bf16.msra.mxu0 0
      %573 = vmatprep.subr.bf16.mxu0 0
      %574 = vmatpush1.bf16.msra.mxu0 0
      %575 = vmatprep.subr.bf16.mxu0 0
      %576 = vmatpush1.bf16.msra.mxu0 0
      %577 = vmatprep.subr.bf16.mxu0 0
      %578 = vmatpush1.bf16.msra.mxu0 %v561
      %579 = vmatprep.subr.bf16.mxu0 0
      %580 = vmatpush2.bf16.msra.mxu0 0
      %581 = vmatprep.subr.bf16.mxu0 0
      %582 = vmatpush2.bf16.msra.mxu0 0
      %583 = vmatprep.subr.bf16.mxu0 0
      %584 = vmatpush2.bf16.msra.mxu0 0
      %585 = vmatprep.subr.bf16.mxu0 0
      %586 = vmatpush2.bf16.msra.mxu0 0
      %587 = vmatprep.subr.bf16.mxu0 0
      %588 = vmatpush2.bf16.msra.mxu0 0
      %589 = vmatprep.subr.bf16.mxu0 0
      %590 = vmatpush2.bf16.msra.mxu0 0
      %591 = vmatprep.subr.bf16.mxu0 0
      %592 = vmatpush2.bf16.msra.mxu0 0
      %593 = vmatprep.subr.bf16.mxu0 0
      %594 = vmatpush2.bf16.msra.mxu0 0
      %595 = vmatprep.mubr.bf16.mxu0 0
      %596 = vmatmul.mubr.bf16.gmra.mxu0 %v558
      %v597 = vpop.f32.mrf.mxu0
      %v598 = vadd.f32 0.0, %v597
      %v599 = vpop.f32.mrf.mxu0
      %v600 = vpop.f32.mrf.mxu0
      %v601 = vpop.f32.mrf.mxu0
      %602 = vdwg.mxu0
      %v603 = vpack.c.bf16 %v598, %v598
      %v605 = vunpack.c.l.b16 %v603
      %v606 = vpack.c.b16 %v605, %v605
      %607 = vrot.lane.b32.xlu0 %v606, 16
      %v608 = vpop.permute.xlu0 %607
      %vm610 = vcmask 191616
      %611 = vst.msk [vmem:[%s227] sm:$0xf] %vm610, %v608
      %v612 = vld [vmem:[%s216] sm:$0xf]
      %v613 = vmul.bf16 %v612, 1052065461
      %v614 = vld [vmem:[%s220] sm:$0xf]
      %v616 = vunpack.c.l.b16 %v613
      %v617 = vpack.c.b16 %v616, %v616
      %618 = vrot.lane.b32.xlu0 %v617, 104
      %v619 = vpop.permute.xlu0 %618
      %v621 = vunpack.c.l.b16 %v614
      %v622 = vpack.c.b16 %v621, %v621
      %623 = vrot.lane.b32.xlu0 %v622, 72
      %v624 = vpop.permute.xlu0 %623
      %v626 = vsel %vm245, %v619, 0
      %v629 = vsel %vm245, %v624, 0
      %631 = vmatprep.subr.bf16.mxu0 0
      %632 = vmatpush1.bf16.xpose.msra.mxu0 0
      %633 = vmatprep.subr.bf16.mxu0 0
      %634 = vmatpush1.bf16.xpose.msra.mxu0 0
      %635 = vmatprep.subr.bf16.mxu0 0
      %636 = vmatpush1.bf16.xpose.msra.mxu0 0
      %637 = vmatprep.subr.bf16.mxu0 0
      %638 = vmatpush1.bf16.xpose.msra.mxu0 0
      %639 = vmatprep.subr.bf16.mxu0 0
      %640 = vmatpush1.bf16.xpose.msra.mxu0 0
      %641 = vmatprep.subr.bf16.mxu0 0
      %642 = vmatpush1.bf16.xpose.msra.mxu0 0
      %643 = vmatprep.subr.bf16.mxu0 0
      %644 = vmatpush1.bf16.xpose.msra.mxu0 0
      %645 = vmatprep.subr.bf16.mxu0 0
      %646 = vmatpush1.bf16.xpose.msra.mxu0 %v629
      %647 = vmatprep.subr.bf16.mxu0 0
      %648 = vmatpush2.bf16.xpose.msra.mxu0 0
      %649 = vmatprep.subr.bf16.mxu0 0
      %650 = vmatpush2.bf16.xpose.msra.mxu0 0
      %651 = vmatprep.subr.bf16.mxu0 0
      %652 = vmatpush2.bf16.xpose.msra.mxu0 0
      %653 = vmatprep.subr.bf16.mxu0 0
      %654 = vmatpush2.bf16.xpose.msra.mxu0 0
      %655 = vmatprep.subr.bf16.mxu0 0
      %656 = vmatpush2.bf16.xpose.msra.mxu0 0
      %657 = vmatprep.subr.bf16.mxu0 0
      %658 = vmatpush2.bf16.xpose.msra.mxu0 0
      %659 = vmatprep.subr.bf16.mxu0 0
      %660 = vmatpush2.bf16.xpose.msra.mxu0 0
      %661 = vmatprep.subr.bf16.mxu0 0
      %662 = vmatpush2.bf16.xpose.msra.mxu0 0
      %663 = vmatprep.mubr.bf16.mxu0 0
      %664 = vmatmul.mubr.bf16.gmra.mxu0 %v626
      %v665 = vpop.f32.mrf.mxu0
      %v666 = vadd.f32 %v238, %v665
      %v667 = vpop.f32.mrf.mxu0
      %v668 = vpop.f32.mrf.mxu0
      %v669 = vpop.f32.mrf.mxu0
      %670 = vdwg.mxu0
      %v671 = vsel %vm245, %v666, -inf
      %672 = vmax.xlane.f32.xlu0 %v671
      %v673 = vpop.xlane.xlu0 %672
      %v674 = vsub.f32 %v666, %v673
      %v675 = vmul.f32 %v674, 1.442695
      %v676 = vpow.pop %v675
      %v677 = vsel %vm245, %v676, 0.0
      %678 = vadd.xlane.f32.xlu0 %v677
      %v679 = vpop.xlane.xlu0 %678
      %v680 = vrcp.pop %v679
      %v681 = vmul.f32 %v676, %v680
      %v682 = vpack.c.bf16 %v681, %v681
      %683 = vrot.lane.b32.xlu0 %v622, 40
      %v684 = vpop.permute.xlu0 %683
      %v686 = vsel %vm245, %v682, 0
      %v689 = vsel %vm309, %v684, 0
      %691 = vmatprep.subr.bf16.mxu0 0
      %692 = vmatpush1.bf16.msra.mxu0 0
      %693 = vmatprep.subr.bf16.mxu0 0
      %694 = vmatpush1.bf16.msra.mxu0 0
      %695 = vmatprep.subr.bf16.mxu0 0
      %696 = vmatpush1.bf16.msra.mxu0 0
      %697 = vmatprep.subr.bf16.mxu0 0
      %698 = vmatpush1.bf16.msra.mxu0 0
      %699 = vmatprep.subr.bf16.mxu0 0
      %700 = vmatpush1.bf16.msra.mxu0 0
      %701 = vmatprep.subr.bf16.mxu0 0
      %702 = vmatpush1.bf16.msra.mxu0 0
      %703 = vmatprep.subr.bf16.mxu0 0
      %704 = vmatpush1.bf16.msra.mxu0 0
      %705 = vmatprep.subr.bf16.mxu0 0
      %706 = vmatpush1.bf16.msra.mxu0 %v689
      %707 = vmatprep.subr.bf16.mxu0 0
      %708 = vmatpush2.bf16.msra.mxu0 0
      %709 = vmatprep.subr.bf16.mxu0 0
      %710 = vmatpush2.bf16.msra.mxu0 0
      %711 = vmatprep.subr.bf16.mxu0 0
      %712 = vmatpush2.bf16.msra.mxu0 0
      %713 = vmatprep.subr.bf16.mxu0 0
      %714 = vmatpush2.bf16.msra.mxu0 0
      %715 = vmatprep.subr.bf16.mxu0 0
      %716 = vmatpush2.bf16.msra.mxu0 0
      %717 = vmatprep.subr.bf16.mxu0 0
      %718 = vmatpush2.bf16.msra.mxu0 0
      %719 = vmatprep.subr.bf16.mxu0 0
      %720 = vmatpush2.bf16.msra.mxu0 0
      %721 = vmatprep.subr.bf16.mxu0 0
      %722 = vmatpush2.bf16.msra.mxu0 0
      %723 = vmatprep.mubr.bf16.mxu0 0
      %724 = vmatmul.mubr.bf16.gmra.mxu0 %v686
      %v725 = vpop.f32.mrf.mxu0
      %v726 = vadd.f32 0.0, %v725
      %v727 = vpop.f32.mrf.mxu0
      %v728 = vpop.f32.mrf.mxu0
      %v729 = vpop.f32.mrf.mxu0
      %730 = vdwg.mxu0
      %v731 = vpack.c.bf16 %v726, %v726
      %v733 = vunpack.c.l.b16 %v731
      %v734 = vpack.c.b16 %v733, %v733
      %735 = vrot.lane.b32.xlu0 %v734, 24
      %v736 = vpop.permute.xlu0 %735
      %vm738 = vcmask 257216
      %739 = vst.msk [vmem:[%s227] sm:$0xf] %vm738, %v736
      %p740 = scmp.lt.s32.totalorder %s18, 1
      %s741 = scalar_select %p740, %s18, 1
      %p742 = scmp.lt.s32.totalorder %s19, 0
      %s743 = scalar_select %p742, %s19, 0
      %s744 = sadd.s32 %s743, %s741
      %s745 = smul.addr %s744, 4
      %s746 = scalar_lea.vmem %s3, %s745
      // Predicated region
      $region33: #{transformer_forward.26} parent=31 // pred_check
        %p747 = pneg %p126
      $region34: #{transformer_forward.26} parent=31 // pred_check_branch
        %749 = sbr.rel (%p747) target = $region36
      $region35: #{transformer_forward.26} parent=31 // pred_region
        _
      $region36: #{transformer_forward.26} parent=31 // pred_fallthru
        _
    $region32: #{transformer_forward.26} parent=5 // pred_fallthru
      _
    %p750 = scmp.le.s32.totalorder 2, %s9
    // Predicated region
    $region37: #{transformer_forward.26} parent=5 // pred_check
      %p751 = pneg %p750
    $region38: #{transformer_forward.26} parent=5 // pred_check_branch
      %753 = sbr.rel (%p751) target = $region40
    $region39: #{transformer_forward.26} parent=5 // pred_region
      %s754 = ssub.s32 %s9, 2
      // Predicated region
      $region41: #{transformer_forward.26} parent=39 // pred_check
        %p755 = pneg %p132
      $region42: #{transformer_forward.26} parent=39 // pred_check_branch
        %757 = sbr.rel (%p755) target = $region44
      $region43: #{transformer_forward.26} parent=39 // pred_region
        %p758 = scmp.lt.s32.totalorder %s20, 1
        %s759 = scalar_select %p758, %s20, 1
        %p760 = scmp.lt.s32.totalorder %s21, 0
        %s761 = scalar_select %p760, %s21, 0
        %s762 = sadd.s32 %s761, %s759
        %s763 = smul.addr %s762, 4
        %s764 = scalar_lea.vmem %s3, %s763
      $region44: #{transformer_forward.26} parent=39 // pred_fallthru
        _
    $region40: #{transformer_forward.26} parent=5 // pred_fallthru
      _
  $region6: #{transformer_forward.26} parent=0 // loop_footer
    %s13 = sadd.s32 1, %s9
  $region7: #{transformer_forward.26} parent=0 // loop_footer_branch
    %8 = sbr.rel target = $region3
  $region8: #{transformer_forward.26} parent=0 // loop_exit
    _

// kernel: transformer_forward.37
$region0: #{transformer_forward.37}
  #allocation0 [shape = 'u32[]', space=smem, size = 0x4, offset = 0x4, fixed_abs, tag = 'smem constant byte address 0x4 - core index']
  #allocation1 [shape = 'u32[144,128]{1,0:T(1,128)}', space=vmem, size = 0x12000, scoped, tag = 'internal scratch']
  #allocation2 [shape = 'f32[16,64]{1,0:T(8,128)}', space=vmem, size = 0x2000, scoped, tag = 'scratch operand']
  %s0 = inlined_call_operand.vmem [shape: bf16[16,32], index: 0, kind: input, shape index: {}]
  %s1 = inlined_call_operand.vmem [shape: bf16[32,64], index: 1, kind: input, shape index: {}]
  %s2 = inlined_call_operand.vmem [shape: f32[1,64], index: 2, kind: input, shape index: {}]
  %s3 = inlined_call_operand.vmem [shape: bf16[16,64], index: 3, kind: output, shape index: {}]
  %s4 = sld [smem:[#allocation0]]
  $region30: #{transformer_forward.37} parent=0
    _
  %s6 = ssub.s32 1, %s4
  %s7 = scalar_select 0, %s6, %s4
  // Predicated region
  $region2: #{transformer_forward.37} parent=0 // pred_check
    _
  $region3: #{transformer_forward.37} parent=0 // pred_check_branch
    %9 = sbr.rel (0) target = $region5
  $region4: #{transformer_forward.37} parent=0 // pred_region
    _
  $region5: #{transformer_forward.37} parent=0 // pred_fallthru
    _
  // Predicated region
  $region6: #{transformer_forward.37} parent=0 // pred_check
    _
  $region7: #{transformer_forward.37} parent=0 // pred_check_branch
    %11 = sbr.rel (0) target = $region9
  $region8: #{transformer_forward.37} parent=0 // pred_region
    _
  $region9: #{transformer_forward.37} parent=0 // pred_fallthru
    _
  // Predicated region
  $region10: #{transformer_forward.37} parent=0 // pred_check
    _
  $region11: #{transformer_forward.37} parent=0 // pred_check_branch
    %13 = sbr.rel (0) target = $region13
  $region12: #{transformer_forward.37} parent=0 // pred_region
    _
  $region13: #{transformer_forward.37} parent=0 // pred_fallthru
    _
  %p15 = scmp.eq.s32.totalorder 0, 0
  // Predicated region
  $region14: #{transformer_forward.37} parent=0 // pred_check
    %p16 = pneg %p15
  $region15: #{transformer_forward.37} parent=0 // pred_check_branch
    %18 = sbr.rel (%p16) target = $region17
  $region16: #{transformer_forward.37} parent=0 // pred_region
    %vm19 = vcmask 523264
    %20 = vst.msk [vmem:[#allocation2] sm:$0xff] %vm19, 0.0
    %21 = vst.msk [vmem:[#allocation2 + $0x8] sm:$0xff] %vm19, 0.0
  $region17: #{transformer_forward.37} parent=0 // pred_fallthru
    _
  %v22 = vld [vmem:[#allocation2] sm:$0xff]
  %v23 = vld [vmem:[#allocation2 + $0x8] sm:$0xff]
  %v24 = vld [vmem:[%s0] sm:$0xf]
  %v25 = vld [vmem:[%s0 + $0x4] sm:$0xf]
  %v26 = vld [vmem:[%s1] sm:$0xf]
  %v27 = vld [vmem:[%s1 + $0x4] sm:$0xf]
  %v28 = vld [vmem:[%s1 + $0x8] sm:$0xf]
  %v29 = vld [vmem:[%s1 + $0xc] sm:$0xf]
  %v32 = vunpack.c.l.b16 %v24
  %v33 = vunpack.c.l.b16 %v25
  %v34 = vpack.c.b16 %v33, %v32
  %v39 = vunpack.c.l.b16 %v26
  %v40 = vunpack.c.l.b16 %v27
  %v41 = vunpack.c.l.b16 %v28
  %v42 = vunpack.c.l.b16 %v29
  %v43 = vpack.c.b16 %v40, %v39
  %v44 = vpack.c.b16 %v42, %v41
  %vm47 = vcmask 261120
  %v49 = vsel %vm47, %v34, 0
  %51 = vmatprep.subr.bf16.mxu0 0
  %52 = vmatpush1.bf16.msra.mxu0 0
  %53 = vmatprep.subr.bf16.mxu0 0
  %54 = vmatpush1.bf16.msra.mxu0 0
  %55 = vmatprep.subr.bf16.mxu0 0
  %56 = vmatpush1.bf16.msra.mxu0 0
  %57 = vmatprep.subr.bf16.mxu0 0
  %58 = vmatpush1.bf16.msra.mxu0 0
  %59 = vmatprep.subr.bf16.mxu0 0
  %60 = vmatpush1.bf16.msra.mxu0 0
  %61 = vmatprep.subr.bf16.mxu0 0
  %62 = vmatpush1.bf16.msra.mxu0 0
  %63 = vmatprep.subr.bf16.mxu0 0
  %64 = vmatpush1.bf16.msra.mxu0 %v44
  %65 = vmatprep.subr.bf16.mxu0 0
  %66 = vmatpush1.bf16.msra.mxu0 %v43
  %67 = vmatprep.subr.bf16.mxu0 0
  %68 = vmatpush2.bf16.msra.mxu0 0
  %69 = vmatprep.subr.bf16.mxu0 0
  %70 = vmatpush2.bf16.msra.mxu0 0
  %71 = vmatprep.subr.bf16.mxu0 0
  %72 = vmatpush2.bf16.msra.mxu0 0
  %73 = vmatprep.subr.bf16.mxu0 0
  %74 = vmatpush2.bf16.msra.mxu0 0
  %75 = vmatprep.subr.bf16.mxu0 0
  %76 = vmatpush2.bf16.msra.mxu0 0
  %77 = vmatprep.subr.bf16.mxu0 0
  %78 = vmatpush2.bf16.msra.mxu0 0
  %79 = vmatprep.subr.bf16.mxu0 0
  %80 = vmatpush2.bf16.msra.mxu0 0
  %81 = vmatprep.subr.bf16.mxu0 0
  %82 = vmatpush2.bf16.msra.mxu0 0
  %83 = vmatprep.mubr.bf16.mxu0 0
  %84 = vmatmul.mubr.bf16.gmra.mxu0 %v49
  %v85 = vpop.f32.mrf.mxu0
  %v86 = vadd.f32 0.0, %v85
  %v87 = vpop.f32.mrf.mxu0
  %v88 = vpop.f32.mrf.mxu0
  %v89 = vadd.f32 0.0, %v88
  %v90 = vpop.f32.mrf.mxu0
  %91 = vdwg.mxu0
  %v92 = vadd.f32 %v22, %v86
  %v93 = vadd.f32 %v23, %v89
  %vm94 = vcmask 523264
  %95 = vst.msk [vmem:[#allocation2] sm:$0xff] %vm94, %v92
  %96 = vst.msk [vmem:[#allocation2 + $0x8] sm:$0xff] %vm94, %v93
  // Predicated region
  $region18: #{transformer_forward.37} parent=0 // pred_check
    %p97 = pneg %p15
  $region19: #{transformer_forward.37} parent=0 // pred_check_branch
    %99 = sbr.rel (%p97) target = $region21
  $region20: #{transformer_forward.37} parent=0 // pred_region
    %v100 = vld [vmem:[#allocation2] sm:$0xff]
    %v101 = vld [vmem:[#allocation2 + $0x8] sm:$0xff]
    %v102 = vld [vmem:[%s2] sm:$0x1]
    %v104 = vlaneseq
    %v105 = vshrl.u32 %v104, 7
    %v106 = vsub.s32 0, %v105
    %v107 = vrot.slane %v102, %v106
    %v109 = vadd.f32 %v100, %v107
    %v110 = vadd.f32 %v101, %v107
    %v111 = vpack.c.bf16 %v110, %v109
    %v113 = vunpack.c.l.b16 %v111
    %v114 = vunpack.c.h.b16 %v111
    %v115 = vpack.c.b16 %v113, %v113
    %v116 = vpack.c.b16 %v114, %v114
    %vm119 = vcmask 519168
    %120 = vst.msk [vmem:[%s3] sm:$0xf] %vm119, %v115
    %121 = vst.msk [vmem:[%s3 + $0x4] sm:$0xf] %vm119, %v116
  $region21: #{transformer_forward.37} parent=0 // pred_fallthru
    _
  // Predicated region
  $region22: #{transformer_forward.37} parent=0 // pred_check
    _
  $region23: #{transformer_forward.37} parent=0 // pred_check_branch
    %123 = sbr.rel (0) target = $region25
  $region24: #{transformer_forward.37} parent=0 // pred_region
    _
  $region25: #{transformer_forward.37} parent=0 // pred_fallthru
    _
  // Predicated region
  $region26: #{transformer_forward.37} parent=0 // pred_check
    _
  $region27: #{transformer_forward.37} parent=0 // pred_check_branch
    %125 = sbr.rel (0) target = $region29
  $region28: #{transformer_forward.37} parent=0 // pred_region
    _
  $region29: #{transformer_forward.37} parent=0 // pred_fallthru
    _

// kernel: transformer_forward.36
$region0: #{transformer_forward.36}
  #allocation0 [shape = 'u32[]', space=smem, size = 0x4, offset = 0x4, fixed_abs, tag = 'smem constant byte address 0x4 - core index']
  #allocation1 [shape = 'u32[144,128]{1,0:T(1,128)}', space=vmem, size = 0x12000, scoped, tag = 'internal scratch']
  #allocation2 [shape = 'f32[16,32]{1,0:T(8,128)}', space=vmem, size = 0x2000, scoped, tag = 'scratch operand']
  %s0 = inlined_call_operand.vmem [shape: bf16[16,32], index: 0, kind: input, shape index: {}]
  %s1 = inlined_call_operand.vmem [shape: bf16[32,32], index: 1, kind: input, shape index: {}]
  %s2 = inlined_call_operand.vmem [shape: f32[1,32], index: 2, kind: input, shape index: {}]
  %s3 = inlined_call_operand.vmem [shape: bf16[16,32], index: 3, kind: output, shape index: {}]
  %s4 = sld [smem:[#allocation0]]
  $region30: #{transformer_forward.36} parent=0
    _
  %s6 = ssub.s32 1, %s4
  %s7 = scalar_select 0, %s6, %s4
  // Predicated region
  $region2: #{transformer_forward.36} parent=0 // pred_check
    _
  $region3: #{transformer_forward.36} parent=0 // pred_check_branch
    %9 = sbr.rel (0) target = $region5
  $region4: #{transformer_forward.36} parent=0 // pred_region
    _
  $region5: #{transformer_forward.36} parent=0 // pred_fallthru
    _
  // Predicated region
  $region6: #{transformer_forward.36} parent=0 // pred_check
    _
  $region7: #{transformer_forward.36} parent=0 // pred_check_branch
    %11 = sbr.rel (0) target = $region9
  $region8: #{transformer_forward.36} parent=0 // pred_region
    _
  $region9: #{transformer_forward.36} parent=0 // pred_fallthru
    _
  // Predicated region
  $region10: #{transformer_forward.36} parent=0 // pred_check
    _
  $region11: #{transformer_forward.36} parent=0 // pred_check_branch
    %13 = sbr.rel (0) target = $region13
  $region12: #{transformer_forward.36} parent=0 // pred_region
    _
  $region13: #{transformer_forward.36} parent=0 // pred_fallthru
    _
  %p15 = scmp.eq.s32.totalorder 0, 0
  // Predicated region
  $region14: #{transformer_forward.36} parent=0 // pred_check
    %p16 = pneg %p15
  $region15: #{transformer_forward.36} parent=0 // pred_check_branch
    %18 = sbr.rel (%p16) target = $region17
  $region16: #{transformer_forward.36} parent=0 // pred_region
    %vm19 = vcmask 261120
    %20 = vst.msk [vmem:[#allocation2] sm:$0xff] %vm19, 0.0
    %21 = vst.msk [vmem:[#allocation2 + $0x8] sm:$0xff] %vm19, 0.0
  $region17: #{transformer_forward.36} parent=0 // pred_fallthru
    _
  %v22 = vld [vmem:[#allocation2] sm:$0xff]
  %v23 = vld [vmem:[#allocation2 + $0x8] sm:$0xff]
  %v24 = vld [vmem:[%s0] sm:$0xf]
  %v25 = vld [vmem:[%s0 + $0x4] sm:$0xf]
  %v26 = vld [vmem:[%s1] sm:$0xf]
  %v27 = vld [vmem:[%s1 + $0x4] sm:$0xf]
  %v28 = vld [vmem:[%s1 + $0x8] sm:$0xf]
  %v29 = vld [vmem:[%s1 + $0xc] sm:$0xf]
  %v32 = vunpack.c.l.b16 %v24
  %v33 = vunpack.c.l.b16 %v25
  %v34 = vpack.c.b16 %v33, %v32
  %v39 = vunpack.c.l.b16 %v26
  %v40 = vunpack.c.l.b16 %v27
  %v41 = vunpack.c.l.b16 %v28
  %v42 = vunpack.c.l.b16 %v29
  %v43 = vpack.c.b16 %v40, %v39
  %v44 = vpack.c.b16 %v42, %v41
  %vm47 = vcmask 261120
  %v49 = vsel %vm47, %v34, 0
  %51 = vmatprep.subr.bf16.mxu0 0
  %52 = vmatpush1.bf16.msra.mxu0 0
  %53 = vmatprep.subr.bf16.mxu0 0
  %54 = vmatpush1.bf16.msra.mxu0 0
  %55 = vmatprep.subr.bf16.mxu0 0
  %56 = vmatpush1.bf16.msra.mxu0 0
  %57 = vmatprep.subr.bf16.mxu0 0
  %58 = vmatpush1.bf16.msra.mxu0 0
  %59 = vmatprep.subr.bf16.mxu0 0
  %60 = vmatpush1.bf16.msra.mxu0 0
  %61 = vmatprep.subr.bf16.mxu0 0
  %62 = vmatpush1.bf16.msra.mxu0 0
  %63 = vmatprep.subr.bf16.mxu0 0
  %64 = vmatpush1.bf16.msra.mxu0 %v44
  %65 = vmatprep.subr.bf16.mxu0 0
  %66 = vmatpush1.bf16.msra.mxu0 %v43
  %67 = vmatprep.subr.bf16.mxu0 0
  %68 = vmatpush2.bf16.msra.mxu0 0
  %69 = vmatprep.subr.bf16.mxu0 0
  %70 = vmatpush2.bf16.msra.mxu0 0
  %71 = vmatprep.subr.bf16.mxu0 0
  %72 = vmatpush2.bf16.msra.mxu0 0
  %73 = vmatprep.subr.bf16.mxu0 0
  %74 = vmatpush2.bf16.msra.mxu0 0
  %75 = vmatprep.subr.bf16.mxu0 0
  %76 = vmatpush2.bf16.msra.mxu0 0
  %77 = vmatprep.subr.bf16.mxu0 0
  %78 = vmatpush2.bf16.msra.mxu0 0
  %79 = vmatprep.subr.bf16.mxu0 0
  %80 = vmatpush2.bf16.msra.mxu0 0
  %81 = vmatprep.subr.bf16.mxu0 0
  %82 = vmatpush2.bf16.msra.mxu0 0
  %83 = vmatprep.mubr.bf16.mxu0 0
  %84 = vmatmul.mubr.bf16.gmra.mxu0 %v49
  %v85 = vpop.f32.mrf.mxu0
  %v86 = vadd.f32 0.0, %v85
  %v87 = vpop.f32.mrf.mxu0
  %v88 = vpop.f32.mrf.mxu0
  %v89 = vadd.f32 0.0, %v88
  %v90 = vpop.f32.mrf.mxu0
  %91 = vdwg.mxu0
  %v92 = vadd.f32 %v22, %v86
  %v93 = vadd.f32 %v23, %v89
  %94 = vst.msk [vmem:[#allocation2] sm:$0xff] %vm47, %v92
  %95 = vst.msk [vmem:[#allocation2 + $0x8] sm:$0xff] %vm47, %v93
  // Predicated region
  $region18: #{transformer_forward.36} parent=0 // pred_check
    %p96 = pneg %p15
  $region19: #{transformer_forward.36} parent=0 // pred_check_branch
    %98 = sbr.rel (%p96) target = $region21
  $region20: #{transformer_forward.36} parent=0 // pred_region
    %v99 = vld [vmem:[#allocation2] sm:$0xff]
    %v100 = vld [vmem:[#allocation2 + $0x8] sm:$0xff]
    %v101 = vld [vmem:[%s2] sm:$0x1]
    %v103 = vlaneseq
    %v104 = vshrl.u32 %v103, 7
    %v105 = vsub.s32 0, %v104
    %v106 = vrot.slane %v101, %v105
    %v108 = vadd.f32 %v99, %v106
    %v109 = vadd.f32 %v100, %v106
    %v110 = vpack.c.bf16 %v109, %v108
    %v112 = vunpack.c.l.b16 %v110
    %v113 = vunpack.c.h.b16 %v110
    %v114 = vpack.c.b16 %v112, %v112
    %v115 = vpack.c.b16 %v113, %v113
    %vm118 = vcmask 257024
    %119 = vst.msk [vmem:[%s3] sm:$0xf] %vm118, %v114
    %120 = vst.msk [vmem:[%s3 + $0x4] sm:$0xf] %vm118, %v115
  $region21: #{transformer_forward.36} parent=0 // pred_fallthru
    _
  // Predicated region
  $region22: #{transformer_forward.36} parent=0 // pred_check
    _
  $region23: #{transformer_forward.36} parent=0 // pred_check_branch
    %122 = sbr.rel (0) target = $region25
  $region24: #{transformer_forward.36} parent=0 // pred_region
    _
  $region25: #{transformer_forward.36} parent=0 // pred_fallthru
    _
  // Predicated region
  $region26: #{transformer_forward.36} parent=0 // pred_check
    _
  $region27: #{transformer_forward.36} parent=0 // pred_check_branch
    %124 = sbr.rel (0) target = $region29
  $region28: #{transformer_forward.36} parent=0 // pred_region
    _
  $region29: #{transformer_forward.36} parent=0 // pred_fallthru
    _

// kernel: transformer_forward.34
$region0: #{transformer_forward.34}
  #allocation0 [shape = 'u32[]', space=smem, size = 0x4, offset = 0x4, fixed_abs, tag = 'smem constant byte address 0x4 - core index']
  #allocation1 [shape = 'u32[144,128]{1,0:T(1,128)}', space=vmem, size = 0x12000, scoped, tag = 'internal scratch']
  %s0 = inlined_call_operand.vmem [shape: f32[2,1,8], index: 0, kind: input, shape index: {}]
  %s1 = inlined_call_operand.vmem [shape: f32[8,8], index: 1, kind: input, shape index: {}]
  %s2 = inlined_call_operand.vmem [shape: bf16[2,8,96], index: 2, kind: input, shape index: {}, may-alias: {2,3}]
  %s3 = inlined_call_operand.vmem [shape: bf16[2,8,96], index: 3, kind: input, shape index: {}, may-alias: {2,3}]
  %s4 = inlined_call_operand.vmem [shape: bf16[2,8,32], index: 4, kind: output, shape index: {}]
  %s5 = sld [smem:[#allocation0]]
  $region49: #{transformer_forward.34} parent=0
    _
  %s7 = ssub.s32 1, %s5
  %s8 = scalar_select 0, %s7, %s5
  loop: start=0, step=1, limit=4
  $region2: #{transformer_forward.34} parent=0 // loop_pre_header
    _
  $region3: #{transformer_forward.34} parent=0 // loop_header
    %s10 = sphi 0, %s14
    %p11 = scmp.ge.s32.totalorder %s10, 4
    %s17 = sphi 0, %s29
    %s18 = sphi 0, %s25
    %s19 = sphi 0, %s17
    %s20 = sphi 0, %s18
    %s21 = sphi 0, %s19
    %s22 = sphi 0, %s20
    %s32 = sphi 0, %s34
    %s35 = sphi 0, %s32
    %s36 = sphi 0, %s35
    %s52 = sphi 0, %s36
    %s58 = sphi 0, %s60
    %s61 = sphi 0, %s58
    %s62 = sphi 0, %s61
    %s78 = sphi 0, %s62
    %s86 = sphi 0, %s88
    %s89 = sphi 0, %s86
    %s90 = sphi 0, %s89
    %s106 = sphi 0, %s90
    %s112 = sphi 0, %s114
    %s115 = sphi 0, %s112
    %s116 = sphi 0, %s115
    %s132 = sphi 0, %s116
    %s140 = sphi 0, %s142
    %s143 = sphi 0, %s140
    %s144 = sphi 0, %s143
    %s160 = sphi 0, %s144
  $region4: #{transformer_forward.34} parent=0 // loop_header_branch
    %13 = sbr.rel (%p11) target = $region8
  $region5: #{transformer_forward.34} parent=0 // loop_body
    %s15 = ssub.s32 %s10, 1
    %s16 = ssub.s32 %s10, 2
    %s23 = sadd.s32 1, %s18
    %p24 = scmp.ge.s32.totalorder %s23, 1
    %s25 = scalar_select %p24, 0, %s23
    %s26 = sadd.s32 1, %s17
    %s27 = scalar_select %p24, %s26, %s17
    %p28 = scmp.ge.s32.totalorder %s27, 2
    %s29 = scalar_select %p28, 0, %s27
    %s30 = ssub.s32 %s17, %s29
    %p31 = scmp.eq.s32.totalorder %s30, 0
    %s33 = sadd.s32 %s32, 1
    %s34 = scalar_select %p31, %s32, %s33
    %p37 = pneg %p31
    %p38 = scmp.eq.s32.totalorder %s10, 1
    %p39 = por %p37, %p38
    %p40 = scmp.ne.s32.totalorder %s32, %s35
    %p41 = scmp.eq.s32.totalorder %s10, 0
    %p42 = por %p40, %p41
    %p43 = scmp.ne.s32.totalorder %s32, %s35
    %p44 = scmp.eq.s32.totalorder %s15, 1
    %p45 = por %p43, %p44
    %p46 = scmp.ne.s32.totalorder %s35, %s36
    %p47 = scmp.eq.s32.totalorder %s15, 0
    %p48 = por %p46, %p47
    %p49 = scmp.ne.s32.totalorder %s35, %s36
    %p50 = scmp.eq.s32.totalorder %s16, 1
    %p51 = por %p49, %p50
    %p53 = scmp.ne.s32.totalorder %s36, %s52
    %p54 = scmp.eq.s32.totalorder %s16, 0
    %p55 = por %p53, %p54
    %s56 = ssub.s32 %s18, %s25
    %p57 = scmp.eq.s32.totalorder %s56, 0
    %s59 = sadd.s32 %s58, 1
    %s60 = scalar_select %p57, %s58, %s59
    %p63 = pneg %p57
    %p64 = scmp.eq.s32.totalorder %s10, 1
    %p65 = por %p63, %p64
    %p66 = scmp.ne.s32.totalorder %s58, %s61
    %p67 = scmp.eq.s32.totalorder %s10, 0
    %p68 = por %p66, %p67
    %p69 = scmp.ne.s32.totalorder %s58, %s61
    %p70 = scmp.eq.s32.totalorder %s15, 1
    %p71 = por %p69, %p70
    %p72 = scmp.ne.s32.totalorder %s61, %s62
    %p73 = scmp.eq.s32.totalorder %s15, 0
    %p74 = por %p72, %p73
    %p75 = scmp.ne.s32.totalorder %s61, %s62
    %p76 = scmp.eq.s32.totalorder %s16, 1
    %p77 = por %p75, %p76
    %p79 = scmp.ne.s32.totalorder %s62, %s78
    %p80 = scmp.eq.s32.totalorder %s16, 0
    %p81 = por %p79, %p80
    %s82 = ssub.s32 %s17, %s29
    %s83 = ssub.s32 %s18, %s25
    %s84 = sor.u32 %s82, %s83
    %p85 = scmp.eq.s32.totalorder %s84, 0
    %s87 = sadd.s32 %s86, 1
    %s88 = scalar_select %p85, %s86, %s87
    %p91 = pneg %p85
    %p92 = scmp.eq.s32.totalorder %s10, 1
    %p93 = por %p91, %p92
    %p94 = scmp.ne.s32.totalorder %s86, %s89
    %p95 = scmp.eq.s32.totalorder %s10, 0
    %p96 = por %p94, %p95
    %p97 = scmp.ne.s32.totalorder %s86, %s89
    %p98 = scmp.eq.s32.totalorder %s15, 1
    %p99 = por %p97, %p98
    %p100 = scmp.ne.s32.totalorder %s89, %s90
    %p101 = scmp.eq.s32.totalorder %s15, 0
    %p102 = por %p100, %p101
    %p103 = scmp.ne.s32.totalorder %s89, %s90
    %p104 = scmp.eq.s32.totalorder %s16, 1
    %p105 = por %p103, %p104
    %p107 = scmp.ne.s32.totalorder %s90, %s106
    %p108 = scmp.eq.s32.totalorder %s16, 0
    %p109 = por %p107, %p108
    %s110 = ssub.s32 %s17, %s29
    %p111 = scmp.eq.s32.totalorder %s110, 0
    %s113 = sadd.s32 %s112, 1
    %s114 = scalar_select %p111, %s112, %s113
    %p117 = pneg %p111
    %p118 = scmp.eq.s32.totalorder %s10, 1
    %p119 = por %p117, %p118
    %p120 = scmp.ne.s32.totalorder %s112, %s115
    %p121 = scmp.eq.s32.totalorder %s10, 0
    %p122 = por %p120, %p121
    %p123 = scmp.ne.s32.totalorder %s112, %s115
    %p124 = scmp.eq.s32.totalorder %s15, 1
    %p125 = por %p123, %p124
    %p126 = scmp.ne.s32.totalorder %s115, %s116
    %p127 = scmp.eq.s32.totalorder %s15, 0
    %p128 = por %p126, %p127
    %p129 = scmp.ne.s32.totalorder %s115, %s116
    %p130 = scmp.eq.s32.totalorder %s16, 1
    %p131 = por %p129, %p130
    %p133 = scmp.ne.s32.totalorder %s116, %s132
    %p134 = scmp.eq.s32.totalorder %s16, 0
    %p135 = por %p133, %p134
    %s136 = ssub.s32 %s17, %s29
    %s137 = ssub.s32 %s18, %s25
    %s138 = sor.u32 %s136, %s137
    %p139 = scmp.eq.s32.totalorder %s138, 0
    %s141 = sadd.s32 %s140, 1
    %s142 = scalar_select %p139, %s140, %s141
    %p145 = pneg %p139
    %p146 = scmp.eq.s32.totalorder %s10, 1
    %p147 = por %p145, %p146
    %p148 = scmp.ne.s32.totalorder %s140, %s143
    %p149 = scmp.eq.s32.totalorder %s10, 0
    %p150 = por %p148, %p149
    %p151 = scmp.ne.s32.totalorder %s140, %s143
    %p152 = scmp.eq.s32.totalorder %s15, 1
    %p153 = por %p151, %p152
    %p154 = scmp.ne.s32.totalorder %s143, %s144
    %p155 = scmp.eq.s32.totalorder %s15, 0
    %p156 = por %p154, %p155
    %p157 = scmp.ne.s32.totalorder %s143, %s144
    %p158 = scmp.eq.s32.totalorder %s16, 1
    %p159 = por %p157, %p158
    %p161 = scmp.ne.s32.totalorder %s144, %s160
    %p162 = scmp.eq.s32.totalorder %s16, 0
    %p163 = por %p161, %p162
    %p164 = scmp.le.s32.totalorder 1, %s10
    %p165 = scmp.lt.s32.totalorder %s10, 3
    %p166 = pnand %p164, %p165
    %p167 = pneg %p166
    // Predicated region
    $region9: #{transformer_forward.34} parent=5 // pred_check
      _
    $region10: #{transformer_forward.34} parent=5 // pred_check_branch
      %169 = sbr.rel (%p166) target = $region12
    $region11: #{transformer_forward.34} parent=5 // pred_region
      %s170 = ssub.s32 %s10, 1
      // Predicated region
      $region13: #{transformer_forward.34} parent=11 // pred_check
        %p171 = pneg %p74
      $region14: #{transformer_forward.34} parent=11 // pred_check_branch
        %173 = sbr.rel (%p171) target = $region16
      $region15: #{transformer_forward.34} parent=11 // pred_region
        %p174 = scmp.lt.s32.totalorder %s20, 0
        %s175 = scalar_select %p174, %s20, 0
        %s176 = smul.addr %s175, 8
        %s177 = scalar_lea.vmem %s1, %s176
      $region16: #{transformer_forward.34} parent=11 // pred_fallthru
        _
    $region12: #{transformer_forward.34} parent=5 // pred_fallthru
      _
    %p178 = scmp.lt.s32.totalorder %s10, 2
    // Predicated region
    $region17: #{transformer_forward.34} parent=5 // pred_check
      %p179 = pneg %p178
    $region18: #{transformer_forward.34} parent=5 // pred_check_branch
      %181 = sbr.rel (%p179) target = $region20
    $region19: #{transformer_forward.34} parent=5 // pred_region
      // Predicated region
      $region21: #{transformer_forward.34} parent=19 // pred_check
        %p182 = pneg %p42
      $region22: #{transformer_forward.34} parent=19 // pred_check_branch
        %184 = sbr.rel (%p182) target = $region24
      $region23: #{transformer_forward.34} parent=19 // pred_region
        %p185 = scmp.lt.s32.totalorder %s17, 1
        %s186 = scalar_select %p185, %s17, 1
        %s187 = scalar_lea.vmem %s0, %s186
      $region24: #{transformer_forward.34} parent=19 // pred_fallthru
        _
      // Predicated region
      $region25: #{transformer_forward.34} parent=19 // pred_check
        %p188 = pneg %p96
      $region26: #{transformer_forward.34} parent=19 // pred_check_branch
        %190 = sbr.rel (%p188) target = $region28
      $region27: #{transformer_forward.34} parent=19 // pred_region
        %p191 = scmp.lt.s32.totalorder %s17, 1
        %s192 = scalar_select %p191, %s17, 1
        %p193 = scmp.lt.s32.totalorder %s18, 0
        %s194 = scalar_select %p193, %s18, 0
        %s195 = sadd.s32 %s194, %s192
        %s196 = smul.addr %s195, 4
        %s197 = scalar_lea.vmem %s2, %s196
      $region28: #{transformer_forward.34} parent=19 // pred_fallthru
        _
      // Predicated region
      $region29: #{transformer_forward.34} parent=19 // pred_check
        %p198 = pneg %p122
      $region30: #{transformer_forward.34} parent=19 // pred_check_branch
        %200 = sbr.rel (%p198) target = $region32
      $region31: #{transformer_forward.34} parent=19 // pred_region
        %p201 = scmp.lt.s32.totalorder %s17, 1
        %s202 = scalar_select %p201, %s17, 1
        %s203 = smul.addr %s202, 4
        %s204 = scalar_lea.vmem %s3, %s203
      $region32: #{transformer_forward.34} parent=19 // pred_fallthru
        _
    $region20: #{transformer_forward.34} parent=5 // pred_fallthru
      _
    %p205 = scmp.le.s32.totalorder 1, %s10
    %p206 = scmp.lt.s32.totalorder %s10, 3
    %p207 = pnand %p205, %p206
    %p208 = pneg %p207
    // Predicated region
    $region33: #{transformer_forward.34} parent=5 // pred_check
      _
    $region34: #{transformer_forward.34} parent=5 // pred_check_branch
      %210 = sbr.rel (%p207) target = $region36
    $region35: #{transformer_forward.34} parent=5 // pred_region
      %s211 = ssub.s32 %s10, 1
      %p212 = scmp.lt.s32.totalorder %s19, 1
      %s213 = scalar_select %p212, %s19, 1
      %s214 = scalar_lea.vmem %s0, %s213
      %p215 = pneg %p48
      %p216 = pneg %p45
      %p217 = scmp.lt.s32.totalorder %s20, 0
      %s218 = scalar_select %p217, %s20, 0
      %s219 = smul.addr %s218, 8
      %s220 = scalar_lea.vmem %s1, %s219
      %p221 = pneg %p74
      %p222 = pneg %p71
      %p223 = scmp.lt.s32.totalorder %s19, 1
      %s224 = scalar_select %p223, %s19, 1
      %p225 = scmp.lt.s32.totalorder %s20, 0
      %s226 = scalar_select %p225, %s20, 0
      %s227 = sadd.s32 %s226, %s224
      %s228 = smul.addr %s227, 4
      %s229 = scalar_lea.vmem %s2, %s228
      %p230 = pneg %p102
      %p231 = pneg %p99
      %p232 = scmp.lt.s32.totalorder %s19, 1
      %s233 = scalar_select %p232, %s19, 1
      %s234 = smul.addr %s233, 4
      %s235 = scalar_lea.vmem %s3, %s234
      %p236 = pneg %p128
      %p237 = pneg %p125
      %p238 = pneg %p156
      %p239 = pneg %p153
      %p240 = scmp.lt.s32.totalorder %s19, 1
      %s241 = scalar_select %p240, %s19, 1
      %p242 = scmp.lt.s32.totalorder %s20, 0
      %s243 = scalar_select %p242, %s20, 0
      %s244 = sadd.s32 %s243, %s241
      %s245 = smul.addr %s244, 4
      %s246 = scalar_lea.vmem %s4, %s245
      %p247 = scmp.lt.s32.totalorder %s19, 1
      %s248 = scalar_select %p247, %s19, 1
      %s249 = scalar_lea.vmem %s0, %s248
      %p250 = scmp.lt.s32.totalorder %s20, 0
      %s251 = scalar_select %p250, %s20, 0
      %s252 = smul.addr %s251, 8
      %s253 = scalar_lea.vmem %s1, %s252
      %p254 = scmp.lt.s32.totalorder %s19, 1
      %s255 = scalar_select %p254, %s19, 1
      %p256 = scmp.lt.s32.totalorder %s20, 0
      %s257 = scalar_select %p256, %s20, 0
      %s258 = sadd.s32 %s257, %s255
      %s259 = smul.addr %s258, 4
      %s260 = scalar_lea.vmem %s2, %s259
      %p261 = scmp.lt.s32.totalorder %s19, 1
      %s262 = scalar_select %p261, %s19, 1
      %s263 = smul.addr %s262, 4
      %s264 = scalar_lea.vmem %s3, %s263
      %p265 = scmp.lt.s32.totalorder %s19, 1
      %s266 = scalar_select %p265, %s19, 1
      %p267 = scmp.lt.s32.totalorder %s20, 0
      %s268 = scalar_select %p267, %s20, 0
      %s269 = sadd.s32 %s268, %s266
      %s270 = smul.addr %s269, 4
      %s271 = scalar_lea.vmem %s4, %s270
      %v274 = vld [vmem:[%s249] sm:$0x1]
      %v275 = vld [vmem:[%s253] sm:$0xff]
      %v277 = vlaneseq
      %v278 = vshrl.u32 %v277, 7
      %v279 = vsub.s32 0, %v278
      %v280 = vrot.slane %v274, %v279
      %v282 = vadd.f32 %v280, %v275
      %v283 = vld [vmem:[%s260] sm:$0xf]
      %v284 = vmul.bf16 %v283, 1052065461
      %v285 = vld [vmem:[%s264] sm:$0xf]
      %v287 = vunpack.c.l.b16 %v285
      %v288 = vpack.c.b16 %v287, %v287
      %289 = vrot.lane.b32.xlu0 %v288, 96
      %v290 = vpop.permute.xlu0 %289
      %vm291 = vcmask 64512
      %v293 = vsel %vm291, %v284, 0
      %v296 = vsel %vm291, %v290, 0
      %298 = vmatprep.subr.bf16.mxu0 0
      %299 = vmatpush1.bf16.xpose.msra.mxu0 0
      %300 = vmatprep.subr.bf16.mxu0 0
      %301 = vmatpush1.bf16.xpose.msra.mxu0 0
      %302 = vmatprep.subr.bf16.mxu0 0
      %303 = vmatpush1.bf16.xpose.msra.mxu0 0
      %304 = vmatprep.subr.bf16.mxu0 0
      %305 = vmatpush1.bf16.xpose.msra.mxu0 0
      %306 = vmatprep.subr.bf16.mxu0 0
      %307 = vmatpush1.bf16.xpose.msra.mxu0 0
      %308 = vmatprep.subr.bf16.mxu0 0
      %309 = vmatpush1.bf16.xpose.msra.mxu0 0
      %310 = vmatprep.subr.bf16.mxu0 0
      %311 = vmatpush1.bf16.xpose.msra.mxu0 0
      %312 = vmatprep.subr.bf16.mxu0 0
      %313 = vmatpush1.bf16.xpose.msra.mxu0 %v296
      %314 = vmatprep.subr.bf16.mxu0 0
      %315 = vmatpush2.bf16.xpose.msra.mxu0 0
      %316 = vmatprep.subr.bf16.mxu0 0
      %317 = vmatpush2.bf16.xpose.msra.mxu0 0
      %318 = vmatprep.subr.bf16.mxu0 0
      %319 = vmatpush2.bf16.xpose.msra.mxu0 0
      %320 = vmatprep.subr.bf16.mxu0 0
      %321 = vmatpush2.bf16.xpose.msra.mxu0 0
      %322 = vmatprep.subr.bf16.mxu0 0
      %323 = vmatpush2.bf16.xpose.msra.mxu0 0
      %324 = vmatprep.subr.bf16.mxu0 0
      %325 = vmatpush2.bf16.xpose.msra.mxu0 0
      %326 = vmatprep.subr.bf16.mxu0 0
      %327 = vmatpush2.bf16.xpose.msra.mxu0 0
      %328 = vmatprep.subr.bf16.mxu0 0
      %329 = vmatpush2.bf16.xpose.msra.mxu0 0
      %330 = vmatprep.mubr.bf16.mxu0 0
      %331 = vmatmul.mubr.bf16.gmra.mxu0 %v293
      %v332 = vpop.f32.mrf.mxu0
      %v333 = vadd.f32 %v282, %v332
      %v334 = vpop.f32.mrf.mxu0
      %v335 = vpop.f32.mrf.mxu0
      %v336 = vpop.f32.mrf.mxu0
      %337 = vdwg.mxu0
      %v338 = vsel %vm291, %v333, -inf
      %339 = vmax.xlane.f32.xlu0 %v338
      %v340 = vpop.xlane.xlu0 %339
      %v341 = vsub.f32 %v333, %v340
      %v342 = vmul.f32 %v341, 1.442695
      %v343 = vpow.pop %v342
      %v344 = vsel %vm291, %v343, 0.0
      %345 = vadd.xlane.f32.xlu0 %v344
      %v346 = vpop.xlane.xlu0 %345
      %v347 = vrcp.pop %v346
      %v348 = vmul.f32 %v343, %v347
      %v349 = vpack.c.bf16 %v348, %v348
      %350 = vrot.lane.b32.xlu0 %v288, 64
      %v351 = vpop.permute.xlu0 %350
      %v353 = vsel %vm291, %v349, 0
      %vm355 = vcmask 1043456
      %v357 = vsel %vm355, %v351, 0
      %359 = vmatprep.subr.bf16.mxu0 0
      %360 = vmatpush1.bf16.msra.mxu0 0
      %361 = vmatprep.subr.bf16.mxu0 0
      %362 = vmatpush1.bf16.msra.mxu0 0
      %363 = vmatprep.subr.bf16.mxu0 0
      %364 = vmatpush1.bf16.msra.mxu0 0
      %365 = vmatprep.subr.bf16.mxu0 0
      %366 = vmatpush1.bf16.msra.mxu0 0
      %367 = vmatprep.subr.bf16.mxu0 0
      %368 = vmatpush1.bf16.msra.mxu0 0
      %369 = vmatprep.subr.bf16.mxu0 0
      %370 = vmatpush1.bf16.msra.mxu0 0
      %371 = vmatprep.subr.bf16.mxu0 0
      %372 = vmatpush1.bf16.msra.mxu0 0
      %373 = vmatprep.subr.bf16.mxu0 0
      %374 = vmatpush1.bf16.msra.mxu0 %v357
      %375 = vmatprep.subr.bf16.mxu0 0
      %376 = vmatpush2.bf16.msra.mxu0 0
      %377 = vmatprep.subr.bf16.mxu0 0
      %378 = vmatpush2.bf16.msra.mxu0 0
      %379 = vmatprep.subr.bf16.mxu0 0
      %380 = vmatpush2.bf16.msra.mxu0 0
      %381 = vmatprep.subr.bf16.mxu0 0
      %382 = vmatpush2.bf16.msra.mxu0 0
      %383 = vmatprep.subr.bf16.mxu0 0
      %384 = vmatpush2.bf16.msra.mxu0 0
      %385 = vmatprep.subr.bf16.mxu0 0
      %386 = vmatpush2.bf16.msra.mxu0 0
      %387 = vmatprep.subr.bf16.mxu0 0
      %388 = vmatpush2.bf16.msra.mxu0 0
      %389 = vmatprep.subr.bf16.mxu0 0
      %390 = vmatpush2.bf16.msra.mxu0 0
      %391 = vmatprep.mubr.bf16.mxu0 0
      %392 = vmatmul.mubr.bf16.gmra.mxu0 %v353
      %v393 = vpop.f32.mrf.mxu0
      %v394 = vadd.f32 0.0, %v393
      %v395 = vpop.f32.mrf.mxu0
      %v396 = vpop.f32.mrf.mxu0
      %v397 = vpop.f32.mrf.mxu0
      %398 = vdwg.mxu0
      %v399 = vpack.c.bf16 %v394, %v394
      %vm400 = vcmask 60416
      %401 = vst.msk [vmem:[%s271] sm:$0xf] %vm400, %v399
      %v402 = vld [vmem:[%s260] sm:$0xf]
      %v403 = vmul.bf16 %v402, 1052065461
      %v404 = vld [vmem:[%s264] sm:$0xf]
      %v406 = vunpack.c.l.b16 %v403
      %v407 = vpack.c.b16 %v406, %v406
      %408 = vrot.lane.b32.xlu0 %v407, 120
      %v409 = vpop.permute.xlu0 %408
      %v411 = vunpack.c.l.b16 %v404
      %v412 = vpack.c.b16 %v411, %v411
      %413 = vrot.lane.b32.xlu0 %v412, 88
      %v414 = vpop.permute.xlu0 %413
      %v416 = vsel %vm291, %v409, 0
      %v419 = vsel %vm291, %v414, 0
      %421 = vmatprep.subr.bf16.mxu0 0
      %422 = vmatpush1.bf16.xpose.msra.mxu0 0
      %423 = vmatprep.subr.bf16.mxu0 0
      %424 = vmatpush1.bf16.xpose.msra.mxu0 0
      %425 = vmatprep.subr.bf16.mxu0 0
      %426 = vmatpush1.bf16.xpose.msra.mxu0 0
      %427 = vmatprep.subr.bf16.mxu0 0
      %428 = vmatpush1.bf16.xpose.msra.mxu0 0
      %429 = vmatprep.subr.bf16.mxu0 0
      %430 = vmatpush1.bf16.xpose.msra.mxu0 0
      %431 = vmatprep.subr.bf16.mxu0 0
      %432 = vmatpush1.bf16.xpose.msra.mxu0 0
      %433 = vmatprep.subr.bf16.mxu0 0
      %434 = vmatpush1.bf16.xpose.msra.mxu0 0
      %435 = vmatprep.subr.bf16.mxu0 0
      %436 = vmatpush1.bf16.xpose.msra.mxu0 %v419
      %437 = vmatprep.subr.bf16.mxu0 0
      %438 = vmatpush2.bf16.xpose.msra.mxu0 0
      %439 = vmatprep.subr.bf16.mxu0 0
      %440 = vmatpush2.bf16.xpose.msra.mxu0 0
      %441 = vmatprep.subr.bf16.mxu0 0
      %442 = vmatpush2.bf16.xpose.msra.mxu0 0
      %443 = vmatprep.subr.bf16.mxu0 0
      %444 = vmatpush2.bf16.xpose.msra.mxu0 0
      %445 = vmatprep.subr.bf16.mxu0 0
      %446 = vmatpush2.bf16.xpose.msra.mxu0 0
      %447 = vmatprep.subr.bf16.mxu0 0
      %448 = vmatpush2.bf16.xpose.msra.mxu0 0
      %449 = vmatprep.subr.bf16.mxu0 0
      %450 = vmatpush2.bf16.xpose.msra.mxu0 0
      %451 = vmatprep.subr.bf16.mxu0 0
      %452 = vmatpush2.bf16.xpose.msra.mxu0 0
      %453 = vmatprep.mubr.bf16.mxu0 0
      %454 = vmatmul.mubr.bf16.gmra.mxu0 %v416
      %v455 = vpop.f32.mrf.mxu0
      %v456 = vadd.f32 %v282, %v455
      %v457 = vpop.f32.mrf.mxu0
      %v458 = vpop.f32.mrf.mxu0
      %v459 = vpop.f32.mrf.mxu0
      %460 = vdwg.mxu0
      %v461 = vsel %vm291, %v456, -inf
      %462 = vmax.xlane.f32.xlu0 %v461
      %v463 = vpop.xlane.xlu0 %462
      %v464 = vsub.f32 %v456, %v463
      %v465 = vmul.f32 %v464, 1.442695
      %v466 = vpow.pop %v465
      %v467 = vsel %vm291, %v466, 0.0
      %468 = vadd.xlane.f32.xlu0 %v467
      %v469 = vpop.xlane.xlu0 %468
      %v470 = vrcp.pop %v469
      %v471 = vmul.f32 %v466, %v470
      %v472 = vpack.c.bf16 %v471, %v471
      %473 = vrot.lane.b32.xlu0 %v412, 56
      %v474 = vpop.permute.xlu0 %473
      %v476 = vsel %vm291, %v472, 0
      %v479 = vsel %vm355, %v474, 0
      %481 = vmatprep.subr.bf16.mxu0 0
      %482 = vmatpush1.bf16.msra.mxu0 0
      %483 = vmatprep.subr.bf16.mxu0 0
      %484 = vmatpush1.bf16.msra.mxu0 0
      %485 = vmatprep.subr.bf16.mxu0 0
      %486 = vmatpush1.bf16.msra.mxu0 0
      %487 = vmatprep.subr.bf16.mxu0 0
      %488 = vmatpush1.bf16.msra.mxu0 0
      %489 = vmatprep.subr.bf16.mxu0 0
      %490 = vmatpush1.bf16.msra.mxu0 0
      %491 = vmatprep.subr.bf16.mxu0 0
      %492 = vmatpush1.bf16.msra.mxu0 0
      %493 = vmatprep.subr.bf16.mxu0 0
      %494 = vmatpush1.bf16.msra.mxu0 0
      %495 = vmatprep.subr.bf16.mxu0 0
      %496 = vmatpush1.bf16.msra.mxu0 %v479
      %497 = vmatprep.subr.bf16.mxu0 0
      %498 = vmatpush2.bf16.msra.mxu0 0
      %499 = vmatprep.subr.bf16.mxu0 0
      %500 = vmatpush2.bf16.msra.mxu0 0
      %501 = vmatprep.subr.bf16.mxu0 0
      %502 = vmatpush2.bf16.msra.mxu0 0
      %503 = vmatprep.subr.bf16.mxu0 0
      %504 = vmatpush2.bf16.msra.mxu0 0
      %505 = vmatprep.subr.bf16.mxu0 0
      %506 = vmatpush2.bf16.msra.mxu0 0
      %507 = vmatprep.subr.bf16.mxu0 0
      %508 = vmatpush2.bf16.msra.mxu0 0
      %509 = vmatprep.subr.bf16.mxu0 0
      %510 = vmatpush2.bf16.msra.mxu0 0
      %511 = vmatprep.subr.bf16.mxu0 0
      %512 = vmatpush2.bf16.msra.mxu0 0
      %513 = vmatprep.mubr.bf16.mxu0 0
      %514 = vmatmul.mubr.bf16.gmra.mxu0 %v476
      %v515 = vpop.f32.mrf.mxu0
      %v516 = vadd.f32 0.0, %v515
      %v517 = vpop.f32.mrf.mxu0
      %v518 = vpop.f32.mrf.mxu0
      %v519 = vpop.f32.mrf.mxu0
      %520 = vdwg.mxu0
      %v521 = vpack.c.bf16 %v516, %v516
      %v523 = vunpack.c.l.b16 %v521
      %v524 = vpack.c.b16 %v523, %v523
      %525 = vrot.lane.b32.xlu0 %v524, 8
      %v526 = vpop.permute.xlu0 %525
      %vm528 = vcmask 126016
      %529 = vst.msk [vmem:[%s271] sm:$0xf] %vm528, %v526
      %v530 = vld [vmem:[%s260] sm:$0xf]
      %v531 = vmul.bf16 %v530, 1052065461
      %v532 = vld [vmem:[%s264] sm:$0xf]
      %v534 = vunpack.c.l.b16 %v531
      %v535 = vpack.c.b16 %v534, %v534
      %536 = vrot.lane.b32.xlu0 %v535, 112
      %v537 = vpop.permute.xlu0 %536
      %v539 = vunpack.c.l.b16 %v532
      %v540 = vpack.c.b16 %v539, %v539
      %541 = vrot.lane.b32.xlu0 %v540, 80
      %v542 = vpop.permute.xlu0 %541
      %v544 = vsel %vm291, %v537, 0
      %v547 = vsel %vm291, %v542, 0
      %549 = vmatprep.subr.bf16.mxu0 0
      %550 = vmatpush1.bf16.xpose.msra.mxu0 0
      %551 = vmatprep.subr.bf16.mxu0 0
      %552 = vmatpush1.bf16.xpose.msra.mxu0 0
      %553 = vmatprep.subr.bf16.mxu0 0
      %554 = vmatpush1.bf16.xpose.msra.mxu0 0
      %555 = vmatprep.subr.bf16.mxu0 0
      %556 = vmatpush1.bf16.xpose.msra.mxu0 0
      %557 = vmatprep.subr.bf16.mxu0 0
      %558 = vmatpush1.bf16.xpose.msra.mxu0 0
      %559 = vmatprep.subr.bf16.mxu0 0
      %560 = vmatpush1.bf16.xpose.msra.mxu0 0
      %561 = vmatprep.subr.bf16.mxu0 0
      %562 = vmatpush1.bf16.xpose.msra.mxu0 0
      %563 = vmatprep.subr.bf16.mxu0 0
      %564 = vmatpush1.bf16.xpose.msra.mxu0 %v547
      %565 = vmatprep.subr.bf16.mxu0 0
      %566 = vmatpush2.bf16.xpose.msra.mxu0 0
      %567 = vmatprep.subr.bf16.mxu0 0
      %568 = vmatpush2.bf16.xpose.msra.mxu0 0
      %569 = vmatprep.subr.bf16.mxu0 0
      %570 = vmatpush2.bf16.xpose.msra.mxu0 0
      %571 = vmatprep.subr.bf16.mxu0 0
      %572 = vmatpush2.bf16.xpose.msra.mxu0 0
      %573 = vmatprep.subr.bf16.mxu0 0
      %574 = vmatpush2.bf16.xpose.msra.mxu0 0
      %575 = vmatprep.subr.bf16.mxu0 0
      %576 = vmatpush2.bf16.xpose.msra.mxu0 0
      %577 = vmatprep.subr.bf16.mxu0 0
      %578 = vmatpush2.bf16.xpose.msra.mxu0 0
      %579 = vmatprep.subr.bf16.mxu0 0
      %580 = vmatpush2.bf16.xpose.msra.mxu0 0
      %581 = vmatprep.mubr.bf16.mxu0 0
      %582 = vmatmul.mubr.bf16.gmra.mxu0 %v544
      %v583 = vpop.f32.mrf.mxu0
      %v584 = vadd.f32 %v282, %v583
      %v585 = vpop.f32.mrf.mxu0
      %v586 = vpop.f32.mrf.mxu0
      %v587 = vpop.f32.mrf.mxu0
      %588 = vdwg.mxu0
      %v589 = vsel %vm291, %v584, -inf
      %590 = vmax.xlane.f32.xlu0 %v589
      %v591 = vpop.xlane.xlu0 %590
      %v592 = vsub.f32 %v584, %v591
      %v593 = vmul.f32 %v592, 1.442695
      %v594 = vpow.pop %v593
      %v595 = vsel %vm291, %v594, 0.0
      %596 = vadd.xlane.f32.xlu0 %v595
      %v597 = vpop.xlane.xlu0 %596
      %v598 = vrcp.pop %v597
      %v599 = vmul.f32 %v594, %v598
      %v600 = vpack.c.bf16 %v599, %v599
      %601 = vrot.lane.b32.xlu0 %v540, 48
      %v602 = vpop.permute.xlu0 %601
      %v604 = vsel %vm291, %v600, 0
      %v607 = vsel %vm355, %v602, 0
      %609 = vmatprep.subr.bf16.mxu0 0
      %610 = vmatpush1.bf16.msra.mxu0 0
      %611 = vmatprep.subr.bf16.mxu0 0
      %612 = vmatpush1.bf16.msra.mxu0 0
      %613 = vmatprep.subr.bf16.mxu0 0
      %614 = vmatpush1.bf16.msra.mxu0 0
      %615 = vmatprep.subr.bf16.mxu0 0
      %616 = vmatpush1.bf16.msra.mxu0 0
      %617 = vmatprep.subr.bf16.mxu0 0
      %618 = vmatpush1.bf16.msra.mxu0 0
      %619 = vmatprep.subr.bf16.mxu0 0
      %620 = vmatpush1.bf16.msra.mxu0 0
      %621 = vmatprep.subr.bf16.mxu0 0
      %622 = vmatpush1.bf16.msra.mxu0 0
      %623 = vmatprep.subr.bf16.mxu0 0
      %624 = vmatpush1.bf16.msra.mxu0 %v607
      %625 = vmatprep.subr.bf16.mxu0 0
      %626 = vmatpush2.bf16.msra.mxu0 0
      %627 = vmatprep.subr.bf16.mxu0 0
      %628 = vmatpush2.bf16.msra.mxu0 0
      %629 = vmatprep.subr.bf16.mxu0 0
      %630 = vmatpush2.bf16.msra.mxu0 0
      %631 = vmatprep.subr.bf16.mxu0 0
      %632 = vmatpush2.bf16.msra.mxu0 0
      %633 = vmatprep.subr.bf16.mxu0 0
      %634 = vmatpush2.bf16.msra.mxu0 0
      %635 = vmatprep.subr.bf16.mxu0 0
      %636 = vmatpush2.bf16.msra.mxu0 0
      %637 = vmatprep.subr.bf16.mxu0 0
      %638 = vmatpush2.bf16.msra.mxu0 0
      %639 = vmatprep.subr.bf16.mxu0 0
      %640 = vmatpush2.bf16.msra.mxu0 0
      %641 = vmatprep.mubr.bf16.mxu0 0
      %642 = vmatmul.mubr.bf16.gmra.mxu0 %v604
      %v643 = vpop.f32.mrf.mxu0
      %v644 = vadd.f32 0.0, %v643
      %v645 = vpop.f32.mrf.mxu0
      %v646 = vpop.f32.mrf.mxu0
      %v647 = vpop.f32.mrf.mxu0
      %648 = vdwg.mxu0
      %v649 = vpack.c.bf16 %v644, %v644
      %v651 = vunpack.c.l.b16 %v649
      %v652 = vpack.c.b16 %v651, %v651
      %653 = vrot.lane.b32.xlu0 %v652, 16
      %v654 = vpop.permute.xlu0 %653
      %vm656 = vcmask 191616
      %657 = vst.msk [vmem:[%s271] sm:$0xf] %vm656, %v654
      %v658 = vld [vmem:[%s260] sm:$0xf]
      %v659 = vmul.bf16 %v658, 1052065461
      %v660 = vld [vmem:[%s264] sm:$0xf]
      %v662 = vunpack.c.l.b16 %v659
      %v663 = vpack.c.b16 %v662, %v662
      %664 = vrot.lane.b32.xlu0 %v663, 104
      %v665 = vpop.permute.xlu0 %664
      %v667 = vunpack.c.l.b16 %v660
      %v668 = vpack.c.b16 %v667, %v667
      %669 = vrot.lane.b32.xlu0 %v668, 72
      %v670 = vpop.permute.xlu0 %669
      %v672 = vsel %vm291, %v665, 0
      %v675 = vsel %vm291, %v670, 0
      %677 = vmatprep.subr.bf16.mxu0 0
      %678 = vmatpush1.bf16.xpose.msra.mxu0 0
      %679 = vmatprep.subr.bf16.mxu0 0
      %680 = vmatpush1.bf16.xpose.msra.mxu0 0
      %681 = vmatprep.subr.bf16.mxu0 0
      %682 = vmatpush1.bf16.xpose.msra.mxu0 0
      %683 = vmatprep.subr.bf16.mxu0 0
      %684 = vmatpush1.bf16.xpose.msra.mxu0 0
      %685 = vmatprep.subr.bf16.mxu0 0
      %686 = vmatpush1.bf16.xpose.msra.mxu0 0
      %687 = vmatprep.subr.bf16.mxu0 0
      %688 = vmatpush1.bf16.xpose.msra.mxu0 0
      %689 = vmatprep.subr.bf16.mxu0 0
      %690 = vmatpush1.bf16.xpose.msra.mxu0 0
      %691 = vmatprep.subr.bf16.mxu0 0
      %692 = vmatpush1.bf16.xpose.msra.mxu0 %v675
      %693 = vmatprep.subr.bf16.mxu0 0
      %694 = vmatpush2.bf16.xpose.msra.mxu0 0
      %695 = vmatprep.subr.bf16.mxu0 0
      %696 = vmatpush2.bf16.xpose.msra.mxu0 0
      %697 = vmatprep.subr.bf16.mxu0 0
      %698 = vmatpush2.bf16.xpose.msra.mxu0 0
      %699 = vmatprep.subr.bf16.mxu0 0
      %700 = vmatpush2.bf16.xpose.msra.mxu0 0
      %701 = vmatprep.subr.bf16.mxu0 0
      %702 = vmatpush2.bf16.xpose.msra.mxu0 0
      %703 = vmatprep.subr.bf16.mxu0 0
      %704 = vmatpush2.bf16.xpose.msra.mxu0 0
      %705 = vmatprep.subr.bf16.mxu0 0
      %706 = vmatpush2.bf16.xpose.msra.mxu0 0
      %707 = vmatprep.subr.bf16.mxu0 0
      %708 = vmatpush2.bf16.xpose.msra.mxu0 0
      %709 = vmatprep.mubr.bf16.mxu0 0
      %710 = vmatmul.mubr.bf16.gmra.mxu0 %v672
      %v711 = vpop.f32.mrf.mxu0
      %v712 = vadd.f32 %v282, %v711
      %v713 = vpop.f32.mrf.mxu0
      %v714 = vpop.f32.mrf.mxu0
      %v715 = vpop.f32.mrf.mxu0
      %716 = vdwg.mxu0
      %v717 = vsel %vm291, %v712, -inf
      %718 = vmax.xlane.f32.xlu0 %v717
      %v719 = vpop.xlane.xlu0 %718
      %v720 = vsub.f32 %v712, %v719
      %v721 = vmul.f32 %v720, 1.442695
      %v722 = vpow.pop %v721
      %v723 = vsel %vm291, %v722, 0.0
      %724 = vadd.xlane.f32.xlu0 %v723
      %v725 = vpop.xlane.xlu0 %724
      %v726 = vrcp.pop %v725
      %v727 = vmul.f32 %v722, %v726
      %v728 = vpack.c.bf16 %v727, %v727
      %729 = vrot.lane.b32.xlu0 %v668, 40
      %v730 = vpop.permute.xlu0 %729
      %v732 = vsel %vm291, %v728, 0
      %v735 = vsel %vm355, %v730, 0
      %737 = vmatprep.subr.bf16.mxu0 0
      %738 = vmatpush1.bf16.msra.mxu0 0
      %739 = vmatprep.subr.bf16.mxu0 0
      %740 = vmatpush1.bf16.msra.mxu0 0
      %741 = vmatprep.subr.bf16.mxu0 0
      %742 = vmatpush1.bf16.msra.mxu0 0
      %743 = vmatprep.subr.bf16.mxu0 0
      %744 = vmatpush1.bf16.msra.mxu0 0
      %745 = vmatprep.subr.bf16.mxu0 0
      %746 = vmatpush1.bf16.msra.mxu0 0
      %747 = vmatprep.subr.bf16.mxu0 0
      %748 = vmatpush1.bf16.msra.mxu0 0
      %749 = vmatprep.subr.bf16.mxu0 0
      %750 = vmatpush1.bf16.msra.mxu0 0
      %751 = vmatprep.subr.bf16.mxu0 0
      %752 = vmatpush1.bf16.msra.mxu0 %v735
      %753 = vmatprep.subr.bf16.mxu0 0
      %754 = vmatpush2.bf16.msra.mxu0 0
      %755 = vmatprep.subr.bf16.mxu0 0
      %756 = vmatpush2.bf16.msra.mxu0 0
      %757 = vmatprep.subr.bf16.mxu0 0
      %758 = vmatpush2.bf16.msra.mxu0 0
      %759 = vmatprep.subr.bf16.mxu0 0
      %760 = vmatpush2.bf16.msra.mxu0 0
      %761 = vmatprep.subr.bf16.mxu0 0
      %762 = vmatpush2.bf16.msra.mxu0 0
      %763 = vmatprep.subr.bf16.mxu0 0
      %764 = vmatpush2.bf16.msra.mxu0 0
      %765 = vmatprep.subr.bf16.mxu0 0
      %766 = vmatpush2.bf16.msra.mxu0 0
      %767 = vmatprep.subr.bf16.mxu0 0
      %768 = vmatpush2.bf16.msra.mxu0 0
      %769 = vmatprep.mubr.bf16.mxu0 0
      %770 = vmatmul.mubr.bf16.gmra.mxu0 %v732
      %v771 = vpop.f32.mrf.mxu0
      %v772 = vadd.f32 0.0, %v771
      %v773 = vpop.f32.mrf.mxu0
      %v774 = vpop.f32.mrf.mxu0
      %v775 = vpop.f32.mrf.mxu0
      %776 = vdwg.mxu0
      %v777 = vpack.c.bf16 %v772, %v772
      %v779 = vunpack.c.l.b16 %v777
      %v780 = vpack.c.b16 %v779, %v779
      %781 = vrot.lane.b32.xlu0 %v780, 24
      %v782 = vpop.permute.xlu0 %781
      %vm784 = vcmask 257216
      %785 = vst.msk [vmem:[%s271] sm:$0xf] %vm784, %v782
      %p786 = scmp.lt.s32.totalorder %s19, 1
      %s787 = scalar_select %p786, %s19, 1
      %p788 = scmp.lt.s32.totalorder %s20, 0
      %s789 = scalar_select %p788, %s20, 0
      %s790 = sadd.s32 %s789, %s787
      %s791 = smul.addr %s790, 4
      %s792 = scalar_lea.vmem %s4, %s791
      // Predicated region
      $region37: #{transformer_forward.34} parent=35 // pred_check
        %p793 = pneg %p153
      $region38: #{transformer_forward.34} parent=35 // pred_check_branch
        %795 = sbr.rel (%p793) target = $region40
      $region39: #{transformer_forward.34} parent=35 // pred_region
        _
      $region40: #{transformer_forward.34} parent=35 // pred_fallthru
        _
    $region36: #{transformer_forward.34} parent=5 // pred_fallthru
      _
    %p796 = scmp.le.s32.totalorder 2, %s10
    // Predicated region
    $region41: #{transformer_forward.34} parent=5 // pred_check
      %p797 = pneg %p796
    $region42: #{transformer_forward.34} parent=5 // pred_check_branch
      %799 = sbr.rel (%p797) target = $region44
    $region43: #{transformer_forward.34} parent=5 // pred_region
      %s800 = ssub.s32 %s10, 2
      // Predicated region
      $region45: #{transformer_forward.34} parent=43 // pred_check
        %p801 = pneg %p159
      $region46: #{transformer_forward.34} parent=43 // pred_check_branch
        %803 = sbr.rel (%p801) target = $region48
      $region47: #{transformer_forward.34} parent=43 // pred_region
        %p804 = scmp.lt.s32.totalorder %s21, 1
        %s805 = scalar_select %p804, %s21, 1
        %p806 = scmp.lt.s32.totalorder %s22, 0
        %s807 = scalar_select %p806, %s22, 0
        %s808 = sadd.s32 %s807, %s805
        %s809 = smul.addr %s808, 4
        %s810 = scalar_lea.vmem %s4, %s809
      $region48: #{transformer_forward.34} parent=43 // pred_fallthru
        _
    $region44: #{transformer_forward.34} parent=5 // pred_fallthru
      _
  $region6: #{transformer_forward.34} parent=0 // loop_footer
    %s14 = sadd.s32 1, %s10
  $region7: #{transformer_forward.34} parent=0 // loop_footer_branch
    %9 = sbr.rel target = $region3
  $region8: #{transformer_forward.34} parent=0 // loop_exit
    _

// kernel: transformer_forward.38
$region0: #{transformer_forward.38}
  #allocation0 [shape = 'u32[]', space=smem, size = 0x4, offset = 0x4, fixed_abs, tag = 'smem constant byte address 0x4 - core index']
  #allocation1 [shape = 'u32[144,128]{1,0:T(1,128)}', space=vmem, size = 0x12000, scoped, tag = 'internal scratch']
  %s0 = inlined_call_operand.vmem [shape: f32[2,1,8], index: 0, kind: input, shape index: {}]
  %s1 = inlined_call_operand.vmem [shape: bf16[2,8,32], index: 1, kind: input, shape index: {}]
  %s2 = inlined_call_operand.vmem [shape: bf16[2,8,64], index: 2, kind: input, shape index: {}]
  %s3 = inlined_call_operand.vmem [shape: bf16[2,8,32], index: 3, kind: output, shape index: {}]
  %s4 = sld [smem:[#allocation0]]
  $region45: #{transformer_forward.38} parent=0
    _
  %s6 = ssub.s32 1, %s4
  %s7 = scalar_select 0, %s6, %s4
  loop: start=0, step=1, limit=4
  $region2: #{transformer_forward.38} parent=0 // loop_pre_header
    _
  $region3: #{transformer_forward.38} parent=0 // loop_header
    %s9 = sphi 0, %s13
    %p10 = scmp.ge.s32.totalorder %s9, 4
    %s16 = sphi 0, %s28
    %s17 = sphi 0, %s24
    %s18 = sphi 0, %s16
    %s19 = sphi 0, %s17
    %s20 = sphi 0, %s18
    %s21 = sphi 0, %s19
    %s31 = sphi 0, %s33
    %s34 = sphi 0, %s31
    %s35 = sphi 0, %s34
    %s51 = sphi 0, %s35
    %s59 = sphi 0, %s61
    %s62 = sphi 0, %s59
    %s63 = sphi 0, %s62
    %s79 = sphi 0, %s63
    %s85 = sphi 0, %s87
    %s88 = sphi 0, %s85
    %s89 = sphi 0, %s88
    %s105 = sphi 0, %s89
    %s113 = sphi 0, %s115
    %s116 = sphi 0, %s113
    %s117 = sphi 0, %s116
    %s133 = sphi 0, %s117
  $region4: #{transformer_forward.38} parent=0 // loop_header_branch
    %12 = sbr.rel (%p10) target = $region8
  $region5: #{transformer_forward.38} parent=0 // loop_body
    %s14 = ssub.s32 %s9, 1
    %s15 = ssub.s32 %s9, 2
    %s22 = sadd.s32 1, %s17
    %p23 = scmp.ge.s32.totalorder %s22, 1
    %s24 = scalar_select %p23, 0, %s22
    %s25 = sadd.s32 1, %s16
    %s26 = scalar_select %p23, %s25, %s16
    %p27 = scmp.ge.s32.totalorder %s26, 2
    %s28 = scalar_select %p27, 0, %s26
    %s29 = ssub.s32 %s16, %s28
    %p30 = scmp.eq.s32.totalorder %s29, 0
    %s32 = sadd.s32 %s31, 1
    %s33 = scalar_select %p30, %s31, %s32
    %p36 = pneg %p30
    %p37 = scmp.eq.s32.totalorder %s9, 1
    %p38 = por %p36, %p37
    %p39 = scmp.ne.s32.totalorder %s31, %s34
    %p40 = scmp.eq.s32.totalorder %s9, 0
    %p41 = por %p39, %p40
    %p42 = scmp.ne.s32.totalorder %s31, %s34
    %p43 = scmp.eq.s32.totalorder %s14, 1
    %p44 = por %p42, %p43
    %p45 = scmp.ne.s32.totalorder %s34, %s35
    %p46 = scmp.eq.s32.totalorder %s14, 0
    %p47 = por %p45, %p46
    %p48 = scmp.ne.s32.totalorder %s34, %s35
    %p49 = scmp.eq.s32.totalorder %s15, 1
    %p50 = por %p48, %p49
    %p52 = scmp.ne.s32.totalorder %s35, %s51
    %p53 = scmp.eq.s32.totalorder %s15, 0
    %p54 = por %p52, %p53
    %s55 = ssub.s32 %s16, %s28
    %s56 = ssub.s32 %s17, %s24
    %s57 = sor.u32 %s55, %s56
    %p58 = scmp.eq.s32.totalorder %s57, 0
    %s60 = sadd.s32 %s59, 1
    %s61 = scalar_select %p58, %s59, %s60
    %p64 = pneg %p58
    %p65 = scmp.eq.s32.totalorder %s9, 1
    %p66 = por %p64, %p65
    %p67 = scmp.ne.s32.totalorder %s59, %s62
    %p68 = scmp.eq.s32.totalorder %s9, 0
    %p69 = por %p67, %p68
    %p70 = scmp.ne.s32.totalorder %s59, %s62
    %p71 = scmp.eq.s32.totalorder %s14, 1
    %p72 = por %p70, %p71
    %p73 = scmp.ne.s32.totalorder %s62, %s63
    %p74 = scmp.eq.s32.totalorder %s14, 0
    %p75 = por %p73, %p74
    %p76 = scmp.ne.s32.totalorder %s62, %s63
    %p77 = scmp.eq.s32.totalorder %s15, 1
    %p78 = por %p76, %p77
    %p80 = scmp.ne.s32.totalorder %s63, %s79
    %p81 = scmp.eq.s32.totalorder %s15, 0
    %p82 = por %p80, %p81
    %s83 = ssub.s32 %s16, %s28
    %p84 = scmp.eq.s32.totalorder %s83, 0
    %s86 = sadd.s32 %s85, 1
    %s87 = scalar_select %p84, %s85, %s86
    %p90 = pneg %p84
    %p91 = scmp.eq.s32.totalorder %s9, 1
    %p92 = por %p90, %p91
    %p93 = scmp.ne.s32.totalorder %s85, %s88
    %p94 = scmp.eq.s32.totalorder %s9, 0
    %p95 = por %p93, %p94
    %p96 = scmp.ne.s32.totalorder %s85, %s88
    %p97 = scmp.eq.s32.totalorder %s14, 1
    %p98 = por %p96, %p97
    %p99 = scmp.ne.s32.totalorder %s88, %s89
    %p100 = scmp.eq.s32.totalorder %s14, 0
    %p101 = por %p99, %p100
    %p102 = scmp.ne.s32.totalorder %s88, %s89
    %p103 = scmp.eq.s32.totalorder %s15, 1
    %p104 = por %p102, %p103
    %p106 = scmp.ne.s32.totalorder %s89, %s105
    %p107 = scmp.eq.s32.totalorder %s15, 0
    %p108 = por %p106, %p107
    %s109 = ssub.s32 %s16, %s28
    %s110 = ssub.s32 %s17, %s24
    %s111 = sor.u32 %s109, %s110
    %p112 = scmp.eq.s32.totalorder %s111, 0
    %s114 = sadd.s32 %s113, 1
    %s115 = scalar_select %p112, %s113, %s114
    %p118 = pneg %p112
    %p119 = scmp.eq.s32.totalorder %s9, 1
    %p120 = por %p118, %p119
    %p121 = scmp.ne.s32.totalorder %s113, %s116
    %p122 = scmp.eq.s32.totalorder %s9, 0
    %p123 = por %p121, %p122
    %p124 = scmp.ne.s32.totalorder %s113, %s116
    %p125 = scmp.eq.s32.totalorder %s14, 1
    %p126 = por %p124, %p125
    %p127 = scmp.ne.s32.totalorder %s116, %s117
    %p128 = scmp.eq.s32.totalorder %s14, 0
    %p129 = por %p127, %p128
    %p130 = scmp.ne.s32.totalorder %s116, %s117
    %p131 = scmp.eq.s32.totalorder %s15, 1
    %p132 = por %p130, %p131
    %p134 = scmp.ne.s32.totalorder %s117, %s133
    %p135 = scmp.eq.s32.totalorder %s15, 0
    %p136 = por %p134, %p135
    %p137 = scmp.le.s32.totalorder 1, %s9
    %p138 = scmp.lt.s32.totalorder %s9, 3
    %p139 = pnand %p137, %p138
    %p140 = pneg %p139
    // Predicated region
    $region9: #{transformer_forward.38} parent=5 // pred_check
      _
    $region10: #{transformer_forward.38} parent=5 // pred_check_branch
      %142 = sbr.rel (%p139) target = $region12
    $region11: #{transformer_forward.38} parent=5 // pred_region
      %s143 = ssub.s32 %s9, 1
    $region12: #{transformer_forward.38} parent=5 // pred_fallthru
      _
    %p144 = scmp.lt.s32.totalorder %s9, 2
    // Predicated region
    $region13: #{transformer_forward.38} parent=5 // pred_check
      %p145 = pneg %p144
    $region14: #{transformer_forward.38} parent=5 // pred_check_branch
      %147 = sbr.rel (%p145) target = $region16
    $region15: #{transformer_forward.38} parent=5 // pred_region
      // Predicated region
      $region17: #{transformer_forward.38} parent=15 // pred_check
        %p148 = pneg %p41
      $region18: #{transformer_forward.38} parent=15 // pred_check_branch
        %150 = sbr.rel (%p148) target = $region20
      $region19: #{transformer_forward.38} parent=15 // pred_region
        %p151 = scmp.lt.s32.totalorder %s16, 1
        %s152 = scalar_select %p151, %s16, 1
        %s153 = scalar_lea.vmem %s0, %s152
      $region20: #{transformer_forward.38} parent=15 // pred_fallthru
        _
      // Predicated region
      $region21: #{transformer_forward.38} parent=15 // pred_check
        %p154 = pneg %p69
      $region22: #{transformer_forward.38} parent=15 // pred_check_branch
        %156 = sbr.rel (%p154) target = $region24
      $region23: #{transformer_forward.38} parent=15 // pred_region
        %p157 = scmp.lt.s32.totalorder %s16, 1
        %s158 = scalar_select %p157, %s16, 1
        %p159 = scmp.lt.s32.totalorder %s17, 0
        %s160 = scalar_select %p159, %s17, 0
        %s161 = sadd.s32 %s160, %s158
        %s162 = smul.addr %s161, 4
        %s163 = scalar_lea.vmem %s1, %s162
      $region24: #{transformer_forward.38} parent=15 // pred_fallthru
        _
      // Predicated region
      $region25: #{transformer_forward.38} parent=15 // pred_check
        %p164 = pneg %p95
      $region26: #{transformer_forward.38} parent=15 // pred_check_branch
        %166 = sbr.rel (%p164) target = $region28
      $region27: #{transformer_forward.38} parent=15 // pred_region
        %p167 = scmp.lt.s32.totalorder %s16, 1
        %s168 = scalar_select %p167, %s16, 1
        %s169 = smul.addr %s168, 4
        %s170 = scalar_lea.vmem %s2, %s169
      $region28: #{transformer_forward.38} parent=15 // pred_fallthru
        _
    $region16: #{transformer_forward.38} parent=5 // pred_fallthru
      _
    %p171 = scmp.le.s32.totalorder 1, %s9
    %p172 = scmp.lt.s32.totalorder %s9, 3
    %p173 = pnand %p171, %p172
    %p174 = pneg %p173
    // Predicated region
    $region29: #{transformer_forward.38} parent=5 // pred_check
      _
    $region30: #{transformer_forward.38} parent=5 // pred_check_branch
      %176 = sbr.rel (%p173) target = $region32
    $region31: #{transformer_forward.38} parent=5 // pred_region
      %s177 = ssub.s32 %s9, 1
      %p178 = scmp.lt.s32.totalorder %s18, 1
      %s179 = scalar_select %p178, %s18, 1
      %s180 = scalar_lea.vmem %s0, %s179
      %p181 = pneg %p47
      %p182 = pneg %p44
      %p183 = scmp.lt.s32.totalorder %s18, 1
      %s184 = scalar_select %p183, %s18, 1
      %p185 = scmp.lt.s32.totalorder %s19, 0
      %s186 = scalar_select %p185, %s19, 0
      %s187 = sadd.s32 %s186, %s184
      %s188 = smul.addr %s187, 4
      %s189 = scalar_lea.vmem %s1, %s188
      %p190 = pneg %p75
      %p191 = pneg %p72
      %p192 = scmp.lt.s32.totalorder %s18, 1
      %s193 = scalar_select %p192, %s18, 1
      %s194 = smul.addr %s193, 4
      %s195 = scalar_lea.vmem %s2, %s194
      %p196 = pneg %p101
      %p197 = pneg %p98
      %p198 = pneg %p129
      %p199 = pneg %p126
      %p200 = scmp.lt.s32.totalorder %s18, 1
      %s201 = scalar_select %p200, %s18, 1
      %p202 = scmp.lt.s32.totalorder %s19, 0
      %s203 = scalar_select %p202, %s19, 0
      %s204 = sadd.s32 %s203, %s201
      %s205 = smul.addr %s204, 4
      %s206 = scalar_lea.vmem %s3, %s205
      %p207 = scmp.lt.s32.totalorder %s18, 1
      %s208 = scalar_select %p207, %s18, 1
      %s209 = scalar_lea.vmem %s0, %s208
      %p210 = scmp.lt.s32.totalorder %s18, 1
      %s211 = scalar_select %p210, %s18, 1
      %p212 = scmp.lt.s32.totalorder %s19, 0
      %s213 = scalar_select %p212, %s19, 0
      %s214 = sadd.s32 %s213, %s211
      %s215 = smul.addr %s214, 4
      %s216 = scalar_lea.vmem %s1, %s215
      %p217 = scmp.lt.s32.totalorder %s18, 1
      %s218 = scalar_select %p217, %s18, 1
      %s219 = smul.addr %s218, 4
      %s220 = scalar_lea.vmem %s2, %s219
      %p221 = scmp.lt.s32.totalorder %s18, 1
      %s222 = scalar_select %p221, %s18, 1
      %p223 = scmp.lt.s32.totalorder %s19, 0
      %s224 = scalar_select %p223, %s19, 0
      %s225 = sadd.s32 %s224, %s222
      %s226 = smul.addr %s225, 4
      %s227 = scalar_lea.vmem %s3, %s226
      %v230 = vld [vmem:[%s209] sm:$0x1]
      %v231 = vld [vmem:[%s216] sm:$0xf]
      %v232 = vmul.bf16 %v231, 1052065461
      %v233 = vld [vmem:[%s220] sm:$0xf]
      %v235 = vlaneseq
      %v236 = vshrl.u32 %v235, 7
      %v237 = vsub.s32 0, %v236
      %v238 = vrot.slane %v230, %v237
      %vm240 = vcmask 64512
      %v242 = vsel %vm240, %v232, 0
      %v245 = vsel %vm240, %v233, 0
      %247 = vmatprep.subr.bf16.mxu0 0
      %248 = vmatpush1.bf16.xpose.msra.mxu0 0
      %249 = vmatprep.subr.bf16.mxu0 0
      %250 = vmatpush1.bf16.xpose.msra.mxu0 0
      %251 = vmatprep.subr.bf16.mxu0 0
      %252 = vmatpush1.bf16.xpose.msra.mxu0 0
      %253 = vmatprep.subr.bf16.mxu0 0
      %254 = vmatpush1.bf16.xpose.msra.mxu0 0
      %255 = vmatprep.subr.bf16.mxu0 0
      %256 = vmatpush1.bf16.xpose.msra.mxu0 0
      %257 = vmatprep.subr.bf16.mxu0 0
      %258 = vmatpush1.bf16.xpose.msra.mxu0 0
      %259 = vmatprep.subr.bf16.mxu0 0
      %260 = vmatpush1.bf16.xpose.msra.mxu0 0
      %261 = vmatprep.subr.bf16.mxu0 0
      %262 = vmatpush1.bf16.xpose.msra.mxu0 %v245
      %263 = vmatprep.subr.bf16.mxu0 0
      %264 = vmatpush2.bf16.xpose.msra.mxu0 0
      %265 = vmatprep.subr.bf16.mxu0 0
      %266 = vmatpush2.bf16.xpose.msra.mxu0 0
      %267 = vmatprep.subr.bf16.mxu0 0
      %268 = vmatpush2.bf16.xpose.msra.mxu0 0
      %269 = vmatprep.subr.bf16.mxu0 0
      %270 = vmatpush2.bf16.xpose.msra.mxu0 0
      %271 = vmatprep.subr.bf16.mxu0 0
      %272 = vmatpush2.bf16.xpose.msra.mxu0 0
      %273 = vmatprep.subr.bf16.mxu0 0
      %274 = vmatpush2.bf16.xpose.msra.mxu0 0
      %275 = vmatprep.subr.bf16.mxu0 0
      %276 = vmatpush2.bf16.xpose.msra.mxu0 0
      %277 = vmatprep.subr.bf16.mxu0 0
      %278 = vmatpush2.bf16.xpose.msra.mxu0 0
      %279 = vmatprep.mubr.bf16.mxu0 0
      %280 = vmatmul.mubr.bf16.gmra.mxu0 %v242
      %v281 = vpop.f32.mrf.mxu0
      %v282 = vadd.f32 %v238, %v281
      %v283 = vpop.f32.mrf.mxu0
      %v284 = vpop.f32.mrf.mxu0
      %v285 = vpop.f32.mrf.mxu0
      %286 = vdwg.mxu0
      %v287 = vsel %vm240, %v282, -inf
      %288 = vmax.xlane.f32.xlu0 %v287
      %v289 = vpop.xlane.xlu0 %288
      %v290 = vsub.f32 %v282, %v289
      %v291 = vmul.f32 %v290, 1.442695
      %v292 = vpow.pop %v291
      %v293 = vsel %vm240, %v292, 0.0
      %294 = vadd.xlane.f32.xlu0 %v293
      %v295 = vpop.xlane.xlu0 %294
      %v296 = vrcp.pop %v295
      %v297 = vmul.f32 %v292, %v296
      %v298 = vpack.c.bf16 %v297, %v297
      %v300 = vunpack.c.l.b16 %v233
      %v301 = vpack.c.b16 %v300, %v300
      %302 = vrot.lane.b32.xlu0 %v301, 96
      %v303 = vpop.permute.xlu0 %302
      %v305 = vsel %vm240, %v298, 0
      %vm307 = vcmask 1043456
      %v309 = vsel %vm307, %v303, 0
      %311 = vmatprep.subr.bf16.mxu0 0
      %312 = vmatpush1.bf16.msra.mxu0 0
      %313 = vmatprep.subr.bf16.mxu0 0
      %314 = vmatpush1.bf16.msra.mxu0 0
      %315 = vmatprep.subr.bf16.mxu0 0
      %316 = vmatpush1.bf16.msra.mxu0 0
      %317 = vmatprep.subr.bf16.mxu0 0
      %318 = vmatpush1.bf16.msra.mxu0 0
      %319 = vmatprep.subr.bf16.mxu0 0
      %320 = vmatpush1.bf16.msra.mxu0 0
      %321 = vmatprep.subr.bf16.mxu0 0
      %322 = vmatpush1.bf16.msra.mxu0 0
      %323 = vmatprep.subr.bf16.mxu0 0
      %324 = vmatpush1.bf16.msra.mxu0 0
      %325 = vmatprep.subr.bf16.mxu0 0
      %326 = vmatpush1.bf16.msra.mxu0 %v309
      %327 = vmatprep.subr.bf16.mxu0 0
      %328 = vmatpush2.bf16.msra.mxu0 0
      %329 = vmatprep.subr.bf16.mxu0 0
      %330 = vmatpush2.bf16.msra.mxu0 0
      %331 = vmatprep.subr.bf16.mxu0 0
      %332 = vmatpush2.bf16.msra.mxu0 0
      %333 = vmatprep.subr.bf16.mxu0 0
      %334 = vmatpush2.bf16.msra.mxu0 0
      %335 = vmatprep.subr.bf16.mxu0 0
      %336 = vmatpush2.bf16.msra.mxu0 0
      %337 = vmatprep.subr.bf16.mxu0 0
      %338 = vmatpush2.bf16.msra.mxu0 0
      %339 = vmatprep.subr.bf16.mxu0 0
      %340 = vmatpush2.bf16.msra.mxu0 0
      %341 = vmatprep.subr.bf16.mxu0 0
      %342 = vmatpush2.bf16.msra.mxu0 0
      %343 = vmatprep.mubr.bf16.mxu0 0
      %344 = vmatmul.mubr.bf16.gmra.mxu0 %v305
      %v345 = vpop.f32.mrf.mxu0
      %v346 = vadd.f32 0.0, %v345
      %v347 = vpop.f32.mrf.mxu0
      %v348 = vpop.f32.mrf.mxu0
      %v349 = vpop.f32.mrf.mxu0
      %350 = vdwg.mxu0
      %v351 = vpack.c.bf16 %v346, %v346
      %vm352 = vcmask 60416
      %353 = vst.msk [vmem:[%s227] sm:$0xf] %vm352, %v351
      %v354 = vld [vmem:[%s216] sm:$0xf]
      %v355 = vmul.bf16 %v354, 1052065461
      %v356 = vld [vmem:[%s220] sm:$0xf]
      %v358 = vunpack.c.l.b16 %v355
      %v359 = vpack.c.b16 %v358, %v358
      %360 = vrot.lane.b32.xlu0 %v359, 120
      %v361 = vpop.permute.xlu0 %360
      %v363 = vunpack.c.l.b16 %v356
      %v364 = vpack.c.b16 %v363, %v363
      %365 = vrot.lane.b32.xlu0 %v364, 120
      %v366 = vpop.permute.xlu0 %365
      %v368 = vsel %vm240, %v361, 0
      %v371 = vsel %vm240, %v366, 0
      %373 = vmatprep.subr.bf16.mxu0 0
      %374 = vmatpush1.bf16.xpose.msra.mxu0 0
      %375 = vmatprep.subr.bf16.mxu0 0
      %376 = vmatpush1.bf16.xpose.msra.mxu0 0
      %377 = vmatprep.subr.bf16.mxu0 0
      %378 = vmatpush1.bf16.xpose.msra.mxu0 0
      %379 = vmatprep.subr.bf16.mxu0 0
      %380 = vmatpush1.bf16.xpose.msra.mxu0 0
      %381 = vmatprep.subr.bf16.mxu0 0
      %382 = vmatpush1.bf16.xpose.msra.mxu0 0
      %383 = vmatprep.subr.bf16.mxu0 0
      %384 = vmatpush1.bf16.xpose.msra.mxu0 0
      %385 = vmatprep.subr.bf16.mxu0 0
      %386 = vmatpush1.bf16.xpose.msra.mxu0 0
      %387 = vmatprep.subr.bf16.mxu0 0
      %388 = vmatpush1.bf16.xpose.msra.mxu0 %v371
      %389 = vmatprep.subr.bf16.mxu0 0
      %390 = vmatpush2.bf16.xpose.msra.mxu0 0
      %391 = vmatprep.subr.bf16.mxu0 0
      %392 = vmatpush2.bf16.xpose.msra.mxu0 0
      %393 = vmatprep.subr.bf16.mxu0 0
      %394 = vmatpush2.bf16.xpose.msra.mxu0 0
      %395 = vmatprep.subr.bf16.mxu0 0
      %396 = vmatpush2.bf16.xpose.msra.mxu0 0
      %397 = vmatprep.subr.bf16.mxu0 0
      %398 = vmatpush2.bf16.xpose.msra.mxu0 0
      %399 = vmatprep.subr.bf16.mxu0 0
      %400 = vmatpush2.bf16.xpose.msra.mxu0 0
      %401 = vmatprep.subr.bf16.mxu0 0
      %402 = vmatpush2.bf16.xpose.msra.mxu0 0
      %403 = vmatprep.subr.bf16.mxu0 0
      %404 = vmatpush2.bf16.xpose.msra.mxu0 0
      %405 = vmatprep.mubr.bf16.mxu0 0
      %406 = vmatmul.mubr.bf16.gmra.mxu0 %v368
      %v407 = vpop.f32.mrf.mxu0
      %v408 = vadd.f32 %v238, %v407
      %v409 = vpop.f32.mrf.mxu0
      %v410 = vpop.f32.mrf.mxu0
      %v411 = vpop.f32.mrf.mxu0
      %412 = vdwg.mxu0
      %v413 = vsel %vm240, %v408, -inf
      %414 = vmax.xlane.f32.xlu0 %v413
      %v415 = vpop.xlane.xlu0 %414
      %v416 = vsub.f32 %v408, %v415
      %v417 = vmul.f32 %v416, 1.442695
      %v418 = vpow.pop %v417
      %v419 = vsel %vm240, %v418, 0.0
      %420 = vadd.xlane.f32.xlu0 %v419
      %v421 = vpop.xlane.xlu0 %420
      %v422 = vrcp.pop %v421
      %v423 = vmul.f32 %v418, %v422
      %v424 = vpack.c.bf16 %v423, %v423
      %425 = vrot.lane.b32.xlu0 %v364, 88
      %v426 = vpop.permute.xlu0 %425
      %v428 = vsel %vm240, %v424, 0
      %v431 = vsel %vm307, %v426, 0
      %433 = vmatprep.subr.bf16.mxu0 0
      %434 = vmatpush1.bf16.msra.mxu0 0
      %435 = vmatprep.subr.bf16.mxu0 0
      %436 = vmatpush1.bf16.msra.mxu0 0
      %437 = vmatprep.subr.bf16.mxu0 0
      %438 = vmatpush1.bf16.msra.mxu0 0
      %439 = vmatprep.subr.bf16.mxu0 0
      %440 = vmatpush1.bf16.msra.mxu0 0
      %441 = vmatprep.subr.bf16.mxu0 0
      %442 = vmatpush1.bf16.msra.mxu0 0
      %443 = vmatprep.subr.bf16.mxu0 0
      %444 = vmatpush1.bf16.msra.mxu0 0
      %445 = vmatprep.subr.bf16.mxu0 0
      %446 = vmatpush1.bf16.msra.mxu0 0
      %447 = vmatprep.subr.bf16.mxu0 0
      %448 = vmatpush1.bf16.msra.mxu0 %v431
      %449 = vmatprep.subr.bf16.mxu0 0
      %450 = vmatpush2.bf16.msra.mxu0 0
      %451 = vmatprep.subr.bf16.mxu0 0
      %452 = vmatpush2.bf16.msra.mxu0 0
      %453 = vmatprep.subr.bf16.mxu0 0
      %454 = vmatpush2.bf16.msra.mxu0 0
      %455 = vmatprep.subr.bf16.mxu0 0
      %456 = vmatpush2.bf16.msra.mxu0 0
      %457 = vmatprep.subr.bf16.mxu0 0
      %458 = vmatpush2.bf16.msra.mxu0 0
      %459 = vmatprep.subr.bf16.mxu0 0
      %460 = vmatpush2.bf16.msra.mxu0 0
      %461 = vmatprep.subr.bf16.mxu0 0
      %462 = vmatpush2.bf16.msra.mxu0 0
      %463 = vmatprep.subr.bf16.mxu0 0
      %464 = vmatpush2.bf16.msra.mxu0 0
      %465 = vmatprep.mubr.bf16.mxu0 0
      %466 = vmatmul.mubr.bf16.gmra.mxu0 %v428
      %v467 = vpop.f32.mrf.mxu0
      %v468 = vadd.f32 0.0, %v467
      %v469 = vpop.f32.mrf.mxu0
      %v470 = vpop.f32.mrf.mxu0
      %v471 = vpop.f32.mrf.mxu0
      %472 = vdwg.mxu0
      %v473 = vpack.c.bf16 %v468, %v468
      %v475 = vunpack.c.l.b16 %v473
      %v476 = vpack.c.b16 %v475, %v475
      %477 = vrot.lane.b32.xlu0 %v476, 8
      %v478 = vpop.permute.xlu0 %477
      %vm480 = vcmask 126016
      %481 = vst.msk [vmem:[%s227] sm:$0xf] %vm480, %v478
      %v482 = vld [vmem:[%s216] sm:$0xf]
      %v483 = vmul.bf16 %v482, 1052065461
      %v484 = vld [vmem:[%s220] sm:$0xf]
      %v486 = vunpack.c.l.b16 %v483
      %v487 = vpack.c.b16 %v486, %v486
      %488 = vrot.lane.b32.xlu0 %v487, 112
      %v489 = vpop.permute.xlu0 %488
      %v491 = vunpack.c.l.b16 %v484
      %v492 = vpack.c.b16 %v491, %v491
      %493 = vrot.lane.b32.xlu0 %v492, 112
      %v494 = vpop.permute.xlu0 %493
      %v496 = vsel %vm240, %v489, 0
      %v499 = vsel %vm240, %v494, 0
      %501 = vmatprep.subr.bf16.mxu0 0
      %502 = vmatpush1.bf16.xpose.msra.mxu0 0
      %503 = vmatprep.subr.bf16.mxu0 0
      %504 = vmatpush1.bf16.xpose.msra.mxu0 0
      %505 = vmatprep.subr.bf16.mxu0 0
      %506 = vmatpush1.bf16.xpose.msra.mxu0 0
      %507 = vmatprep.subr.bf16.mxu0 0
      %508 = vmatpush1.bf16.xpose.msra.mxu0 0
      %509 = vmatprep.subr.bf16.mxu0 0
      %510 = vmatpush1.bf16.xpose.msra.mxu0 0
      %511 = vmatprep.subr.bf16.mxu0 0
      %512 = vmatpush1.bf16.xpose.msra.mxu0 0
      %513 = vmatprep.subr.bf16.mxu0 0
      %514 = vmatpush1.bf16.xpose.msra.mxu0 0
      %515 = vmatprep.subr.bf16.mxu0 0
      %516 = vmatpush1.bf16.xpose.msra.mxu0 %v499
      %517 = vmatprep.subr.bf16.mxu0 0
      %518 = vmatpush2.bf16.xpose.msra.mxu0 0
      %519 = vmatprep.subr.bf16.mxu0 0
      %520 = vmatpush2.bf16.xpose.msra.mxu0 0
      %521 = vmatprep.subr.bf16.mxu0 0
      %522 = vmatpush2.bf16.xpose.msra.mxu0 0
      %523 = vmatprep.subr.bf16.mxu0 0
      %524 = vmatpush2.bf16.xpose.msra.mxu0 0
      %525 = vmatprep.subr.bf16.mxu0 0
      %526 = vmatpush2.bf16.xpose.msra.mxu0 0
      %527 = vmatprep.subr.bf16.mxu0 0
      %528 = vmatpush2.bf16.xpose.msra.mxu0 0
      %529 = vmatprep.subr.bf16.mxu0 0
      %530 = vmatpush2.bf16.xpose.msra.mxu0 0
      %531 = vmatprep.subr.bf16.mxu0 0
      %532 = vmatpush2.bf16.xpose.msra.mxu0 0
      %533 = vmatprep.mubr.bf16.mxu0 0
      %534 = vmatmul.mubr.bf16.gmra.mxu0 %v496
      %v535 = vpop.f32.mrf.mxu0
      %v536 = vadd.f32 %v238, %v535
      %v537 = vpop.f32.mrf.mxu0
      %v538 = vpop.f32.mrf.mxu0
      %v539 = vpop.f32.mrf.mxu0
      %540 = vdwg.mxu0
      %v541 = vsel %vm240, %v536, -inf
      %542 = vmax.xlane.f32.xlu0 %v541
      %v543 = vpop.xlane.xlu0 %542
      %v544 = vsub.f32 %v536, %v543
      %v545 = vmul.f32 %v544, 1.442695
      %v546 = vpow.pop %v545
      %v547 = vsel %vm240, %v546, 0.0
      %548 = vadd.xlane.f32.xlu0 %v547
      %v549 = vpop.xlane.xlu0 %548
      %v550 = vrcp.pop %v549
      %v551 = vmul.f32 %v546, %v550
      %v552 = vpack.c.bf16 %v551, %v551
      %553 = vrot.lane.b32.xlu0 %v492, 80
      %v554 = vpop.permute.xlu0 %553
      %v556 = vsel %vm240, %v552, 0
      %v559 = vsel %vm307, %v554, 0
      %561 = vmatprep.subr.bf16.mxu0 0
      %562 = vmatpush1.bf16.msra.mxu0 0
      %563 = vmatprep.subr.bf16.mxu0 0
      %564 = vmatpush1.bf16.msra.mxu0 0
      %565 = vmatprep.subr.bf16.mxu0 0
      %566 = vmatpush1.bf16.msra.mxu0 0
      %567 = vmatprep.subr.bf16.mxu0 0
      %568 = vmatpush1.bf16.msra.mxu0 0
      %569 = vmatprep.subr.bf16.mxu0 0
      %570 = vmatpush1.bf16.msra.mxu0 0
      %571 = vmatprep.subr.bf16.mxu0 0
      %572 = vmatpush1.bf16.msra.mxu0 0
      %573 = vmatprep.subr.bf16.mxu0 0
      %574 = vmatpush1.bf16.msra.mxu0 0
      %575 = vmatprep.subr.bf16.mxu0 0
      %576 = vmatpush1.bf16.msra.mxu0 %v559
      %577 = vmatprep.subr.bf16.mxu0 0
      %578 = vmatpush2.bf16.msra.mxu0 0
      %579 = vmatprep.subr.bf16.mxu0 0
      %580 = vmatpush2.bf16.msra.mxu0 0
      %581 = vmatprep.subr.bf16.mxu0 0
      %582 = vmatpush2.bf16.msra.mxu0 0
      %583 = vmatprep.subr.bf16.mxu0 0
      %584 = vmatpush2.bf16.msra.mxu0 0
      %585 = vmatprep.subr.bf16.mxu0 0
      %586 = vmatpush2.bf16.msra.mxu0 0
      %587 = vmatprep.subr.bf16.mxu0 0
      %588 = vmatpush2.bf16.msra.mxu0 0
      %589 = vmatprep.subr.bf16.mxu0 0
      %590 = vmatpush2.bf16.msra.mxu0 0
      %591 = vmatprep.subr.bf16.mxu0 0
      %592 = vmatpush2.bf16.msra.mxu0 0
      %593 = vmatprep.mubr.bf16.mxu0 0
      %594 = vmatmul.mubr.bf16.gmra.mxu0 %v556
      %v595 = vpop.f32.mrf.mxu0
      %v596 = vadd.f32 0.0, %v595
      %v597 = vpop.f32.mrf.mxu0
      %v598 = vpop.f32.mrf.mxu0
      %v599 = vpop.f32.mrf.mxu0
      %600 = vdwg.mxu0
      %v601 = vpack.c.bf16 %v596, %v596
      %v603 = vunpack.c.l.b16 %v601
      %v604 = vpack.c.b16 %v603, %v603
      %605 = vrot.lane.b32.xlu0 %v604, 16
      %v606 = vpop.permute.xlu0 %605
      %vm608 = vcmask 191616
      %609 = vst.msk [vmem:[%s227] sm:$0xf] %vm608, %v606
      %v610 = vld [vmem:[%s216] sm:$0xf]
      %v611 = vmul.bf16 %v610, 1052065461
      %v612 = vld [vmem:[%s220] sm:$0xf]
      %v614 = vunpack.c.l.b16 %v611
      %v615 = vpack.c.b16 %v614, %v614
      %616 = vrot.lane.b32.xlu0 %v615, 104
      %v617 = vpop.permute.xlu0 %616
      %v619 = vunpack.c.l.b16 %v612
      %v620 = vpack.c.b16 %v619, %v619
      %621 = vrot.lane.b32.xlu0 %v620, 104
      %v622 = vpop.permute.xlu0 %621
      %v624 = vsel %vm240, %v617, 0
      %v627 = vsel %vm240, %v622, 0
      %629 = vmatprep.subr.bf16.mxu0 0
      %630 = vmatpush1.bf16.xpose.msra.mxu0 0
      %631 = vmatprep.subr.bf16.mxu0 0
      %632 = vmatpush1.bf16.xpose.msra.mxu0 0
      %633 = vmatprep.subr.bf16.mxu0 0
      %634 = vmatpush1.bf16.xpose.msra.mxu0 0
      %635 = vmatprep.subr.bf16.mxu0 0
      %636 = vmatpush1.bf16.xpose.msra.mxu0 0
      %637 = vmatprep.subr.bf16.mxu0 0
      %638 = vmatpush1.bf16.xpose.msra.mxu0 0
      %639 = vmatprep.subr.bf16.mxu0 0
      %640 = vmatpush1.bf16.xpose.msra.mxu0 0
      %641 = vmatprep.subr.bf16.mxu0 0
      %642 = vmatpush1.bf16.xpose.msra.mxu0 0
      %643 = vmatprep.subr.bf16.mxu0 0
      %644 = vmatpush1.bf16.xpose.msra.mxu0 %v627
      %645 = vmatprep.subr.bf16.mxu0 0
      %646 = vmatpush2.bf16.xpose.msra.mxu0 0
      %647 = vmatprep.subr.bf16.mxu0 0
      %648 = vmatpush2.bf16.xpose.msra.mxu0 0
      %649 = vmatprep.subr.bf16.mxu0 0
      %650 = vmatpush2.bf16.xpose.msra.mxu0 0
      %651 = vmatprep.subr.bf16.mxu0 0
      %652 = vmatpush2.bf16.xpose.msra.mxu0 0
      %653 = vmatprep.subr.bf16.mxu0 0
      %654 = vmatpush2.bf16.xpose.msra.mxu0 0
      %655 = vmatprep.subr.bf16.mxu0 0
      %656 = vmatpush2.bf16.xpose.msra.mxu0 0
      %657 = vmatprep.subr.bf16.mxu0 0
      %658 = vmatpush2.bf16.xpose.msra.mxu0 0
      %659 = vmatprep.subr.bf16.mxu0 0
      %660 = vmatpush2.bf16.xpose.msra.mxu0 0
      %661 = vmatprep.mubr.bf16.mxu0 0
      %662 = vmatmul.mubr.bf16.gmra.mxu0 %v624
      %v663 = vpop.f32.mrf.mxu0
      %v664 = vadd.f32 %v238, %v663
      %v665 = vpop.f32.mrf.mxu0
      %v666 = vpop.f32.mrf.mxu0
      %v667 = vpop.f32.mrf.mxu0
      %668 = vdwg.mxu0
      %v669 = vsel %vm240, %v664, -inf
      %670 = vmax.xlane.f32.xlu0 %v669
      %v671 = vpop.xlane.xlu0 %670
      %v672 = vsub.f32 %v664, %v671
      %v673 = vmul.f32 %v672, 1.442695
      %v674 = vpow.pop %v673
      %v675 = vsel %vm240, %v674, 0.0
      %676 = vadd.xlane.f32.xlu0 %v675
      %v677 = vpop.xlane.xlu0 %676
      %v678 = vrcp.pop %v677
      %v679 = vmul.f32 %v674, %v678
      %v680 = vpack.c.bf16 %v679, %v679
      %681 = vrot.lane.b32.xlu0 %v620, 72
      %v682 = vpop.permute.xlu0 %681
      %v684 = vsel %vm240, %v680, 0
      %v687 = vsel %vm307, %v682, 0
      %689 = vmatprep.subr.bf16.mxu0 0
      %690 = vmatpush1.bf16.msra.mxu0 0
      %691 = vmatprep.subr.bf16.mxu0 0
      %692 = vmatpush1.bf16.msra.mxu0 0
      %693 = vmatprep.subr.bf16.mxu0 0
      %694 = vmatpush1.bf16.msra.mxu0 0
      %695 = vmatprep.subr.bf16.mxu0 0
      %696 = vmatpush1.bf16.msra.mxu0 0
      %697 = vmatprep.subr.bf16.mxu0 0
      %698 = vmatpush1.bf16.msra.mxu0 0
      %699 = vmatprep.subr.bf16.mxu0 0
      %700 = vmatpush1.bf16.msra.mxu0 0
      %701 = vmatprep.subr.bf16.mxu0 0
      %702 = vmatpush1.bf16.msra.mxu0 0
      %703 = vmatprep.subr.bf16.mxu0 0
      %704 = vmatpush1.bf16.msra.mxu0 %v687
      %705 = vmatprep.subr.bf16.mxu0 0
      %706 = vmatpush2.bf16.msra.mxu0 0
      %707 = vmatprep.subr.bf16.mxu0 0
      %708 = vmatpush2.bf16.msra.mxu0 0
      %709 = vmatprep.subr.bf16.mxu0 0
      %710 = vmatpush2.bf16.msra.mxu0 0
      %711 = vmatprep.subr.bf16.mxu0 0
      %712 = vmatpush2.bf16.msra.mxu0 0
      %713 = vmatprep.subr.bf16.mxu0 0
      %714 = vmatpush2.bf16.msra.mxu0 0
      %715 = vmatprep.subr.bf16.mxu0 0
      %716 = vmatpush2.bf16.msra.mxu0 0
      %717 = vmatprep.subr.bf16.mxu0 0
      %718 = vmatpush2.bf16.msra.mxu0 0
      %719 = vmatprep.subr.bf16.mxu0 0
      %720 = vmatpush2.bf16.msra.mxu0 0
      %721 = vmatprep.mubr.bf16.mxu0 0
      %722 = vmatmul.mubr.bf16.gmra.mxu0 %v684
      %v723 = vpop.f32.mrf.mxu0
      %v724 = vadd.f32 0.0, %v723
      %v725 = vpop.f32.mrf.mxu0
      %v726 = vpop.f32.mrf.mxu0
      %v727 = vpop.f32.mrf.mxu0
      %728 = vdwg.mxu0
      %v729 = vpack.c.bf16 %v724, %v724
      %v731 = vunpack.c.l.b16 %v729
      %v732 = vpack.c.b16 %v731, %v731
      %733 = vrot.lane.b32.xlu0 %v732, 24
      %v734 = vpop.permute.xlu0 %733
      %vm736 = vcmask 257216
      %737 = vst.msk [vmem:[%s227] sm:$0xf] %vm736, %v734
      %p738 = scmp.lt.s32.totalorder %s18, 1
      %s739 = scalar_select %p738, %s18, 1
      %p740 = scmp.lt.s32.totalorder %s19, 0
      %s741 = scalar_select %p740, %s19, 0
      %s742 = sadd.s32 %s741, %s739
      %s743 = smul.addr %s742, 4
      %s744 = scalar_lea.vmem %s3, %s743
      // Predicated region
      $region33: #{transformer_forward.38} parent=31 // pred_check
        %p745 = pneg %p126
      $region34: #{transformer_forward.38} parent=31 // pred_check_branch
        %747 = sbr.rel (%p745) target = $region36
      $region35: #{transformer_forward.38} parent=31 // pred_region
        _
      $region36: #{transformer_forward.38} parent=31 // pred_fallthru
        _
    $region32: #{transformer_forward.38} parent=5 // pred_fallthru
      _
    %p748 = scmp.le.s32.totalorder 2, %s9
    // Predicated region
    $region37: #{transformer_forward.38} parent=5 // pred_check
      %p749 = pneg %p748
    $region38: #{transformer_forward.38} parent=5 // pred_check_branch
      %751 = sbr.rel (%p749) target = $region40
    $region39: #{transformer_forward.38} parent=5 // pred_region
      %s752 = ssub.s32 %s9, 2
      // Predicated region
      $region41: #{transformer_forward.38} parent=39 // pred_check
        %p753 = pneg %p132
      $region42: #{transformer_forward.38} parent=39 // pred_check_branch
        %755 = sbr.rel (%p753) target = $region44
      $region43: #{transformer_forward.38} parent=39 // pred_region
        %p756 = scmp.lt.s32.totalorder %s20, 1
        %s757 = scalar_select %p756, %s20, 1
        %p758 = scmp.lt.s32.totalorder %s21, 0
        %s759 = scalar_select %p758, %s21, 0
        %s760 = sadd.s32 %s759, %s757
        %s761 = smul.addr %s760, 4
        %s762 = scalar_lea.vmem %s3, %s761
      $region44: #{transformer_forward.38} parent=39 // pred_fallthru
        _
    $region40: #{transformer_forward.38} parent=5 // pred_fallthru
      _
  $region6: #{transformer_forward.38} parent=0 // loop_footer
    %s13 = sadd.s32 1, %s9
  $region7: #{transformer_forward.38} parent=0 // loop_footer_branch
    %8 = sbr.rel target = $region3
  $region8: #{transformer_forward.38} parent=0 // loop_exit
    _

// kernel: transformer_forward.49
$region0: #{transformer_forward.49}
  #allocation0 [shape = 'u32[]', space=smem, size = 0x4, offset = 0x4, fixed_abs, tag = 'smem constant byte address 0x4 - core index']
  #allocation1 [shape = 'u32[144,128]{1,0:T(1,128)}', space=vmem, size = 0x12000, scoped, tag = 'internal scratch']
  #allocation2 [shape = 'f32[16,60]{1,0:T(8,128)}', space=vmem, size = 0x2000, scoped, tag = 'scratch operand']
  %s0 = inlined_call_operand.vmem [shape: bf16[16,32], index: 0, kind: input, shape index: {}]
  %s1 = inlined_call_operand.vmem [shape: bf16[32,60], index: 1, kind: input, shape index: {}]
  %s2 = inlined_call_operand.vmem [shape: f32[1,60], index: 2, kind: input, shape index: {}]
  %s3 = inlined_call_operand.hbm [shape: f32[16,60], index: 3, kind: output, shape index: {}]
  %s4 = sld [smem:[#allocation0]]
  $region30: #{transformer_forward.49} parent=0
    _
  %s6 = ssub.s32 1, %s4
  %s7 = scalar_select 0, %s6, %s4
  $region1: #{transformer_forward.49} parent=0
    #allocation3 [shape = 'u8[8192]{0}', space=vmem, size = 0x2000, scoped, tag = 'output window, operand 0, single buffered']
    #allocation4 [shape = 's32[1]{0}', space=sflag, size = 0x4, scoped, tag = 'scoped memory for transformer_forward.49']
    %8 = vsyncpa [#allocation4], 0
    // Predicated region
    $region2: #{transformer_forward.49} parent=1 // pred_check
      _
    $region3: #{transformer_forward.49} parent=1 // pred_check_branch
      %10 = sbr.rel (0) target = $region5
    $region4: #{transformer_forward.49} parent=1 // pred_region
      _
    $region5: #{transformer_forward.49} parent=1 // pred_fallthru
      _
    // Predicated region
    $region6: #{transformer_forward.49} parent=1 // pred_check
      _
    $region7: #{transformer_forward.49} parent=1 // pred_check_branch
      %12 = sbr.rel (0) target = $region9
    $region8: #{transformer_forward.49} parent=1 // pred_region
      _
    $region9: #{transformer_forward.49} parent=1 // pred_fallthru
      _
    // Predicated region
    $region10: #{transformer_forward.49} parent=1 // pred_check
      _
    $region11: #{transformer_forward.49} parent=1 // pred_check_branch
      %14 = sbr.rel (0) target = $region13
    $region12: #{transformer_forward.49} parent=1 // pred_region
      _
    $region13: #{transformer_forward.49} parent=1 // pred_fallthru
      _
    %p16 = scmp.eq.s32.totalorder 0, 0
    // Predicated region
    $region14: #{transformer_forward.49} parent=1 // pred_check
      %p17 = pneg %p16
    $region15: #{transformer_forward.49} parent=1 // pred_check_branch
      %19 = sbr.rel (%p17) target = $region17
    $region16: #{transformer_forward.49} parent=1 // pred_region
      %vm20 = vcmask 490496
      %21 = vst.msk [vmem:[#allocation2] sm:$0xff] %vm20, 0.0
      %22 = vst.msk [vmem:[#allocation2 + $0x8] sm:$0xff] %vm20, 0.0
    $region17: #{transformer_forward.49} parent=1 // pred_fallthru
      _
    %v23 = vld [vmem:[#allocation2] sm:$0xff]
    %v24 = vld [vmem:[#allocation2 + $0x8] sm:$0xff]
    %v25 = vld [vmem:[%s0] sm:$0xf]
    %v26 = vld [vmem:[%s0 + $0x4] sm:$0xf]
    %v27 = vld [vmem:[%s1] sm:$0xf]
    %v28 = vld [vmem:[%s1 + $0x4] sm:$0xf]
    %v29 = vld [vmem:[%s1 + $0x8] sm:$0xf]
    %v30 = vld [vmem:[%s1 + $0xc] sm:$0xf]
    %v33 = vunpack.c.l.b16 %v25
    %v34 = vunpack.c.l.b16 %v26
    %v35 = vpack.c.b16 %v34, %v33
    %v40 = vunpack.c.l.b16 %v27
    %v41 = vunpack.c.l.b16 %v28
    %v42 = vunpack.c.l.b16 %v29
    %v43 = vunpack.c.l.b16 %v30
    %v44 = vpack.c.b16 %v41, %v40
    %v45 = vpack.c.b16 %v43, %v42
    %vm48 = vcmask 261120
    %v50 = vsel %vm48, %v35, 0
    %52 = vmatprep.subr.bf16.mxu0 0
    %53 = vmatpush1.bf16.msra.mxu0 0
    %54 = vmatprep.subr.bf16.mxu0 0
    %55 = vmatpush1.bf16.msra.mxu0 0
    %56 = vmatprep.subr.bf16.mxu0 0
    %57 = vmatpush1.bf16.msra.mxu0 0
    %58 = vmatprep.subr.bf16.mxu0 0
    %59 = vmatpush1.bf16.msra.mxu0 0
    %60 = vmatprep.subr.bf16.mxu0 0
    %61 = vmatpush1.bf16.msra.mxu0 0
    %62 = vmatprep.subr.bf16.mxu0 0
    %63 = vmatpush1.bf16.msra.mxu0 0
    %64 = vmatprep.subr.bf16.mxu0 0
    %65 = vmatpush1.bf16.msra.mxu0 %v45
    %66 = vmatprep.subr.bf16.mxu0 0
    %67 = vmatpush1.bf16.msra.mxu0 %v44
    %68 = vmatprep.subr.bf16.mxu0 0
    %69 = vmatpush2.bf16.msra.mxu0 0
    %70 = vmatprep.subr.bf16.mxu0 0
    %71 = vmatpush2.bf16.msra.mxu0 0
    %72 = vmatprep.subr.bf16.mxu0 0
    %73 = vmatpush2.bf16.msra.mxu0 0
    %74 = vmatprep.subr.bf16.mxu0 0
    %75 = vmatpush2.bf16.msra.mxu0 0
    %76 = vmatprep.subr.bf16.mxu0 0
    %77 = vmatpush2.bf16.msra.mxu0 0
    %78 = vmatprep.subr.bf16.mxu0 0
    %79 = vmatpush2.bf16.msra.mxu0 0
    %80 = vmatprep.subr.bf16.mxu0 0
    %81 = vmatpush2.bf16.msra.mxu0 0
    %82 = vmatprep.subr.bf16.mxu0 0
    %83 = vmatpush2.bf16.msra.mxu0 0
    %84 = vmatprep.mubr.bf16.mxu0 0
    %85 = vmatmul.mubr.bf16.gmra.mxu0 %v50
    %v86 = vpop.f32.mrf.mxu0
    %v87 = vadd.f32 0.0, %v86
    %v88 = vpop.f32.mrf.mxu0
    %v89 = vpop.f32.mrf.mxu0
    %v90 = vadd.f32 0.0, %v89
    %v91 = vpop.f32.mrf.mxu0
    %92 = vdwg.mxu0
    %v93 = vadd.f32 %v23, %v87
    %v94 = vadd.f32 %v24, %v90
    %vm95 = vcmask 490496
    %96 = vst.msk [vmem:[#allocation2] sm:$0xff] %vm95, %v93
    %97 = vst.msk [vmem:[#allocation2 + $0x8] sm:$0xff] %vm95, %v94
    // Predicated region
    $region18: #{transformer_forward.49} parent=1 // pred_check
      %p98 = pneg %p16
    $region19: #{transformer_forward.49} parent=1 // pred_check_branch
      %100 = sbr.rel (%p98) target = $region21
    $region20: #{transformer_forward.49} parent=1 // pred_region
      %v101 = vld [vmem:[#allocation2] sm:$0xff]
      %v102 = vld [vmem:[#allocation2 + $0x8] sm:$0xff]
      %v103 = vld [vmem:[%s2] sm:$0x1]
      %v105 = vlaneseq
      %v106 = vshrl.u32 %v105, 7
      %v107 = vsub.s32 0, %v106
      %v108 = vrot.slane %v103, %v107
      %v110 = vadd.f32 %v101, %v108
      %v111 = vadd.f32 %v102, %v108
      %112 = vst.msk [vmem:[#allocation3] sm:$0xff] %vm95, %v110
      %113 = vst.msk [vmem:[#allocation3 + $0x8] sm:$0xff] %vm95, %v111
    $region21: #{transformer_forward.49} parent=1 // pred_fallthru
      _
    // Predicated region
    $region22: #{transformer_forward.49} parent=1 // pred_check
      _
    $region23: #{transformer_forward.49} parent=1 // pred_check_branch
      %115 = sbr.rel (0) target = $region25
    $region24: #{transformer_forward.49} parent=1 // pred_region
      %s117 = ssub.s32 256, 256
      %118 = vsyncadd [#allocation4], %s117
      %s119 = sshll.u32 [#allocation3], 4
      %s120 = int_to_ptr.vmem [resolvable:$true] %s119
      %125 = dma.vmem_to_hbm [thread:$0]  %s120, 256, %s3, [#allocation4], 128, 128, 8
    $region25: #{transformer_forward.49} parent=1 // pred_fallthru
      _
    // Predicated region
    $region26: #{transformer_forward.49} parent=1 // pred_check
      _
    $region27: #{transformer_forward.49} parent=1 // pred_check_branch
      %127 = sbr.rel (0) target = $region29
    $region28: #{transformer_forward.49} parent=1 // pred_region
      %128 = dma.done [#allocation4], 256
    $region29: #{transformer_forward.49} parent=1 // pred_fallthru
      _
    %129 = vsyncpa [#allocation4], 1

</llo_original>
